<compile_context>
chip_gen: v5e
topology: v5e:2x2
jax: 0.10.0
libtpu: 0.0.40
codegen_flags: <defaults>
</compile_context>

<pallas_src>
import functools

import jax
import jax.numpy as jnp
from jax.experimental import pallas as pl
from jax.experimental.pallas import tpu as pltpu


# --------------------------------------------------------------- fused kernel

def make_tagger_kernel(n_layers, hidden_dim):
    H = hidden_dim

    def kernel(*refs):
        x_ref = refs[0]                                  # (B, S, E) batch-major
        layer_refs = refs[1:1 + 3 * n_layers]            # (W_ih^T, W_hh^T, bias) per layer
        w_tag_ref = refs[1 + 3 * n_layers]               # (H, T)
        b_tag_ref = refs[2 + 3 * n_layers]               # (1, T)
        out_ref = refs[3 + 3 * n_layers]                 # (S, B, T) time-major

        B, S, E = x_ref.shape
        G = 4 * H

        def run_layer(get_xproj, whh):
            """Recurrent scan; get_xproj(t) -> (B, 4H) precomputed input proj."""
            h = jnp.zeros((B, H), jnp.float32)
            c = jnp.zeros((B, H), jnp.float32)
            hs = []
            for t in range(S):                           # fully unrolled (S static)
                # Only the recurrent matmul is on the serial dependency chain.
                gates = get_xproj(t) + jnp.dot(
                    h, whh, preferred_element_type=jnp.float32)      # (B, 4H)
                sig = jax.nn.sigmoid(gates)              # full-vreg EUP push
                th = jnp.tanh(gates)                     # full-vreg EUP push
                i_g = sig[:, 0 * H:1 * H]
                f_g = sig[:, 1 * H:2 * H]
                g_g = th[:, 2 * H:3 * H]
                o_g = sig[:, 3 * H:4 * H]
                c = f_g * c + i_g * g_g
                h = o_g * jnp.tanh(c)
                hs.append(h)
            return jnp.stack(hs, axis=0)                 # (S, B, H) time-major

        # ---- layer 0: whole-sequence input projection hoisted out of the loop
        wih0 = layer_refs[0][...]
        whh0 = layer_refs[1][...]
        b0 = layer_refs[2][...]                          # (1, 4H), added once
        p0 = jnp.dot(x_ref[...].reshape(B * S, E), wih0,
                     preferred_element_type=jnp.float32) + b0        # (B*S, 4H)
        p0 = p0.reshape(B, S, G)
        h_seq = run_layer(lambda t: p0[:, t, :], whh0)

        # ---- layers 1..n-1 (input already time-major) ----
        for l in range(1, n_layers):
            wih = layer_refs[3 * l][...]
            whh = layer_refs[3 * l + 1][...]
            b = layer_refs[3 * l + 2][...]
            p = jnp.dot(h_seq.reshape(S * B, H), wih,
                        preferred_element_type=jnp.float32) + b      # (S*B, 4H)
            p = p.reshape(S, B, G)
            h_seq = run_layer(lambda t, p=p: p[t], whh)
            # TODO(synk): nn.LSTM inter-layer dropout is train-only; eval -> identity.

        # ---- head: ReLU -> hidden2tag -> log_softmax over the SEQUENCE axis ----
        y = jnp.maximum(h_seq, 0.0)                      # ReLU
        # TODO(synk): nn.Dropout is identity in eval mode; not applied.
        T = w_tag_ref.shape[1]
        tag = jnp.dot(y.reshape(S * B, H), w_tag_ref[...],
                      preferred_element_type=jnp.float32) + b_tag_ref[...]
        tag = tag.reshape(S, B, T)
        # F.log_softmax(tag_space, dim=1) with batch_first == the sequence axis,
        # i.e. axis 0 of this time-major layout (pure elementwise across vregs).
        m = jnp.max(tag, axis=0, keepdims=True)
        z = tag - m
        lse = jnp.log(jnp.sum(jnp.exp(z), axis=0, keepdims=True))
        out_ref[...] = z - lse                           # single contiguous store

    return kernel


# ------------------------------------------------------------------- wrapper

@functools.partial(jax.jit, static_argnames=("hidden_dim", "n_layers"))
def lstm_tagger_forward(sentence, params, hidden_dim, n_layers):
    """sentence: (B, S, E) float32 -> tag_scores: (B, S, target_size)."""
    B, S, _ = sentence.shape
    B_pad = ((B + 7) // 8) * 8                           # fill vreg sublanes
    if B_pad != B:
        sentence = jnp.pad(sentence, ((0, B_pad - B), (0, 0), (0, 0)))
    w_tag_t, b_tag = params["head"]
    T = w_tag_t.shape[1]

    args = [sentence]
    for layer in range(n_layers):
        args.extend(params[f"layer{layer}"])
    args.extend([w_tag_t, b_tag])

    out_tm = pl.pallas_call(
        make_tagger_kernel(n_layers, hidden_dim),
        out_shape=jax.ShapeDtypeStruct((S, B_pad, T), jnp.float32),
        in_specs=[pl.BlockSpec(memory_space=pltpu.MemorySpace.VMEM)] * len(args),
        out_specs=pl.BlockSpec(memory_space=pltpu.MemorySpace.VMEM),
    )(*args)
    # time-major (S, B_pad, T) -> batch-major (B, S, T); drop batch padding.
    return jnp.transpose(out_tm, (1, 0, 2))[:B]


# ------------------------------------------------------------------ params

def init_params(key, embedding_dim, hidden_dim, target_size, n_layers):
    """Deterministic parameter init (PyTorch-style U(-1/sqrt(H), 1/sqrt(H)))."""
    k = 1.0 / jnp.sqrt(jnp.float32(hidden_dim))
    params = {}
    in_dim = embedding_dim
    for layer in range(n_layers):
        key, k1, k2, k3, k4 = jax.random.split(key, 5)
        wih_t = jax.random.uniform(k1, (in_dim, 4 * hidden_dim), jnp.float32, -k, k)
        whh_t = jax.random.uniform(k2, (hidden_dim, 4 * hidden_dim), jnp.float32, -k, k)
        b_ih = jax.random.uniform(k3, (4 * hidden_dim,), jnp.float32, -k, k)
        b_hh = jax.random.uniform(k4, (4 * hidden_dim,), jnp.float32, -k, k)
        params[f"layer{layer}"] = (wih_t, whh_t, (b_ih + b_hh)[None, :])
        in_dim = hidden_dim
    key, k5, k6 = jax.random.split(key, 3)
    w_tag_t = jax.random.uniform(k5, (hidden_dim, target_size), jnp.float32, -k, k)
    b_tag = jax.random.uniform(k6, (1, target_size), jnp.float32, -k, k)
    params["head"] = (w_tag_t, b_tag)
    return params


# --------------------------------------------------------------------- main

if __name__ == "__main__":
    B, S = 2, 8
    embedding_dim, hidden_dim, target_size = 16, 32, 8
    n_layers, drp = 2, 0.1  # drp unused at eval time

    key = jax.random.PRNGKey(0)
    key, pkey, xkey = jax.random.split(key, 3)
    params = init_params(pkey, embedding_dim, hidden_dim, target_size, n_layers)
    sentence = jax.random.normal(xkey, (B, S, embedding_dim), jnp.float32)

    tag_scores = lstm_tagger_forward(sentence, params, hidden_dim, n_layers)
    tag_scores = jax.block_until_ready(tag_scores)

    assert tag_scores.shape == (B, S, target_size)
    assert bool(jnp.all(jnp.isfinite(tag_scores)))
    # log_softmax over dim=1 (sequence axis) => exp sums to 1 along that axis.
    colsum = jnp.sum(jnp.exp(tag_scores), axis=1)
    assert bool(jnp.allclose(colsum, 1.0, atol=1e-4))
    print("KERNEL_OK")
</pallas_src>

<mosaic_0001>
module attributes {stable_mosaic.version = 11 : i64} {
  func.func @kernel(%arg0: memref<8x8x16xf32, #tpu.memory_space<vmem>>, %arg1: memref<16x128xf32, #tpu.memory_space<vmem>>, %arg2: memref<32x128xf32, #tpu.memory_space<vmem>>, %arg3: memref<1x128xf32, #tpu.memory_space<vmem>>, %arg4: memref<32x128xf32, #tpu.memory_space<vmem>>, %arg5: memref<32x128xf32, #tpu.memory_space<vmem>>, %arg6: memref<1x128xf32, #tpu.memory_space<vmem>>, %arg7: memref<32x8xf32, #tpu.memory_space<vmem>>, %arg8: memref<1x8xf32, #tpu.memory_space<vmem>>, %arg9: memref<8x8x8xf32, #tpu.memory_space<vmem>>) attributes {dimension_semantics = [], scalar_prefetch = 0 : i64, scratch_operands = 0 : i64, tpu.core_type = #tpu.core_type<tc>} {
    %c0 = arith.constant 0 : index
    %c0_0 = arith.constant 0 : index
    %0 = vector.load %arg1[%c0, %c0_0] : memref<16x128xf32, #tpu.memory_space<vmem>>, vector<16x128xf32>
    %c0_1 = arith.constant 0 : index
    %c0_2 = arith.constant 0 : index
    %1 = vector.load %arg2[%c0_1, %c0_2] : memref<32x128xf32, #tpu.memory_space<vmem>>, vector<32x128xf32>
    %c0_3 = arith.constant 0 : index
    %c0_4 = arith.constant 0 : index
    %2 = vector.load %arg3[%c0_3, %c0_4] : memref<1x128xf32, #tpu.memory_space<vmem>>, vector<1x128xf32>
    %c0_5 = arith.constant 0 : index
    %c0_6 = arith.constant 0 : index
    %c0_7 = arith.constant 0 : index
    %3 = vector.load %arg0[%c0_5, %c0_6, %c0_7] : memref<8x8x16xf32, #tpu.memory_space<vmem>>, vector<8x8x16xf32>
    %4 = vector.shape_cast %3 : vector<8x8x16xf32> to vector<64x16xf32>
    %cst = arith.constant dense<0.000000e+00> : vector<64x128xf32>
    %5 = tpu.matmul %4, %0, %cst {dimension_numbers = #tpu.dot_dimension_numbers<[1], [0], [0], [1], [0, 0, 1, 1], [], []>} : vector<64x16xf32>, vector<16x128xf32>, vector<64x128xf32> -> vector<64x128xf32>
    %6 = vector.broadcast %2 : vector<1x128xf32> to vector<64x128xf32>
    %7 = arith.addf %5, %6 : vector<64x128xf32>
    %8 = vector.shape_cast %7 : vector<64x128xf32> to vector<8x8x128xf32>
    %cst_8 = arith.constant 0.000000e+00 : f32
    %9 = vector.broadcast %cst_8 : f32 to vector<8x32xf32>
    %cst_9 = arith.constant 0.000000e+00 : f32
    %10 = vector.broadcast %cst_9 : f32 to vector<8x32xf32>
    %11 = vector.extract_strided_slice %8 {offsets = [0, 0, 0], sizes = [8, 1, 128], strides = [1, 1, 1]} : vector<8x8x128xf32> to vector<8x1x128xf32>
    %12 = vector.shape_cast %11 : vector<8x1x128xf32> to vector<8x128xf32>
    %cst_10 = arith.constant dense<0.000000e+00> : vector<8x128xf32>
    %13 = tpu.matmul %9, %1, %cst_10 {dimension_numbers = #tpu.dot_dimension_numbers<[1], [0], [0], [1], [0, 0, 1, 1], [], []>} : vector<8x32xf32>, vector<32x128xf32>, vector<8x128xf32> -> vector<8x128xf32>
    %14 = arith.addf %12, %13 : vector<8x128xf32>
    %15 = arith.negf %14 : vector<8x128xf32>
    %16 = math.exp %15 : vector<8x128xf32>
    %cst_11 = arith.constant 1.000000e+00 : f32
    %17 = vector.broadcast %cst_11 : f32 to vector<8x128xf32>
    %18 = arith.addf %17, %16 : vector<8x128xf32>
    %19 = arith.divf %17, %18 : vector<8x128xf32>
    %20 = math.tanh %14 : vector<8x128xf32>
    %21 = vector.extract_strided_slice %19 {offsets = [0, 0], sizes = [8, 32], strides = [1, 1]} : vector<8x128xf32> to vector<8x32xf32>
    %22 = vector.extract_strided_slice %19 {offsets = [0, 32], sizes = [8, 32], strides = [1, 1]} : vector<8x128xf32> to vector<8x32xf32>
    %23 = vector.extract_strided_slice %20 {offsets = [0, 64], sizes = [8, 32], strides = [1, 1]} : vector<8x128xf32> to vector<8x32xf32>
    %24 = vector.extract_strided_slice %19 {offsets = [0, 96], sizes = [8, 32], strides = [1, 1]} : vector<8x128xf32> to vector<8x32xf32>
    %25 = arith.mulf %22, %10 : vector<8x32xf32>
    %26 = arith.mulf %21, %23 : vector<8x32xf32>
    %27 = arith.addf %25, %26 : vector<8x32xf32>
    %28 = math.tanh %27 : vector<8x32xf32>
    %29 = arith.mulf %24, %28 : vector<8x32xf32>
    %30 = vector.extract_strided_slice %8 {offsets = [0, 1, 0], sizes = [8, 1, 128], strides = [1, 1, 1]} : vector<8x8x128xf32> to vector<8x1x128xf32>
    %31 = vector.shape_cast %30 : vector<8x1x128xf32> to vector<8x128xf32>
    %cst_12 = arith.constant dense<0.000000e+00> : vector<8x128xf32>
    %32 = tpu.matmul %29, %1, %cst_12 {dimension_numbers = #tpu.dot_dimension_numbers<[1], [0], [0], [1], [0, 0, 1, 1], [], []>} : vector<8x32xf32>, vector<32x128xf32>, vector<8x128xf32> -> vector<8x128xf32>
    %33 = arith.addf %31, %32 : vector<8x128xf32>
    %34 = arith.negf %33 : vector<8x128xf32>
    %35 = math.exp %34 : vector<8x128xf32>
    %cst_13 = arith.constant 1.000000e+00 : f32
    %36 = vector.broadcast %cst_13 : f32 to vector<8x128xf32>
    %37 = arith.addf %36, %35 : vector<8x128xf32>
    %38 = arith.divf %36, %37 : vector<8x128xf32>
    %39 = math.tanh %33 : vector<8x128xf32>
    %40 = vector.extract_strided_slice %38 {offsets = [0, 0], sizes = [8, 32], strides = [1, 1]} : vector<8x128xf32> to vector<8x32xf32>
    %41 = vector.extract_strided_slice %38 {offsets = [0, 32], sizes = [8, 32], strides = [1, 1]} : vector<8x128xf32> to vector<8x32xf32>
    %42 = vector.extract_strided_slice %39 {offsets = [0, 64], sizes = [8, 32], strides = [1, 1]} : vector<8x128xf32> to vector<8x32xf32>
    %43 = vector.extract_strided_slice %38 {offsets = [0, 96], sizes = [8, 32], strides = [1, 1]} : vector<8x128xf32> to vector<8x32xf32>
    %44 = arith.mulf %41, %27 : vector<8x32xf32>
    %45 = arith.mulf %40, %42 : vector<8x32xf32>
    %46 = arith.addf %44, %45 : vector<8x32xf32>
    %47 = math.tanh %46 : vector<8x32xf32>
    %48 = arith.mulf %43, %47 : vector<8x32xf32>
    %49 = vector.extract_strided_slice %8 {offsets = [0, 2, 0], sizes = [8, 1, 128], strides = [1, 1, 1]} : vector<8x8x128xf32> to vector<8x1x128xf32>
    %50 = vector.shape_cast %49 : vector<8x1x128xf32> to vector<8x128xf32>
    %cst_14 = arith.constant dense<0.000000e+00> : vector<8x128xf32>
    %51 = tpu.matmul %48, %1, %cst_14 {dimension_numbers = #tpu.dot_dimension_numbers<[1], [0], [0], [1], [0, 0, 1, 1], [], []>} : vector<8x32xf32>, vector<32x128xf32>, vector<8x128xf32> -> vector<8x128xf32>
    %52 = arith.addf %50, %51 : vector<8x128xf32>
    %53 = arith.negf %52 : vector<8x128xf32>
    %54 = math.exp %53 : vector<8x128xf32>
    %cst_15 = arith.constant 1.000000e+00 : f32
    %55 = vector.broadcast %cst_15 : f32 to vector<8x128xf32>
    %56 = arith.addf %55, %54 : vector<8x128xf32>
    %57 = arith.divf %55, %56 : vector<8x128xf32>
    %58 = math.tanh %52 : vector<8x128xf32>
    %59 = vector.extract_strided_slice %57 {offsets = [0, 0], sizes = [8, 32], strides = [1, 1]} : vector<8x128xf32> to vector<8x32xf32>
    %60 = vector.extract_strided_slice %57 {offsets = [0, 32], sizes = [8, 32], strides = [1, 1]} : vector<8x128xf32> to vector<8x32xf32>
    %61 = vector.extract_strided_slice %58 {offsets = [0, 64], sizes = [8, 32], strides = [1, 1]} : vector<8x128xf32> to vector<8x32xf32>
    %62 = vector.extract_strided_slice %57 {offsets = [0, 96], sizes = [8, 32], strides = [1, 1]} : vector<8x128xf32> to vector<8x32xf32>
    %63 = arith.mulf %60, %46 : vector<8x32xf32>
    %64 = arith.mulf %59, %61 : vector<8x32xf32>
    %65 = arith.addf %63, %64 : vector<8x32xf32>
    %66 = math.tanh %65 : vector<8x32xf32>
    %67 = arith.mulf %62, %66 : vector<8x32xf32>
    %68 = vector.extract_strided_slice %8 {offsets = [0, 3, 0], sizes = [8, 1, 128], strides = [1, 1, 1]} : vector<8x8x128xf32> to vector<8x1x128xf32>
    %69 = vector.shape_cast %68 : vector<8x1x128xf32> to vector<8x128xf32>
    %cst_16 = arith.constant dense<0.000000e+00> : vector<8x128xf32>
    %70 = tpu.matmul %67, %1, %cst_16 {dimension_numbers = #tpu.dot_dimension_numbers<[1], [0], [0], [1], [0, 0, 1, 1], [], []>} : vector<8x32xf32>, vector<32x128xf32>, vector<8x128xf32> -> vector<8x128xf32>
    %71 = arith.addf %69, %70 : vector<8x128xf32>
    %72 = arith.negf %71 : vector<8x128xf32>
    %73 = math.exp %72 : vector<8x128xf32>
    %cst_17 = arith.constant 1.000000e+00 : f32
    %74 = vector.broadcast %cst_17 : f32 to vector<8x128xf32>
    %75 = arith.addf %74, %73 : vector<8x128xf32>
    %76 = arith.divf %74, %75 : vector<8x128xf32>
    %77 = math.tanh %71 : vector<8x128xf32>
    %78 = vector.extract_strided_slice %76 {offsets = [0, 0], sizes = [8, 32], strides = [1, 1]} : vector<8x128xf32> to vector<8x32xf32>
    %79 = vector.extract_strided_slice %76 {offsets = [0, 32], sizes = [8, 32], strides = [1, 1]} : vector<8x128xf32> to vector<8x32xf32>
    %80 = vector.extract_strided_slice %77 {offsets = [0, 64], sizes = [8, 32], strides = [1, 1]} : vector<8x128xf32> to vector<8x32xf32>
    %81 = vector.extract_strided_slice %76 {offsets = [0, 96], sizes = [8, 32], strides = [1, 1]} : vector<8x128xf32> to vector<8x32xf32>
    %82 = arith.mulf %79, %65 : vector<8x32xf32>
    %83 = arith.mulf %78, %80 : vector<8x32xf32>
    %84 = arith.addf %82, %83 : vector<8x32xf32>
    %85 = math.tanh %84 : vector<8x32xf32>
    %86 = arith.mulf %81, %85 : vector<8x32xf32>
    %87 = vector.extract_strided_slice %8 {offsets = [0, 4, 0], sizes = [8, 1, 128], strides = [1, 1, 1]} : vector<8x8x128xf32> to vector<8x1x128xf32>
    %88 = vector.shape_cast %87 : vector<8x1x128xf32> to vector<8x128xf32>
    %cst_18 = arith.constant dense<0.000000e+00> : vector<8x128xf32>
    %89 = tpu.matmul %86, %1, %cst_18 {dimension_numbers = #tpu.dot_dimension_numbers<[1], [0], [0], [1], [0, 0, 1, 1], [], []>} : vector<8x32xf32>, vector<32x128xf32>, vector<8x128xf32> -> vector<8x128xf32>
    %90 = arith.addf %88, %89 : vector<8x128xf32>
    %91 = arith.negf %90 : vector<8x128xf32>
    %92 = math.exp %91 : vector<8x128xf32>
    %cst_19 = arith.constant 1.000000e+00 : f32
    %93 = vector.broadcast %cst_19 : f32 to vector<8x128xf32>
    %94 = arith.addf %93, %92 : vector<8x128xf32>
    %95 = arith.divf %93, %94 : vector<8x128xf32>
    %96 = math.tanh %90 : vector<8x128xf32>
    %97 = vector.extract_strided_slice %95 {offsets = [0, 0], sizes = [8, 32], strides = [1, 1]} : vector<8x128xf32> to vector<8x32xf32>
    %98 = vector.extract_strided_slice %95 {offsets = [0, 32], sizes = [8, 32], strides = [1, 1]} : vector<8x128xf32> to vector<8x32xf32>
    %99 = vector.extract_strided_slice %96 {offsets = [0, 64], sizes = [8, 32], strides = [1, 1]} : vector<8x128xf32> to vector<8x32xf32>
    %100 = vector.extract_strided_slice %95 {offsets = [0, 96], sizes = [8, 32], strides = [1, 1]} : vector<8x128xf32> to vector<8x32xf32>
    %101 = arith.mulf %98, %84 : vector<8x32xf32>
    %102 = arith.mulf %97, %99 : vector<8x32xf32>
    %103 = arith.addf %101, %102 : vector<8x32xf32>
    %104 = math.tanh %103 : vector<8x32xf32>
    %105 = arith.mulf %100, %104 : vector<8x32xf32>
    %106 = vector.extract_strided_slice %8 {offsets = [0, 5, 0], sizes = [8, 1, 128], strides = [1, 1, 1]} : vector<8x8x128xf32> to vector<8x1x128xf32>
    %107 = vector.shape_cast %106 : vector<8x1x128xf32> to vector<8x128xf32>
    %cst_20 = arith.constant dense<0.000000e+00> : vector<8x128xf32>
    %108 = tpu.matmul %105, %1, %cst_20 {dimension_numbers = #tpu.dot_dimension_numbers<[1], [0], [0], [1], [0, 0, 1, 1], [], []>} : vector<8x32xf32>, vector<32x128xf32>, vector<8x128xf32> -> vector<8x128xf32>
    %109 = arith.addf %107, %108 : vector<8x128xf32>
    %110 = arith.negf %109 : vector<8x128xf32>
    %111 = math.exp %110 : vector<8x128xf32>
    %cst_21 = arith.constant 1.000000e+00 : f32
    %112 = vector.broadcast %cst_21 : f32 to vector<8x128xf32>
    %113 = arith.addf %112, %111 : vector<8x128xf32>
    %114 = arith.divf %112, %113 : vector<8x128xf32>
    %115 = math.tanh %109 : vector<8x128xf32>
    %116 = vector.extract_strided_slice %114 {offsets = [0, 0], sizes = [8, 32], strides = [1, 1]} : vector<8x128xf32> to vector<8x32xf32>
    %117 = vector.extract_strided_slice %114 {offsets = [0, 32], sizes = [8, 32], strides = [1, 1]} : vector<8x128xf32> to vector<8x32xf32>
    %118 = vector.extract_strided_slice %115 {offsets = [0, 64], sizes = [8, 32], strides = [1, 1]} : vector<8x128xf32> to vector<8x32xf32>
    %119 = vector.extract_strided_slice %114 {offsets = [0, 96], sizes = [8, 32], strides = [1, 1]} : vector<8x128xf32> to vector<8x32xf32>
    %120 = arith.mulf %117, %103 : vector<8x32xf32>
    %121 = arith.mulf %116, %118 : vector<8x32xf32>
    %122 = arith.addf %120, %121 : vector<8x32xf32>
    %123 = math.tanh %122 : vector<8x32xf32>
    %124 = arith.mulf %119, %123 : vector<8x32xf32>
    %125 = vector.extract_strided_slice %8 {offsets = [0, 6, 0], sizes = [8, 1, 128], strides = [1, 1, 1]} : vector<8x8x128xf32> to vector<8x1x128xf32>
    %126 = vector.shape_cast %125 : vector<8x1x128xf32> to vector<8x128xf32>
    %cst_22 = arith.constant dense<0.000000e+00> : vector<8x128xf32>
    %127 = tpu.matmul %124, %1, %cst_22 {dimension_numbers = #tpu.dot_dimension_numbers<[1], [0], [0], [1], [0, 0, 1, 1], [], []>} : vector<8x32xf32>, vector<32x128xf32>, vector<8x128xf32> -> vector<8x128xf32>
    %128 = arith.addf %126, %127 : vector<8x128xf32>
    %129 = arith.negf %128 : vector<8x128xf32>
    %130 = math.exp %129 : vector<8x128xf32>
    %cst_23 = arith.constant 1.000000e+00 : f32
    %131 = vector.broadcast %cst_23 : f32 to vector<8x128xf32>
    %132 = arith.addf %131, %130 : vector<8x128xf32>
    %133 = arith.divf %131, %132 : vector<8x128xf32>
    %134 = math.tanh %128 : vector<8x128xf32>
    %135 = vector.extract_strided_slice %133 {offsets = [0, 0], sizes = [8, 32], strides = [1, 1]} : vector<8x128xf32> to vector<8x32xf32>
    %136 = vector.extract_strided_slice %133 {offsets = [0, 32], sizes = [8, 32], strides = [1, 1]} : vector<8x128xf32> to vector<8x32xf32>
    %137 = vector.extract_strided_slice %134 {offsets = [0, 64], sizes = [8, 32], strides = [1, 1]} : vector<8x128xf32> to vector<8x32xf32>
    %138 = vector.extract_strided_slice %133 {offsets = [0, 96], sizes = [8, 32], strides = [1, 1]} : vector<8x128xf32> to vector<8x32xf32>
    %139 = arith.mulf %136, %122 : vector<8x32xf32>
    %140 = arith.mulf %135, %137 : vector<8x32xf32>
    %141 = arith.addf %139, %140 : vector<8x32xf32>
    %142 = math.tanh %141 : vector<8x32xf32>
    %143 = arith.mulf %138, %142 : vector<8x32xf32>
    %144 = vector.extract_strided_slice %8 {offsets = [0, 7, 0], sizes = [8, 1, 128], strides = [1, 1, 1]} : vector<8x8x128xf32> to vector<8x1x128xf32>
    %145 = vector.shape_cast %144 : vector<8x1x128xf32> to vector<8x128xf32>
    %cst_24 = arith.constant dense<0.000000e+00> : vector<8x128xf32>
    %146 = tpu.matmul %143, %1, %cst_24 {dimension_numbers = #tpu.dot_dimension_numbers<[1], [0], [0], [1], [0, 0, 1, 1], [], []>} : vector<8x32xf32>, vector<32x128xf32>, vector<8x128xf32> -> vector<8x128xf32>
    %147 = arith.addf %145, %146 : vector<8x128xf32>
    %148 = arith.negf %147 : vector<8x128xf32>
    %149 = math.exp %148 : vector<8x128xf32>
    %cst_25 = arith.constant 1.000000e+00 : f32
    %150 = vector.broadcast %cst_25 : f32 to vector<8x128xf32>
    %151 = arith.addf %150, %149 : vector<8x128xf32>
    %152 = arith.divf %150, %151 : vector<8x128xf32>
    %153 = math.tanh %147 : vector<8x128xf32>
    %154 = vector.extract_strided_slice %152 {offsets = [0, 0], sizes = [8, 32], strides = [1, 1]} : vector<8x128xf32> to vector<8x32xf32>
    %155 = vector.extract_strided_slice %152 {offsets = [0, 32], sizes = [8, 32], strides = [1, 1]} : vector<8x128xf32> to vector<8x32xf32>
    %156 = vector.extract_strided_slice %153 {offsets = [0, 64], sizes = [8, 32], strides = [1, 1]} : vector<8x128xf32> to vector<8x32xf32>
    %157 = vector.extract_strided_slice %152 {offsets = [0, 96], sizes = [8, 32], strides = [1, 1]} : vector<8x128xf32> to vector<8x32xf32>
    %158 = arith.mulf %155, %141 : vector<8x32xf32>
    %159 = arith.mulf %154, %156 : vector<8x32xf32>
    %160 = arith.addf %158, %159 : vector<8x32xf32>
    %161 = math.tanh %160 : vector<8x32xf32>
    %162 = arith.mulf %157, %161 : vector<8x32xf32>
    %163 = vector.shape_cast %29 : vector<8x32xf32> to vector<1x8x32xf32>
    %164 = vector.shape_cast %48 : vector<8x32xf32> to vector<1x8x32xf32>
    %165 = vector.shape_cast %67 : vector<8x32xf32> to vector<1x8x32xf32>
    %166 = vector.shape_cast %86 : vector<8x32xf32> to vector<1x8x32xf32>
    %167 = vector.shape_cast %105 : vector<8x32xf32> to vector<1x8x32xf32>
    %168 = vector.shape_cast %124 : vector<8x32xf32> to vector<1x8x32xf32>
    %169 = vector.shape_cast %143 : vector<8x32xf32> to vector<1x8x32xf32>
    %170 = vector.shape_cast %162 : vector<8x32xf32> to vector<1x8x32xf32>
    %171 = tpu.concatenate %163, %164, %165, %166, %167, %168, %169, %170 in 0 : vector<1x8x32xf32>, vector<1x8x32xf32>, vector<1x8x32xf32>, vector<1x8x32xf32>, vector<1x8x32xf32>, vector<1x8x32xf32>, vector<1x8x32xf32>, vector<1x8x32xf32> -> vector<8x8x32xf32>
    %c0_26 = arith.constant 0 : index
    %c0_27 = arith.constant 0 : index
    %172 = vector.load %arg4[%c0_26, %c0_27] : memref<32x128xf32, #tpu.memory_space<vmem>>, vector<32x128xf32>
    %c0_28 = arith.constant 0 : index
    %c0_29 = arith.constant 0 : index
    %173 = vector.load %arg5[%c0_28, %c0_29] : memref<32x128xf32, #tpu.memory_space<vmem>>, vector<32x128xf32>
    %c0_30 = arith.constant 0 : index
    %c0_31 = arith.constant 0 : index
    %174 = vector.load %arg6[%c0_30, %c0_31] : memref<1x128xf32, #tpu.memory_space<vmem>>, vector<1x128xf32>
    %175 = vector.shape_cast %171 : vector<8x8x32xf32> to vector<64x32xf32>
    %cst_32 = arith.constant dense<0.000000e+00> : vector<64x128xf32>
    %176 = tpu.matmul %175, %172, %cst_32 {dimension_numbers = #tpu.dot_dimension_numbers<[1], [0], [0], [1], [0, 0, 1, 1], [], []>} : vector<64x32xf32>, vector<32x128xf32>, vector<64x128xf32> -> vector<64x128xf32>
    %177 = vector.broadcast %174 : vector<1x128xf32> to vector<64x128xf32>
    %178 = arith.addf %176, %177 : vector<64x128xf32>
    %179 = vector.shape_cast %178 : vector<64x128xf32> to vector<8x8x128xf32>
    %cst_33 = arith.constant 0.000000e+00 : f32
    %180 = vector.broadcast %cst_33 : f32 to vector<8x32xf32>
    %cst_34 = arith.constant 0.000000e+00 : f32
    %181 = vector.broadcast %cst_34 : f32 to vector<8x32xf32>
    %182 = vector.extract_strided_slice %179 {offsets = [0, 0, 0], sizes = [1, 8, 128], strides = [1, 1, 1]} : vector<8x8x128xf32> to vector<1x8x128xf32>
    %183 = vector.shape_cast %182 : vector<1x8x128xf32> to vector<8x128xf32>
    %cst_35 = arith.constant dense<0.000000e+00> : vector<8x128xf32>
    %184 = tpu.matmul %180, %173, %cst_35 {dimension_numbers = #tpu.dot_dimension_numbers<[1], [0], [0], [1], [0, 0, 1, 1], [], []>} : vector<8x32xf32>, vector<32x128xf32>, vector<8x128xf32> -> vector<8x128xf32>
    %185 = arith.addf %183, %184 : vector<8x128xf32>
    %186 = arith.negf %185 : vector<8x128xf32>
    %187 = math.exp %186 : vector<8x128xf32>
    %cst_36 = arith.constant 1.000000e+00 : f32
    %188 = vector.broadcast %cst_36 : f32 to vector<8x128xf32>
    %189 = arith.addf %188, %187 : vector<8x128xf32>
    %190 = arith.divf %188, %189 : vector<8x128xf32>
    %191 = math.tanh %185 : vector<8x128xf32>
    %192 = vector.extract_strided_slice %190 {offsets = [0, 0], sizes = [8, 32], strides = [1, 1]} : vector<8x128xf32> to vector<8x32xf32>
    %193 = vector.extract_strided_slice %190 {offsets = [0, 32], sizes = [8, 32], strides = [1, 1]} : vector<8x128xf32> to vector<8x32xf32>
    %194 = vector.extract_strided_slice %191 {offsets = [0, 64], sizes = [8, 32], strides = [1, 1]} : vector<8x128xf32> to vector<8x32xf32>
    %195 = vector.extract_strided_slice %190 {offsets = [0, 96], sizes = [8, 32], strides = [1, 1]} : vector<8x128xf32> to vector<8x32xf32>
    %196 = arith.mulf %193, %181 : vector<8x32xf32>
    %197 = arith.mulf %192, %194 : vector<8x32xf32>
    %198 = arith.addf %196, %197 : vector<8x32xf32>
    %199 = math.tanh %198 : vector<8x32xf32>
    %200 = arith.mulf %195, %199 : vector<8x32xf32>
    %201 = vector.extract_strided_slice %179 {offsets = [1, 0, 0], sizes = [1, 8, 128], strides = [1, 1, 1]} : vector<8x8x128xf32> to vector<1x8x128xf32>
    %202 = vector.shape_cast %201 : vector<1x8x128xf32> to vector<8x128xf32>
    %cst_37 = arith.constant dense<0.000000e+00> : vector<8x128xf32>
    %203 = tpu.matmul %200, %173, %cst_37 {dimension_numbers = #tpu.dot_dimension_numbers<[1], [0], [0], [1], [0, 0, 1, 1], [], []>} : vector<8x32xf32>, vector<32x128xf32>, vector<8x128xf32> -> vector<8x128xf32>
    %204 = arith.addf %202, %203 : vector<8x128xf32>
    %205 = arith.negf %204 : vector<8x128xf32>
    %206 = math.exp %205 : vector<8x128xf32>
    %cst_38 = arith.constant 1.000000e+00 : f32
    %207 = vector.broadcast %cst_38 : f32 to vector<8x128xf32>
    %208 = arith.addf %207, %206 : vector<8x128xf32>
    %209 = arith.divf %207, %208 : vector<8x128xf32>
    %210 = math.tanh %204 : vector<8x128xf32>
    %211 = vector.extract_strided_slice %209 {offsets = [0, 0], sizes = [8, 32], strides = [1, 1]} : vector<8x128xf32> to vector<8x32xf32>
    %212 = vector.extract_strided_slice %209 {offsets = [0, 32], sizes = [8, 32], strides = [1, 1]} : vector<8x128xf32> to vector<8x32xf32>
    %213 = vector.extract_strided_slice %210 {offsets = [0, 64], sizes = [8, 32], strides = [1, 1]} : vector<8x128xf32> to vector<8x32xf32>
    %214 = vector.extract_strided_slice %209 {offsets = [0, 96], sizes = [8, 32], strides = [1, 1]} : vector<8x128xf32> to vector<8x32xf32>
    %215 = arith.mulf %212, %198 : vector<8x32xf32>
    %216 = arith.mulf %211, %213 : vector<8x32xf32>
    %217 = arith.addf %215, %216 : vector<8x32xf32>
    %218 = math.tanh %217 : vector<8x32xf32>
    %219 = arith.mulf %214, %218 : vector<8x32xf32>
    %220 = vector.extract_strided_slice %179 {offsets = [2, 0, 0], sizes = [1, 8, 128], strides = [1, 1, 1]} : vector<8x8x128xf32> to vector<1x8x128xf32>
    %221 = vector.shape_cast %220 : vector<1x8x128xf32> to vector<8x128xf32>
    %cst_39 = arith.constant dense<0.000000e+00> : vector<8x128xf32>
    %222 = tpu.matmul %219, %173, %cst_39 {dimension_numbers = #tpu.dot_dimension_numbers<[1], [0], [0], [1], [0, 0, 1, 1], [], []>} : vector<8x32xf32>, vector<32x128xf32>, vector<8x128xf32> -> vector<8x128xf32>
    %223 = arith.addf %221, %222 : vector<8x128xf32>
    %224 = arith.negf %223 : vector<8x128xf32>
    %225 = math.exp %224 : vector<8x128xf32>
    %cst_40 = arith.constant 1.000000e+00 : f32
    %226 = vector.broadcast %cst_40 : f32 to vector<8x128xf32>
    %227 = arith.addf %226, %225 : vector<8x128xf32>
    %228 = arith.divf %226, %227 : vector<8x128xf32>
    %229 = math.tanh %223 : vector<8x128xf32>
    %230 = vector.extract_strided_slice %228 {offsets = [0, 0], sizes = [8, 32], strides = [1, 1]} : vector<8x128xf32> to vector<8x32xf32>
    %231 = vector.extract_strided_slice %228 {offsets = [0, 32], sizes = [8, 32], strides = [1, 1]} : vector<8x128xf32> to vector<8x32xf32>
    %232 = vector.extract_strided_slice %229 {offsets = [0, 64], sizes = [8, 32], strides = [1, 1]} : vector<8x128xf32> to vector<8x32xf32>
    %233 = vector.extract_strided_slice %228 {offsets = [0, 96], sizes = [8, 32], strides = [1, 1]} : vector<8x128xf32> to vector<8x32xf32>
    %234 = arith.mulf %231, %217 : vector<8x32xf32>
    %235 = arith.mulf %230, %232 : vector<8x32xf32>
    %236 = arith.addf %234, %235 : vector<8x32xf32>
    %237 = math.tanh %236 : vector<8x32xf32>
    %238 = arith.mulf %233, %237 : vector<8x32xf32>
    %239 = vector.extract_strided_slice %179 {offsets = [3, 0, 0], sizes = [1, 8, 128], strides = [1, 1, 1]} : vector<8x8x128xf32> to vector<1x8x128xf32>
    %240 = vector.shape_cast %239 : vector<1x8x128xf32> to vector<8x128xf32>
    %cst_41 = arith.constant dense<0.000000e+00> : vector<8x128xf32>
    %241 = tpu.matmul %238, %173, %cst_41 {dimension_numbers = #tpu.dot_dimension_numbers<[1], [0], [0], [1], [0, 0, 1, 1], [], []>} : vector<8x32xf32>, vector<32x128xf32>, vector<8x128xf32> -> vector<8x128xf32>
    %242 = arith.addf %240, %241 : vector<8x128xf32>
    %243 = arith.negf %242 : vector<8x128xf32>
    %244 = math.exp %243 : vector<8x128xf32>
    %cst_42 = arith.constant 1.000000e+00 : f32
    %245 = vector.broadcast %cst_42 : f32 to vector<8x128xf32>
    %246 = arith.addf %245, %244 : vector<8x128xf32>
    %247 = arith.divf %245, %246 : vector<8x128xf32>
    %248 = math.tanh %242 : vector<8x128xf32>
    %249 = vector.extract_strided_slice %247 {offsets = [0, 0], sizes = [8, 32], strides = [1, 1]} : vector<8x128xf32> to vector<8x32xf32>
    %250 = vector.extract_strided_slice %247 {offsets = [0, 32], sizes = [8, 32], strides = [1, 1]} : vector<8x128xf32> to vector<8x32xf32>
    %251 = vector.extract_strided_slice %248 {offsets = [0, 64], sizes = [8, 32], strides = [1, 1]} : vector<8x128xf32> to vector<8x32xf32>
    %252 = vector.extract_strided_slice %247 {offsets = [0, 96], sizes = [8, 32], strides = [1, 1]} : vector<8x128xf32> to vector<8x32xf32>
    %253 = arith.mulf %250, %236 : vector<8x32xf32>
    %254 = arith.mulf %249, %251 : vector<8x32xf32>
    %255 = arith.addf %253, %254 : vector<8x32xf32>
    %256 = math.tanh %255 : vector<8x32xf32>
    %257 = arith.mulf %252, %256 : vector<8x32xf32>
    %258 = vector.extract_strided_slice %179 {offsets = [4, 0, 0], sizes = [1, 8, 128], strides = [1, 1, 1]} : vector<8x8x128xf32> to vector<1x8x128xf32>
    %259 = vector.shape_cast %258 : vector<1x8x128xf32> to vector<8x128xf32>
    %cst_43 = arith.constant dense<0.000000e+00> : vector<8x128xf32>
    %260 = tpu.matmul %257, %173, %cst_43 {dimension_numbers = #tpu.dot_dimension_numbers<[1], [0], [0], [1], [0, 0, 1, 1], [], []>} : vector<8x32xf32>, vector<32x128xf32>, vector<8x128xf32> -> vector<8x128xf32>
    %261 = arith.addf %259, %260 : vector<8x128xf32>
    %262 = arith.negf %261 : vector<8x128xf32>
    %263 = math.exp %262 : vector<8x128xf32>
    %cst_44 = arith.constant 1.000000e+00 : f32
    %264 = vector.broadcast %cst_44 : f32 to vector<8x128xf32>
    %265 = arith.addf %264, %263 : vector<8x128xf32>
    %266 = arith.divf %264, %265 : vector<8x128xf32>
    %267 = math.tanh %261 : vector<8x128xf32>
    %268 = vector.extract_strided_slice %266 {offsets = [0, 0], sizes = [8, 32], strides = [1, 1]} : vector<8x128xf32> to vector<8x32xf32>
    %269 = vector.extract_strided_slice %266 {offsets = [0, 32], sizes = [8, 32], strides = [1, 1]} : vector<8x128xf32> to vector<8x32xf32>
    %270 = vector.extract_strided_slice %267 {offsets = [0, 64], sizes = [8, 32], strides = [1, 1]} : vector<8x128xf32> to vector<8x32xf32>
    %271 = vector.extract_strided_slice %266 {offsets = [0, 96], sizes = [8, 32], strides = [1, 1]} : vector<8x128xf32> to vector<8x32xf32>
    %272 = arith.mulf %269, %255 : vector<8x32xf32>
    %273 = arith.mulf %268, %270 : vector<8x32xf32>
    %274 = arith.addf %272, %273 : vector<8x32xf32>
    %275 = math.tanh %274 : vector<8x32xf32>
    %276 = arith.mulf %271, %275 : vector<8x32xf32>
    %277 = vector.extract_strided_slice %179 {offsets = [5, 0, 0], sizes = [1, 8, 128], strides = [1, 1, 1]} : vector<8x8x128xf32> to vector<1x8x128xf32>
    %278 = vector.shape_cast %277 : vector<1x8x128xf32> to vector<8x128xf32>
    %cst_45 = arith.constant dense<0.000000e+00> : vector<8x128xf32>
    %279 = tpu.matmul %276, %173, %cst_45 {dimension_numbers = #tpu.dot_dimension_numbers<[1], [0], [0], [1], [0, 0, 1, 1], [], []>} : vector<8x32xf32>, vector<32x128xf32>, vector<8x128xf32> -> vector<8x128xf32>
    %280 = arith.addf %278, %279 : vector<8x128xf32>
    %281 = arith.negf %280 : vector<8x128xf32>
    %282 = math.exp %281 : vector<8x128xf32>
    %cst_46 = arith.constant 1.000000e+00 : f32
    %283 = vector.broadcast %cst_46 : f32 to vector<8x128xf32>
    %284 = arith.addf %283, %282 : vector<8x128xf32>
    %285 = arith.divf %283, %284 : vector<8x128xf32>
    %286 = math.tanh %280 : vector<8x128xf32>
    %287 = vector.extract_strided_slice %285 {offsets = [0, 0], sizes = [8, 32], strides = [1, 1]} : vector<8x128xf32> to vector<8x32xf32>
    %288 = vector.extract_strided_slice %285 {offsets = [0, 32], sizes = [8, 32], strides = [1, 1]} : vector<8x128xf32> to vector<8x32xf32>
    %289 = vector.extract_strided_slice %286 {offsets = [0, 64], sizes = [8, 32], strides = [1, 1]} : vector<8x128xf32> to vector<8x32xf32>
    %290 = vector.extract_strided_slice %285 {offsets = [0, 96], sizes = [8, 32], strides = [1, 1]} : vector<8x128xf32> to vector<8x32xf32>
    %291 = arith.mulf %288, %274 : vector<8x32xf32>
    %292 = arith.mulf %287, %289 : vector<8x32xf32>
    %293 = arith.addf %291, %292 : vector<8x32xf32>
    %294 = math.tanh %293 : vector<8x32xf32>
    %295 = arith.mulf %290, %294 : vector<8x32xf32>
    %296 = vector.extract_strided_slice %179 {offsets = [6, 0, 0], sizes = [1, 8, 128], strides = [1, 1, 1]} : vector<8x8x128xf32> to vector<1x8x128xf32>
    %297 = vector.shape_cast %296 : vector<1x8x128xf32> to vector<8x128xf32>
    %cst_47 = arith.constant dense<0.000000e+00> : vector<8x128xf32>
    %298 = tpu.matmul %295, %173, %cst_47 {dimension_numbers = #tpu.dot_dimension_numbers<[1], [0], [0], [1], [0, 0, 1, 1], [], []>} : vector<8x32xf32>, vector<32x128xf32>, vector<8x128xf32> -> vector<8x128xf32>
    %299 = arith.addf %297, %298 : vector<8x128xf32>
    %300 = arith.negf %299 : vector<8x128xf32>
    %301 = math.exp %300 : vector<8x128xf32>
    %cst_48 = arith.constant 1.000000e+00 : f32
    %302 = vector.broadcast %cst_48 : f32 to vector<8x128xf32>
    %303 = arith.addf %302, %301 : vector<8x128xf32>
    %304 = arith.divf %302, %303 : vector<8x128xf32>
    %305 = math.tanh %299 : vector<8x128xf32>
    %306 = vector.extract_strided_slice %304 {offsets = [0, 0], sizes = [8, 32], strides = [1, 1]} : vector<8x128xf32> to vector<8x32xf32>
    %307 = vector.extract_strided_slice %304 {offsets = [0, 32], sizes = [8, 32], strides = [1, 1]} : vector<8x128xf32> to vector<8x32xf32>
    %308 = vector.extract_strided_slice %305 {offsets = [0, 64], sizes = [8, 32], strides = [1, 1]} : vector<8x128xf32> to vector<8x32xf32>
    %309 = vector.extract_strided_slice %304 {offsets = [0, 96], sizes = [8, 32], strides = [1, 1]} : vector<8x128xf32> to vector<8x32xf32>
    %310 = arith.mulf %307, %293 : vector<8x32xf32>
    %311 = arith.mulf %306, %308 : vector<8x32xf32>
    %312 = arith.addf %310, %311 : vector<8x32xf32>
    %313 = math.tanh %312 : vector<8x32xf32>
    %314 = arith.mulf %309, %313 : vector<8x32xf32>
    %315 = vector.extract_strided_slice %179 {offsets = [7, 0, 0], sizes = [1, 8, 128], strides = [1, 1, 1]} : vector<8x8x128xf32> to vector<1x8x128xf32>
    %316 = vector.shape_cast %315 : vector<1x8x128xf32> to vector<8x128xf32>
    %cst_49 = arith.constant dense<0.000000e+00> : vector<8x128xf32>
    %317 = tpu.matmul %314, %173, %cst_49 {dimension_numbers = #tpu.dot_dimension_numbers<[1], [0], [0], [1], [0, 0, 1, 1], [], []>} : vector<8x32xf32>, vector<32x128xf32>, vector<8x128xf32> -> vector<8x128xf32>
    %318 = arith.addf %316, %317 : vector<8x128xf32>
    %319 = arith.negf %318 : vector<8x128xf32>
    %320 = math.exp %319 : vector<8x128xf32>
    %cst_50 = arith.constant 1.000000e+00 : f32
    %321 = vector.broadcast %cst_50 : f32 to vector<8x128xf32>
    %322 = arith.addf %321, %320 : vector<8x128xf32>
    %323 = arith.divf %321, %322 : vector<8x128xf32>
    %324 = math.tanh %318 : vector<8x128xf32>
    %325 = vector.extract_strided_slice %323 {offsets = [0, 0], sizes = [8, 32], strides = [1, 1]} : vector<8x128xf32> to vector<8x32xf32>
    %326 = vector.extract_strided_slice %323 {offsets = [0, 32], sizes = [8, 32], strides = [1, 1]} : vector<8x128xf32> to vector<8x32xf32>
    %327 = vector.extract_strided_slice %324 {offsets = [0, 64], sizes = [8, 32], strides = [1, 1]} : vector<8x128xf32> to vector<8x32xf32>
    %328 = vector.extract_strided_slice %323 {offsets = [0, 96], sizes = [8, 32], strides = [1, 1]} : vector<8x128xf32> to vector<8x32xf32>
    %329 = arith.mulf %326, %312 : vector<8x32xf32>
    %330 = arith.mulf %325, %327 : vector<8x32xf32>
    %331 = arith.addf %329, %330 : vector<8x32xf32>
    %332 = math.tanh %331 : vector<8x32xf32>
    %333 = arith.mulf %328, %332 : vector<8x32xf32>
    %334 = vector.shape_cast %200 : vector<8x32xf32> to vector<1x8x32xf32>
    %335 = vector.shape_cast %219 : vector<8x32xf32> to vector<1x8x32xf32>
    %336 = vector.shape_cast %238 : vector<8x32xf32> to vector<1x8x32xf32>
    %337 = vector.shape_cast %257 : vector<8x32xf32> to vector<1x8x32xf32>
    %338 = vector.shape_cast %276 : vector<8x32xf32> to vector<1x8x32xf32>
    %339 = vector.shape_cast %295 : vector<8x32xf32> to vector<1x8x32xf32>
    %340 = vector.shape_cast %314 : vector<8x32xf32> to vector<1x8x32xf32>
    %341 = vector.shape_cast %333 : vector<8x32xf32> to vector<1x8x32xf32>
    %342 = tpu.concatenate %334, %335, %336, %337, %338, %339, %340, %341 in 0 : vector<1x8x32xf32>, vector<1x8x32xf32>, vector<1x8x32xf32>, vector<1x8x32xf32>, vector<1x8x32xf32>, vector<1x8x32xf32>, vector<1x8x32xf32>, vector<1x8x32xf32> -> vector<8x8x32xf32>
    %cst_51 = arith.constant 0.000000e+00 : f32
    %343 = vector.broadcast %cst_51 : f32 to vector<8x8x32xf32>
    %344 = arith.maximumf %342, %343 : vector<8x8x32xf32>
    %345 = vector.shape_cast %344 : vector<8x8x32xf32> to vector<64x32xf32>
    %c0_52 = arith.constant 0 : index
    %c0_53 = arith.constant 0 : index
    %346 = vector.load %arg7[%c0_52, %c0_53] : memref<32x8xf32, #tpu.memory_space<vmem>>, vector<32x8xf32>
    %cst_54 = arith.constant dense<0.000000e+00> : vector<64x8xf32>
    %347 = tpu.matmul %345, %346, %cst_54 {dimension_numbers = #tpu.dot_dimension_numbers<[1], [0], [0], [1], [0, 0, 1, 1], [], []>} : vector<64x32xf32>, vector<32x8xf32>, vector<64x8xf32> -> vector<64x8xf32>
    %c0_55 = arith.constant 0 : index
    %c0_56 = arith.constant 0 : index
    %348 = vector.load %arg8[%c0_55, %c0_56] : memref<1x8xf32, #tpu.memory_space<vmem>>, vector<1x8xf32>
    %349 = vector.broadcast %348 : vector<1x8xf32> to vector<64x8xf32>
    %350 = arith.addf %347, %349 : vector<64x8xf32>
    %351 = vector.shape_cast %350 : vector<64x8xf32> to vector<8x8x8xf32>
    %cst_57 = arith.constant dense<0xFF800000> : vector<8x8xf32>
    %352 = vector.multi_reduction <maximumf>, %351, %cst_57 [0] : vector<8x8x8xf32> to vector<8x8xf32>
    %353 = vector.shape_cast %352 : vector<8x8xf32> to vector<1x8x8xf32>
    %354 = vector.broadcast %353 : vector<1x8x8xf32> to vector<8x8x8xf32>
    %355 = arith.subf %351, %354 : vector<8x8x8xf32>
    %356 = math.exp %355 : vector<8x8x8xf32>
    %cst_58 = arith.constant dense<0.000000e+00> : vector<8x8xf32>
    %357 = vector.multi_reduction <add>, %356, %cst_58 [0] : vector<8x8x8xf32> to vector<8x8xf32>
    %358 = vector.shape_cast %357 : vector<8x8xf32> to vector<1x8x8xf32>
    %359 = math.log %358 : vector<1x8x8xf32>
    %360 = vector.broadcast %359 : vector<1x8x8xf32> to vector<8x8x8xf32>
    %361 = arith.subf %355, %360 : vector<8x8x8xf32>
    %c0_59 = arith.constant 0 : index
    %c0_60 = arith.constant 0 : index
    %c0_61 = arith.constant 0 : index
    %362 = vector.load %arg9[%c0_59, %c0_60, %c0_61] : memref<8x8x8xf32, #tpu.memory_space<vmem>>, vector<8x8x8xf32>
    tpu.vector_store %arg9[%c0_59, %c0_60, %c0_61], %361 {strides = array<i32>} : memref<8x8x8xf32, #tpu.memory_space<vmem>>, vector<8x8x8xf32>,
    return
  }
}

</mosaic_0001>

<llo_original>
// kernel: lstm_tagger_forward.1
$region0: #{lstm_tagger_forward.1}
  #allocation0 [shape = 'u32[]', space=smem, size = 0x4, offset = 0x4, fixed_abs, tag = 'smem constant byte address 0x4 - core index']
  #allocation1 [shape = 'u32[72,128]{1,0:T(1,128)}', space=vmem, size = 0x9000, scoped, tag = 'internal scratch']
  %s0 = inlined_call_operand.vmem [shape: f32[8,8,16], index: 0, kind: input, shape index: {}]
  %s1 = inlined_call_operand.hbm [shape: f32[16,128], index: 1, kind: input, shape index: {}]
  %s2 = inlined_call_operand.vmem [shape: f32[32,128], index: 2, kind: input, shape index: {}]
  %s3 = inlined_call_operand.vmem [shape: f32[1,128], index: 3, kind: input, shape index: {}]
  %s4 = inlined_call_operand.vmem [shape: f32[32,128], index: 4, kind: input, shape index: {}]
  %s5 = inlined_call_operand.vmem [shape: f32[32,128], index: 5, kind: input, shape index: {}]
  %s6 = inlined_call_operand.vmem [shape: f32[1,128], index: 6, kind: input, shape index: {}]
  %s7 = inlined_call_operand.vmem [shape: f32[32,8], index: 7, kind: input, shape index: {}]
  %s8 = inlined_call_operand.vmem [shape: f32[1,8], index: 8, kind: input, shape index: {}]
  %s9 = inlined_call_operand.vmem [shape: f32[8,8,8], index: 9, kind: output, shape index: {}]
  %s10 = sld [smem:[#allocation0]]
  $region50: #{lstm_tagger_forward.1} parent=0
    _
  %s12 = ssub.s32 1, %s10
  %s13 = scalar_select 0, %s12, %s10
  $region1: #{lstm_tagger_forward.1} parent=0
    #allocation2 [shape = 'u8[8192]{0}', space=vmem, size = 0x2000, scoped, tag = 'input window, operand 1, single buffered']
    #allocation3 [shape = 's32[1]{0}', space=sflag, size = 0x4, scoped, tag = 'scoped memory for lstm_tagger_forward.1']
    %14 = vsyncpa [#allocation3], 0
    // Predicated region
    $region2: #{lstm_tagger_forward.1} parent=1 // pred_check
      _
    $region3: #{lstm_tagger_forward.1} parent=1 // pred_check_branch
      %16 = sbr.rel (0) target = $region5
    $region4: #{lstm_tagger_forward.1} parent=1 // pred_region
      _
    $region5: #{lstm_tagger_forward.1} parent=1 // pred_fallthru
      _
    // Predicated region
    $region6: #{lstm_tagger_forward.1} parent=1 // pred_check
      _
    $region7: #{lstm_tagger_forward.1} parent=1 // pred_check_branch
      %18 = sbr.rel (0) target = $region9
    $region8: #{lstm_tagger_forward.1} parent=1 // pred_region
      %20 = vsyncadd [#allocation3], 0
      %s21 = sshll.u32 %s1, 4
      %s22 = int_to_ptr.hbm [resolvable:$true] %s21
      %s23 = sshll.u32 [#allocation2], 4
      %s24 = int_to_ptr.vmem [resolvable:$true] %s23
      %29 = dma.hbm_to_vmem [thread:$0]  %s22, 256, %s24, [#allocation3], 128, 128, 8
    $region9: #{lstm_tagger_forward.1} parent=1 // pred_fallthru
      _
    // Predicated region
    $region10: #{lstm_tagger_forward.1} parent=1 // pred_check
      _
    $region11: #{lstm_tagger_forward.1} parent=1 // pred_check_branch
      %31 = sbr.rel (0) target = $region13
    $region12: #{lstm_tagger_forward.1} parent=1 // pred_region
      _
    $region13: #{lstm_tagger_forward.1} parent=1 // pred_fallthru
      _
    // Predicated region
    $region14: #{lstm_tagger_forward.1} parent=1 // pred_check
      _
    $region15: #{lstm_tagger_forward.1} parent=1 // pred_check_branch
      %33 = sbr.rel (0) target = $region17
    $region16: #{lstm_tagger_forward.1} parent=1 // pred_region
      _
    $region17: #{lstm_tagger_forward.1} parent=1 // pred_fallthru
      _
    // Predicated region
    $region18: #{lstm_tagger_forward.1} parent=1 // pred_check
      _
    $region19: #{lstm_tagger_forward.1} parent=1 // pred_check_branch
      %35 = sbr.rel (0) target = $region21
    $region20: #{lstm_tagger_forward.1} parent=1 // pred_region
      _
    $region21: #{lstm_tagger_forward.1} parent=1 // pred_fallthru
      _
    // Predicated region
    $region22: #{lstm_tagger_forward.1} parent=1 // pred_check
      _
    $region23: #{lstm_tagger_forward.1} parent=1 // pred_check_branch
      %37 = sbr.rel (0) target = $region25
    $region24: #{lstm_tagger_forward.1} parent=1 // pred_region
      _
    $region25: #{lstm_tagger_forward.1} parent=1 // pred_fallthru
      _
    // Predicated region
    $region26: #{lstm_tagger_forward.1} parent=1 // pred_check
      _
    $region27: #{lstm_tagger_forward.1} parent=1 // pred_check_branch
      %39 = sbr.rel (0) target = $region29
    $region28: #{lstm_tagger_forward.1} parent=1 // pred_region
      _
    $region29: #{lstm_tagger_forward.1} parent=1 // pred_fallthru
      _
    // Predicated region
    $region30: #{lstm_tagger_forward.1} parent=1 // pred_check
      _
    $region31: #{lstm_tagger_forward.1} parent=1 // pred_check_branch
      %41 = sbr.rel (0) target = $region33
    $region32: #{lstm_tagger_forward.1} parent=1 // pred_region
      _
    $region33: #{lstm_tagger_forward.1} parent=1 // pred_fallthru
      _
    // Predicated region
    $region34: #{lstm_tagger_forward.1} parent=1 // pred_check
      _
    $region35: #{lstm_tagger_forward.1} parent=1 // pred_check_branch
      %43 = sbr.rel (0) target = $region37
    $region36: #{lstm_tagger_forward.1} parent=1 // pred_region
      _
    $region37: #{lstm_tagger_forward.1} parent=1 // pred_fallthru
      _
    // Predicated region
    $region38: #{lstm_tagger_forward.1} parent=1 // pred_check
      _
    $region39: #{lstm_tagger_forward.1} parent=1 // pred_check_branch
      %45 = sbr.rel (0) target = $region41
    $region40: #{lstm_tagger_forward.1} parent=1 // pred_region
      %47 = dma.done [#allocation3], 256
    $region41: #{lstm_tagger_forward.1} parent=1 // pred_fallthru
      _
    %v48 = vld [vmem:[#allocation2] sm:$0xff]
    %v49 = vld [vmem:[#allocation2 + $0x8] sm:$0xff]
    %v50 = vld [vmem:[%s2] sm:$0xff]
    %v51 = vld [vmem:[%s2 + $0x8] sm:$0xff]
    %v52 = vld [vmem:[%s2 + $0x10] sm:$0xff]
    %v53 = vld [vmem:[%s2 + $0x18] sm:$0xff]
    %v54 = vld [vmem:[%s3] sm:$0x1]
    %v55 = vld [vmem:[%s0] sm:$0xff]
    %v56 = vld [vmem:[%s0 + $0x8] sm:$0xff]
    %v57 = vld [vmem:[%s0 + $0x10] sm:$0xff]
    %v58 = vld [vmem:[%s0 + $0x18] sm:$0xff]
    %v59 = vld [vmem:[%s0 + $0x20] sm:$0xff]
    %v60 = vld [vmem:[%s0 + $0x28] sm:$0xff]
    %v61 = vld [vmem:[%s0 + $0x30] sm:$0xff]
    %v62 = vld [vmem:[%s0 + $0x38] sm:$0xff]
    %v64 = vperm.slane %v54, 0
    %vm66 = vcmask 130048
    %v68 = vsel %vm66, %v55, 0
    %v71 = vsel %vm66, %v56, 0
    %v74 = vsel %vm66, %v57, 0
    %v77 = vsel %vm66, %v58, 0
    %v80 = vsel %vm66, %v59, 0
    %v83 = vsel %vm66, %v60, 0
    %v86 = vsel %vm66, %v61, 0
    %v89 = vsel %vm66, %v62, 0
    %91 = vmatpush.msra.mxu0 0.0
    %92 = vmatpush.msra.mxu0 0.0
    %93 = vmatpush.msra.mxu0 0.0
    %94 = vmatpush.msra.mxu0 0.0
    %95 = vmatpush.msra.mxu0 0.0
    %96 = vmatpush.msra.mxu0 0.0
    %97 = vmatpush.msra.mxu0 0.0
    %98 = vmatpush.msra.mxu0 0.0
    %99 = vmatpush.msra.mxu0 0.0
    %100 = vmatpush.msra.mxu0 0.0
    %101 = vmatpush.msra.mxu0 0.0
    %102 = vmatpush.msra.mxu0 0.0
    %103 = vmatpush.msra.mxu0 0.0
    %104 = vmatpush.msra.mxu0 0.0
    %105 = vmatpush.msra.mxu0 %v49
    %106 = vmatpush.msra.mxu0 %v48
    %107 = vmatmul.f32.gmra.mxu0 %v68
    %v108 = vpop.f32.mrf.mxu0
    %v109 = vadd.f32 %v64, %v108
    %110 = vmatmul.f32.gmra.mxu0 %v71
    %v111 = vpop.f32.mrf.mxu0
    %v112 = vadd.f32 %v64, %v111
    %113 = vmatmul.f32.gmra.mxu0 %v74
    %v114 = vpop.f32.mrf.mxu0
    %v115 = vadd.f32 %v64, %v114
    %116 = vmatmul.f32.gmra.mxu0 %v77
    %v117 = vpop.f32.mrf.mxu0
    %v118 = vadd.f32 %v64, %v117
    %119 = vmatmul.f32.gmra.mxu0 %v80
    %v120 = vpop.f32.mrf.mxu0
    %v121 = vadd.f32 %v64, %v120
    %122 = vmatmul.f32.gmra.mxu0 %v83
    %v123 = vpop.f32.mrf.mxu0
    %v124 = vadd.f32 %v64, %v123
    %125 = vmatmul.f32.gmra.mxu0 %v86
    %v126 = vpop.f32.mrf.mxu0
    %v127 = vadd.f32 %v64, %v126
    %128 = vmatmul.f32.gmra.mxu0 %v89
    %v129 = vpop.f32.mrf.mxu0
    %v130 = vadd.f32 %v64, %v129
    %131 = vdwg.mxu0
    %vm132 = vcmask 261120
    %v134 = vsel %vm132, 0.0, 0
    %136 = vmatpush.msra.mxu0 0.0
    %137 = vmatpush.msra.mxu0 0.0
    %138 = vmatpush.msra.mxu0 0.0
    %139 = vmatpush.msra.mxu0 0.0
    %140 = vmatpush.msra.mxu0 0.0
    %141 = vmatpush.msra.mxu0 0.0
    %142 = vmatpush.msra.mxu0 0.0
    %143 = vmatpush.msra.mxu0 0.0
    %144 = vmatpush.msra.mxu0 0.0
    %145 = vmatpush.msra.mxu0 0.0
    %146 = vmatpush.msra.mxu0 0.0
    %147 = vmatpush.msra.mxu0 0.0
    %148 = vmatpush.msra.mxu0 %v53
    %149 = vmatpush.msra.mxu0 %v52
    %150 = vmatpush.msra.mxu0 %v51
    %151 = vmatpush.msra.mxu0 %v50
    %152 = vmatmul.f32.gmra.mxu0 %v134
    %v153 = vpop.f32.mrf.mxu0
    %v154 = vadd.f32 0.0, %v153
    %155 = vdwg.mxu0
    %v157 = vrot.slane %v154, 1
    %v158 = vrot.slane %v154, 2
    %v159 = vrot.slane %v154, 3
    %v160 = vrot.slane %v154, 4
    %v161 = vrot.slane %v154, 5
    %v162 = vrot.slane %v154, 6
    %v163 = vrot.slane %v154, 7
    %v172 = vadd.f32 %v109, %v154
    %v173 = vadd.f32 %v112, %v157
    %v174 = vadd.f32 %v115, %v158
    %v175 = vadd.f32 %v118, %v159
    %v176 = vadd.f32 %v121, %v160
    %v177 = vadd.f32 %v124, %v161
    %v178 = vadd.f32 %v127, %v162
    %v179 = vadd.f32 %v130, %v163
    %v180 = vxor.u32 %v172, 2147483648
    %v181 = vxor.u32 %v173, 2147483648
    %v182 = vxor.u32 %v174, 2147483648
    %v183 = vxor.u32 %v175, 2147483648
    %v184 = vxor.u32 %v176, 2147483648
    %v185 = vxor.u32 %v177, 2147483648
    %v186 = vxor.u32 %v178, 2147483648
    %v187 = vxor.u32 %v179, 2147483648
    %v188 = vmul.f32 %v180, 1.442695
    %v189 = vpow.pop %v188
    %v190 = vmul.f32 %v181, 1.442695
    %v191 = vpow.pop %v190
    %v192 = vmul.f32 %v182, 1.442695
    %v193 = vpow.pop %v192
    %v194 = vmul.f32 %v183, 1.442695
    %v195 = vpow.pop %v194
    %v196 = vmul.f32 %v184, 1.442695
    %v197 = vpow.pop %v196
    %v198 = vmul.f32 %v185, 1.442695
    %v199 = vpow.pop %v198
    %v200 = vmul.f32 %v186, 1.442695
    %v201 = vpow.pop %v200
    %v202 = vmul.f32 %v187, 1.442695
    %v203 = vpow.pop %v202
    %v204 = vadd.f32 %v189, 1.0
    %v205 = vadd.f32 %v191, 1.0
    %v206 = vadd.f32 %v193, 1.0
    %v207 = vadd.f32 %v195, 1.0
    %v208 = vadd.f32 %v197, 1.0
    %v209 = vadd.f32 %v199, 1.0
    %v210 = vadd.f32 %v201, 1.0
    %v211 = vadd.f32 %v203, 1.0
    %v212 = vrcp.pop %v204
    %v213 = vmul.f32 %v204, %v212
    %v214 = vsub.f32 1.0, %v213
    %v215 = vmul.f32 %v212, %v214
    %v216 = vadd.f32 %v212, %v215
    %vm217 = vweird.f32 %v204
    %vm218 = vweird.f32 %v212
    %vm219 = vmor %vm217, %vm218
    %v220 = vsel %vm219, %v212, %v216
    %v221 = vand.u32 2147483647, %v204
    %vm222 = vcmp.eq.f32.partialorder %v221, 8.507059e+37
    %v223 = vand.u32 %v204, 2147483648
    %v224 = vor.u32 1.1754944e-38, %v223
    %v225 = vsel %vm222, %v224, %v220
    %v226 = vmul.f32 1.0, %v225
    %v227 = vrcp.pop %v205
    %v228 = vmul.f32 %v205, %v227
    %v229 = vsub.f32 1.0, %v228
    %v230 = vmul.f32 %v227, %v229
    %v231 = vadd.f32 %v227, %v230
    %vm232 = vweird.f32 %v205
    %vm233 = vweird.f32 %v227
    %vm234 = vmor %vm232, %vm233
    %v235 = vsel %vm234, %v227, %v231
    %v236 = vand.u32 2147483647, %v205
    %vm237 = vcmp.eq.f32.partialorder %v236, 8.507059e+37
    %v238 = vand.u32 %v205, 2147483648
    %v239 = vor.u32 1.1754944e-38, %v238
    %v240 = vsel %vm237, %v239, %v235
    %v241 = vmul.f32 1.0, %v240
    %v242 = vrcp.pop %v206
    %v243 = vmul.f32 %v206, %v242
    %v244 = vsub.f32 1.0, %v243
    %v245 = vmul.f32 %v242, %v244
    %v246 = vadd.f32 %v242, %v245
    %vm247 = vweird.f32 %v206
    %vm248 = vweird.f32 %v242
    %vm249 = vmor %vm247, %vm248
    %v250 = vsel %vm249, %v242, %v246
    %v251 = vand.u32 2147483647, %v206
    %vm252 = vcmp.eq.f32.partialorder %v251, 8.507059e+37
    %v253 = vand.u32 %v206, 2147483648
    %v254 = vor.u32 1.1754944e-38, %v253
    %v255 = vsel %vm252, %v254, %v250
    %v256 = vmul.f32 1.0, %v255
    %v257 = vrcp.pop %v207
    %v258 = vmul.f32 %v207, %v257
    %v259 = vsub.f32 1.0, %v258
    %v260 = vmul.f32 %v257, %v259
    %v261 = vadd.f32 %v257, %v260
    %vm262 = vweird.f32 %v207
    %vm263 = vweird.f32 %v257
    %vm264 = vmor %vm262, %vm263
    %v265 = vsel %vm264, %v257, %v261
    %v266 = vand.u32 2147483647, %v207
    %vm267 = vcmp.eq.f32.partialorder %v266, 8.507059e+37
    %v268 = vand.u32 %v207, 2147483648
    %v269 = vor.u32 1.1754944e-38, %v268
    %v270 = vsel %vm267, %v269, %v265
    %v271 = vmul.f32 1.0, %v270
    %v272 = vrcp.pop %v208
    %v273 = vmul.f32 %v208, %v272
    %v274 = vsub.f32 1.0, %v273
    %v275 = vmul.f32 %v272, %v274
    %v276 = vadd.f32 %v272, %v275
    %vm277 = vweird.f32 %v208
    %vm278 = vweird.f32 %v272
    %vm279 = vmor %vm277, %vm278
    %v280 = vsel %vm279, %v272, %v276
    %v281 = vand.u32 2147483647, %v208
    %vm282 = vcmp.eq.f32.partialorder %v281, 8.507059e+37
    %v283 = vand.u32 %v208, 2147483648
    %v284 = vor.u32 1.1754944e-38, %v283
    %v285 = vsel %vm282, %v284, %v280
    %v286 = vmul.f32 1.0, %v285
    %v287 = vrcp.pop %v209
    %v288 = vmul.f32 %v209, %v287
    %v289 = vsub.f32 1.0, %v288
    %v290 = vmul.f32 %v287, %v289
    %v291 = vadd.f32 %v287, %v290
    %vm292 = vweird.f32 %v209
    %vm293 = vweird.f32 %v287
    %vm294 = vmor %vm292, %vm293
    %v295 = vsel %vm294, %v287, %v291
    %v296 = vand.u32 2147483647, %v209
    %vm297 = vcmp.eq.f32.partialorder %v296, 8.507059e+37
    %v298 = vand.u32 %v209, 2147483648
    %v299 = vor.u32 1.1754944e-38, %v298
    %v300 = vsel %vm297, %v299, %v295
    %v301 = vmul.f32 1.0, %v300
    %v302 = vrcp.pop %v210
    %v303 = vmul.f32 %v210, %v302
    %v304 = vsub.f32 1.0, %v303
    %v305 = vmul.f32 %v302, %v304
    %v306 = vadd.f32 %v302, %v305
    %vm307 = vweird.f32 %v210
    %vm308 = vweird.f32 %v302
    %vm309 = vmor %vm307, %vm308
    %v310 = vsel %vm309, %v302, %v306
    %v311 = vand.u32 2147483647, %v210
    %vm312 = vcmp.eq.f32.partialorder %v311, 8.507059e+37
    %v313 = vand.u32 %v210, 2147483648
    %v314 = vor.u32 1.1754944e-38, %v313
    %v315 = vsel %vm312, %v314, %v310
    %v316 = vmul.f32 1.0, %v315
    %v317 = vrcp.pop %v211
    %v318 = vmul.f32 %v211, %v317
    %v319 = vsub.f32 1.0, %v318
    %v320 = vmul.f32 %v317, %v319
    %v321 = vadd.f32 %v317, %v320
    %vm322 = vweird.f32 %v211
    %vm323 = vweird.f32 %v317
    %vm324 = vmor %vm322, %vm323
    %v325 = vsel %vm324, %v317, %v321
    %v326 = vand.u32 2147483647, %v211
    %vm327 = vcmp.eq.f32.partialorder %v326, 8.507059e+37
    %v328 = vand.u32 %v211, 2147483648
    %v329 = vor.u32 1.1754944e-38, %v328
    %v330 = vsel %vm327, %v329, %v325
    %v331 = vmul.f32 1.0, %v330
    %v332 = vtanh.pop %v172
    %v333 = vtanh.pop %v173
    %v334 = vtanh.pop %v174
    %v335 = vtanh.pop %v175
    %v336 = vtanh.pop %v176
    %v337 = vtanh.pop %v177
    %v338 = vtanh.pop %v178
    %v339 = vtanh.pop %v179
    %v340 = vmul.f32 %v226, 0.0
    %v341 = vmul.f32 %v241, 0.0
    %v342 = vmul.f32 %v256, 0.0
    %v343 = vmul.f32 %v271, 0.0
    %v344 = vmul.f32 %v286, 0.0
    %v345 = vmul.f32 %v301, 0.0
    %v346 = vmul.f32 %v316, 0.0
    %v347 = vmul.f32 %v331, 0.0
    %356 = vrot.lane.b32.xlu0 %v332, 64
    %v357 = vpop.permute.xlu0 %356
    %358 = vrot.lane.b32.xlu0 %v333, 64
    %v359 = vpop.permute.xlu0 %358
    %360 = vrot.lane.b32.xlu0 %v334, 64
    %v361 = vpop.permute.xlu0 %360
    %362 = vrot.lane.b32.xlu0 %v335, 64
    %v363 = vpop.permute.xlu0 %362
    %364 = vrot.lane.b32.xlu0 %v336, 64
    %v365 = vpop.permute.xlu0 %364
    %366 = vrot.lane.b32.xlu0 %v337, 64
    %v367 = vpop.permute.xlu0 %366
    %368 = vrot.lane.b32.xlu0 %v338, 64
    %v369 = vpop.permute.xlu0 %368
    %370 = vrot.lane.b32.xlu0 %v339, 64
    %v371 = vpop.permute.xlu0 %370
    %v380 = vmul.f32 %v226, %v357
    %v381 = vmul.f32 %v241, %v359
    %v382 = vmul.f32 %v256, %v361
    %v383 = vmul.f32 %v271, %v363
    %v384 = vmul.f32 %v286, %v365
    %v385 = vmul.f32 %v301, %v367
    %v386 = vmul.f32 %v316, %v369
    %v387 = vmul.f32 %v331, %v371
    %396 = vrot.lane.b32.xlu0 %v380, 32
    %v397 = vpop.permute.xlu0 %396
    %398 = vrot.lane.b32.xlu0 %v381, 32
    %v399 = vpop.permute.xlu0 %398
    %400 = vrot.lane.b32.xlu0 %v382, 32
    %v401 = vpop.permute.xlu0 %400
    %402 = vrot.lane.b32.xlu0 %v383, 32
    %v403 = vpop.permute.xlu0 %402
    %404 = vrot.lane.b32.xlu0 %v384, 32
    %v405 = vpop.permute.xlu0 %404
    %406 = vrot.lane.b32.xlu0 %v385, 32
    %v407 = vpop.permute.xlu0 %406
    %408 = vrot.lane.b32.xlu0 %v386, 32
    %v409 = vpop.permute.xlu0 %408
    %410 = vrot.lane.b32.xlu0 %v387, 32
    %v411 = vpop.permute.xlu0 %410
    %v420 = vadd.f32 %v340, %v397
    %v421 = vadd.f32 %v341, %v399
    %v422 = vadd.f32 %v342, %v401
    %v423 = vadd.f32 %v343, %v403
    %v424 = vadd.f32 %v344, %v405
    %v425 = vadd.f32 %v345, %v407
    %v426 = vadd.f32 %v346, %v409
    %v427 = vadd.f32 %v347, %v411
    %v428 = vtanh.pop %v420
    %v429 = vtanh.pop %v421
    %v430 = vtanh.pop %v422
    %v431 = vtanh.pop %v423
    %v432 = vtanh.pop %v424
    %v433 = vtanh.pop %v425
    %v434 = vtanh.pop %v426
    %v435 = vtanh.pop %v427
    %444 = vrot.lane.b32.xlu0 %v428, 64
    %v445 = vpop.permute.xlu0 %444
    %446 = vrot.lane.b32.xlu0 %v429, 64
    %v447 = vpop.permute.xlu0 %446
    %448 = vrot.lane.b32.xlu0 %v430, 64
    %v449 = vpop.permute.xlu0 %448
    %450 = vrot.lane.b32.xlu0 %v431, 64
    %v451 = vpop.permute.xlu0 %450
    %452 = vrot.lane.b32.xlu0 %v432, 64
    %v453 = vpop.permute.xlu0 %452
    %454 = vrot.lane.b32.xlu0 %v433, 64
    %v455 = vpop.permute.xlu0 %454
    %456 = vrot.lane.b32.xlu0 %v434, 64
    %v457 = vpop.permute.xlu0 %456
    %458 = vrot.lane.b32.xlu0 %v435, 64
    %v459 = vpop.permute.xlu0 %458
    %v468 = vmul.f32 %v226, %v445
    %v469 = vmul.f32 %v241, %v447
    %v470 = vmul.f32 %v256, %v449
    %v471 = vmul.f32 %v271, %v451
    %v472 = vmul.f32 %v286, %v453
    %v473 = vmul.f32 %v301, %v455
    %v474 = vmul.f32 %v316, %v457
    %v475 = vmul.f32 %v331, %v459
    %v484 = vrot.slane %v469, 7
    %vm485 = vcmask 1041409
    %v486 = vsel %vm485, %v484, %v468
    %v487 = vrot.slane %v470, 6
    %vm488 = vcmask 1042434
    %v489 = vsel %vm488, %v487, %v486
    %v490 = vrot.slane %v471, 5
    %vm491 = vcmask 1043459
    %v492 = vsel %vm491, %v490, %v489
    %v493 = vrot.slane %v472, 4
    %vm494 = vcmask 1044484
    %v495 = vsel %vm494, %v493, %v492
    %v496 = vrot.slane %v473, 3
    %vm497 = vcmask 1045509
    %v498 = vsel %vm497, %v496, %v495
    %v499 = vrot.slane %v474, 2
    %vm500 = vcmask 1046534
    %v501 = vsel %vm500, %v499, %v498
    %v502 = vrot.slane %v475, 1
    %vm503 = vcmask 1047559
    %v504 = vsel %vm503, %v502, %v501
    %505 = vrot.lane.b32.xlu0 %v504, 32
    %v506 = vpop.permute.xlu0 %505
    %v507 = vsel %vm132, %v506, 0
    %509 = vmatpush.msra.mxu0 0.0
    %510 = vmatpush.msra.mxu0 0.0
    %511 = vmatpush.msra.mxu0 0.0
    %512 = vmatpush.msra.mxu0 0.0
    %513 = vmatpush.msra.mxu0 0.0
    %514 = vmatpush.msra.mxu0 0.0
    %515 = vmatpush.msra.mxu0 0.0
    %516 = vmatpush.msra.mxu0 0.0
    %517 = vmatpush.msra.mxu0 0.0
    %518 = vmatpush.msra.mxu0 0.0
    %519 = vmatpush.msra.mxu0 0.0
    %520 = vmatpush.msra.mxu0 0.0
    %521 = vmatpush.msra.mxu0 %v53
    %522 = vmatpush.msra.mxu0 %v52
    %523 = vmatpush.msra.mxu0 %v51
    %524 = vmatpush.msra.mxu0 %v50
    %525 = vmatmul.f32.gmra.mxu0 %v507
    %v526 = vpop.f32.mrf.mxu0
    %v527 = vadd.f32 0.0, %v526
    %528 = vdwg.mxu0
    %v530 = vrot.slane %v527, 7
    %v531 = vrot.slane %v527, 1
    %v532 = vrot.slane %v527, 2
    %v533 = vrot.slane %v527, 3
    %v534 = vrot.slane %v527, 4
    %v535 = vrot.slane %v527, 5
    %v536 = vrot.slane %v527, 6
    %v545 = vadd.f32 %v109, %v530
    %v546 = vadd.f32 %v112, %v527
    %v547 = vadd.f32 %v115, %v531
    %v548 = vadd.f32 %v118, %v532
    %v549 = vadd.f32 %v121, %v533
    %v550 = vadd.f32 %v124, %v534
    %v551 = vadd.f32 %v127, %v535
    %v552 = vadd.f32 %v130, %v536
    %v553 = vxor.u32 %v545, 2147483648
    %v554 = vxor.u32 %v546, 2147483648
    %v555 = vxor.u32 %v547, 2147483648
    %v556 = vxor.u32 %v548, 2147483648
    %v557 = vxor.u32 %v549, 2147483648
    %v558 = vxor.u32 %v550, 2147483648
    %v559 = vxor.u32 %v551, 2147483648
    %v560 = vxor.u32 %v552, 2147483648
    %v561 = vmul.f32 %v553, 1.442695
    %v562 = vpow.pop %v561
    %v563 = vmul.f32 %v554, 1.442695
    %v564 = vpow.pop %v563
    %v565 = vmul.f32 %v555, 1.442695
    %v566 = vpow.pop %v565
    %v567 = vmul.f32 %v556, 1.442695
    %v568 = vpow.pop %v567
    %v569 = vmul.f32 %v557, 1.442695
    %v570 = vpow.pop %v569
    %v571 = vmul.f32 %v558, 1.442695
    %v572 = vpow.pop %v571
    %v573 = vmul.f32 %v559, 1.442695
    %v574 = vpow.pop %v573
    %v575 = vmul.f32 %v560, 1.442695
    %v576 = vpow.pop %v575
    %v577 = vadd.f32 %v562, 1.0
    %v578 = vadd.f32 %v564, 1.0
    %v579 = vadd.f32 %v566, 1.0
    %v580 = vadd.f32 %v568, 1.0
    %v581 = vadd.f32 %v570, 1.0
    %v582 = vadd.f32 %v572, 1.0
    %v583 = vadd.f32 %v574, 1.0
    %v584 = vadd.f32 %v576, 1.0
    %v585 = vrcp.pop %v577
    %v586 = vmul.f32 %v577, %v585
    %v587 = vsub.f32 1.0, %v586
    %v588 = vmul.f32 %v585, %v587
    %v589 = vadd.f32 %v585, %v588
    %vm590 = vweird.f32 %v577
    %vm591 = vweird.f32 %v585
    %vm592 = vmor %vm590, %vm591
    %v593 = vsel %vm592, %v585, %v589
    %v594 = vand.u32 2147483647, %v577
    %vm595 = vcmp.eq.f32.partialorder %v594, 8.507059e+37
    %v596 = vand.u32 %v577, 2147483648
    %v597 = vor.u32 1.1754944e-38, %v596
    %v598 = vsel %vm595, %v597, %v593
    %v599 = vmul.f32 1.0, %v598
    %v600 = vrcp.pop %v578
    %v601 = vmul.f32 %v578, %v600
    %v602 = vsub.f32 1.0, %v601
    %v603 = vmul.f32 %v600, %v602
    %v604 = vadd.f32 %v600, %v603
    %vm605 = vweird.f32 %v578
    %vm606 = vweird.f32 %v600
    %vm607 = vmor %vm605, %vm606
    %v608 = vsel %vm607, %v600, %v604
    %v609 = vand.u32 2147483647, %v578
    %vm610 = vcmp.eq.f32.partialorder %v609, 8.507059e+37
    %v611 = vand.u32 %v578, 2147483648
    %v612 = vor.u32 1.1754944e-38, %v611
    %v613 = vsel %vm610, %v612, %v608
    %v614 = vmul.f32 1.0, %v613
    %v615 = vrcp.pop %v579
    %v616 = vmul.f32 %v579, %v615
    %v617 = vsub.f32 1.0, %v616
    %v618 = vmul.f32 %v615, %v617
    %v619 = vadd.f32 %v615, %v618
    %vm620 = vweird.f32 %v579
    %vm621 = vweird.f32 %v615
    %vm622 = vmor %vm620, %vm621
    %v623 = vsel %vm622, %v615, %v619
    %v624 = vand.u32 2147483647, %v579
    %vm625 = vcmp.eq.f32.partialorder %v624, 8.507059e+37
    %v626 = vand.u32 %v579, 2147483648
    %v627 = vor.u32 1.1754944e-38, %v626
    %v628 = vsel %vm625, %v627, %v623
    %v629 = vmul.f32 1.0, %v628
    %v630 = vrcp.pop %v580
    %v631 = vmul.f32 %v580, %v630
    %v632 = vsub.f32 1.0, %v631
    %v633 = vmul.f32 %v630, %v632
    %v634 = vadd.f32 %v630, %v633
    %vm635 = vweird.f32 %v580
    %vm636 = vweird.f32 %v630
    %vm637 = vmor %vm635, %vm636
    %v638 = vsel %vm637, %v630, %v634
    %v639 = vand.u32 2147483647, %v580
    %vm640 = vcmp.eq.f32.partialorder %v639, 8.507059e+37
    %v641 = vand.u32 %v580, 2147483648
    %v642 = vor.u32 1.1754944e-38, %v641
    %v643 = vsel %vm640, %v642, %v638
    %v644 = vmul.f32 1.0, %v643
    %v645 = vrcp.pop %v581
    %v646 = vmul.f32 %v581, %v645
    %v647 = vsub.f32 1.0, %v646
    %v648 = vmul.f32 %v645, %v647
    %v649 = vadd.f32 %v645, %v648
    %vm650 = vweird.f32 %v581
    %vm651 = vweird.f32 %v645
    %vm652 = vmor %vm650, %vm651
    %v653 = vsel %vm652, %v645, %v649
    %v654 = vand.u32 2147483647, %v581
    %vm655 = vcmp.eq.f32.partialorder %v654, 8.507059e+37
    %v656 = vand.u32 %v581, 2147483648
    %v657 = vor.u32 1.1754944e-38, %v656
    %v658 = vsel %vm655, %v657, %v653
    %v659 = vmul.f32 1.0, %v658
    %v660 = vrcp.pop %v582
    %v661 = vmul.f32 %v582, %v660
    %v662 = vsub.f32 1.0, %v661
    %v663 = vmul.f32 %v660, %v662
    %v664 = vadd.f32 %v660, %v663
    %vm665 = vweird.f32 %v582
    %vm666 = vweird.f32 %v660
    %vm667 = vmor %vm665, %vm666
    %v668 = vsel %vm667, %v660, %v664
    %v669 = vand.u32 2147483647, %v582
    %vm670 = vcmp.eq.f32.partialorder %v669, 8.507059e+37
    %v671 = vand.u32 %v582, 2147483648
    %v672 = vor.u32 1.1754944e-38, %v671
    %v673 = vsel %vm670, %v672, %v668
    %v674 = vmul.f32 1.0, %v673
    %v675 = vrcp.pop %v583
    %v676 = vmul.f32 %v583, %v675
    %v677 = vsub.f32 1.0, %v676
    %v678 = vmul.f32 %v675, %v677
    %v679 = vadd.f32 %v675, %v678
    %vm680 = vweird.f32 %v583
    %vm681 = vweird.f32 %v675
    %vm682 = vmor %vm680, %vm681
    %v683 = vsel %vm682, %v675, %v679
    %v684 = vand.u32 2147483647, %v583
    %vm685 = vcmp.eq.f32.partialorder %v684, 8.507059e+37
    %v686 = vand.u32 %v583, 2147483648
    %v687 = vor.u32 1.1754944e-38, %v686
    %v688 = vsel %vm685, %v687, %v683
    %v689 = vmul.f32 1.0, %v688
    %v690 = vrcp.pop %v584
    %v691 = vmul.f32 %v584, %v690
    %v692 = vsub.f32 1.0, %v691
    %v693 = vmul.f32 %v690, %v692
    %v694 = vadd.f32 %v690, %v693
    %vm695 = vweird.f32 %v584
    %vm696 = vweird.f32 %v690
    %vm697 = vmor %vm695, %vm696
    %v698 = vsel %vm697, %v690, %v694
    %v699 = vand.u32 2147483647, %v584
    %vm700 = vcmp.eq.f32.partialorder %v699, 8.507059e+37
    %v701 = vand.u32 %v584, 2147483648
    %v702 = vor.u32 1.1754944e-38, %v701
    %v703 = vsel %vm700, %v702, %v698
    %v704 = vmul.f32 1.0, %v703
    %v705 = vtanh.pop %v545
    %v706 = vtanh.pop %v546
    %v707 = vtanh.pop %v547
    %v708 = vtanh.pop %v548
    %v709 = vtanh.pop %v549
    %v710 = vtanh.pop %v550
    %v711 = vtanh.pop %v551
    %v712 = vtanh.pop %v552
    %v721 = vrot.slane %v420, 7
    %v722 = vrot.slane %v421, 7
    %v723 = vrot.slane %v422, 7
    %v724 = vrot.slane %v423, 7
    %v725 = vrot.slane %v424, 7
    %v726 = vrot.slane %v425, 7
    %v727 = vrot.slane %v426, 7
    %v728 = vrot.slane %v427, 7
    %v737 = vmul.f32 %v599, %v721
    %v738 = vmul.f32 %v614, %v722
    %v739 = vmul.f32 %v629, %v723
    %v740 = vmul.f32 %v644, %v724
    %v741 = vmul.f32 %v659, %v725
    %v742 = vmul.f32 %v674, %v726
    %v743 = vmul.f32 %v689, %v727
    %v744 = vmul.f32 %v704, %v728
    %753 = vrot.lane.b32.xlu0 %v705, 64
    %v754 = vpop.permute.xlu0 %753
    %755 = vrot.lane.b32.xlu0 %v706, 64
    %v756 = vpop.permute.xlu0 %755
    %757 = vrot.lane.b32.xlu0 %v707, 64
    %v758 = vpop.permute.xlu0 %757
    %759 = vrot.lane.b32.xlu0 %v708, 64
    %v760 = vpop.permute.xlu0 %759
    %761 = vrot.lane.b32.xlu0 %v709, 64
    %v762 = vpop.permute.xlu0 %761
    %763 = vrot.lane.b32.xlu0 %v710, 64
    %v764 = vpop.permute.xlu0 %763
    %765 = vrot.lane.b32.xlu0 %v711, 64
    %v766 = vpop.permute.xlu0 %765
    %767 = vrot.lane.b32.xlu0 %v712, 64
    %v768 = vpop.permute.xlu0 %767
    %v777 = vmul.f32 %v599, %v754
    %v778 = vmul.f32 %v614, %v756
    %v779 = vmul.f32 %v629, %v758
    %v780 = vmul.f32 %v644, %v760
    %v781 = vmul.f32 %v659, %v762
    %v782 = vmul.f32 %v674, %v764
    %v783 = vmul.f32 %v689, %v766
    %v784 = vmul.f32 %v704, %v768
    %793 = vrot.lane.b32.xlu0 %v777, 32
    %v794 = vpop.permute.xlu0 %793
    %795 = vrot.lane.b32.xlu0 %v778, 32
    %v796 = vpop.permute.xlu0 %795
    %797 = vrot.lane.b32.xlu0 %v779, 32
    %v798 = vpop.permute.xlu0 %797
    %799 = vrot.lane.b32.xlu0 %v780, 32
    %v800 = vpop.permute.xlu0 %799
    %801 = vrot.lane.b32.xlu0 %v781, 32
    %v802 = vpop.permute.xlu0 %801
    %803 = vrot.lane.b32.xlu0 %v782, 32
    %v804 = vpop.permute.xlu0 %803
    %805 = vrot.lane.b32.xlu0 %v783, 32
    %v806 = vpop.permute.xlu0 %805
    %807 = vrot.lane.b32.xlu0 %v784, 32
    %v808 = vpop.permute.xlu0 %807
    %v817 = vadd.f32 %v737, %v794
    %v818 = vadd.f32 %v738, %v796
    %v819 = vadd.f32 %v739, %v798
    %v820 = vadd.f32 %v740, %v800
    %v821 = vadd.f32 %v741, %v802
    %v822 = vadd.f32 %v742, %v804
    %v823 = vadd.f32 %v743, %v806
    %v824 = vadd.f32 %v744, %v808
    %v825 = vtanh.pop %v817
    %v826 = vtanh.pop %v818
    %v827 = vtanh.pop %v819
    %v828 = vtanh.pop %v820
    %v829 = vtanh.pop %v821
    %v830 = vtanh.pop %v822
    %v831 = vtanh.pop %v823
    %v832 = vtanh.pop %v824
    %841 = vrot.lane.b32.xlu0 %v825, 64
    %v842 = vpop.permute.xlu0 %841
    %843 = vrot.lane.b32.xlu0 %v826, 64
    %v844 = vpop.permute.xlu0 %843
    %845 = vrot.lane.b32.xlu0 %v827, 64
    %v846 = vpop.permute.xlu0 %845
    %847 = vrot.lane.b32.xlu0 %v828, 64
    %v848 = vpop.permute.xlu0 %847
    %849 = vrot.lane.b32.xlu0 %v829, 64
    %v850 = vpop.permute.xlu0 %849
    %851 = vrot.lane.b32.xlu0 %v830, 64
    %v852 = vpop.permute.xlu0 %851
    %853 = vrot.lane.b32.xlu0 %v831, 64
    %v854 = vpop.permute.xlu0 %853
    %855 = vrot.lane.b32.xlu0 %v832, 64
    %v856 = vpop.permute.xlu0 %855
    %v865 = vmul.f32 %v599, %v842
    %v866 = vmul.f32 %v614, %v844
    %v867 = vmul.f32 %v629, %v846
    %v868 = vmul.f32 %v644, %v848
    %v869 = vmul.f32 %v659, %v850
    %v870 = vmul.f32 %v674, %v852
    %v871 = vmul.f32 %v689, %v854
    %v872 = vmul.f32 %v704, %v856
    %v881 = vrot.slane %v865, 1
    %v882 = vsel %vm485, %v866, %v881
    %v883 = vrot.slane %v867, 7
    %v884 = vsel %vm488, %v883, %v882
    %v885 = vrot.slane %v868, 6
    %v886 = vsel %vm491, %v885, %v884
    %v887 = vrot.slane %v869, 5
    %v888 = vsel %vm494, %v887, %v886
    %v889 = vrot.slane %v870, 4
    %v890 = vsel %vm497, %v889, %v888
    %v891 = vrot.slane %v871, 3
    %v892 = vsel %vm500, %v891, %v890
    %v893 = vrot.slane %v872, 2
    %v894 = vsel %vm503, %v893, %v892
    %895 = vrot.lane.b32.xlu0 %v894, 32
    %v896 = vpop.permute.xlu0 %895
    %v897 = vsel %vm132, %v896, 0
    %899 = vmatpush.msra.mxu0 0.0
    %900 = vmatpush.msra.mxu0 0.0
    %901 = vmatpush.msra.mxu0 0.0
    %902 = vmatpush.msra.mxu0 0.0
    %903 = vmatpush.msra.mxu0 0.0
    %904 = vmatpush.msra.mxu0 0.0
    %905 = vmatpush.msra.mxu0 0.0
    %906 = vmatpush.msra.mxu0 0.0
    %907 = vmatpush.msra.mxu0 0.0
    %908 = vmatpush.msra.mxu0 0.0
    %909 = vmatpush.msra.mxu0 0.0
    %910 = vmatpush.msra.mxu0 0.0
    %911 = vmatpush.msra.mxu0 %v53
    %912 = vmatpush.msra.mxu0 %v52
    %913 = vmatpush.msra.mxu0 %v51
    %914 = vmatpush.msra.mxu0 %v50
    %915 = vmatmul.f32.gmra.mxu0 %v897
    %v916 = vpop.f32.mrf.mxu0
    %v917 = vadd.f32 0.0, %v916
    %918 = vdwg.mxu0
    %v920 = vrot.slane %v917, 6
    %v921 = vrot.slane %v917, 7
    %v922 = vrot.slane %v917, 1
    %v923 = vrot.slane %v917, 2
    %v924 = vrot.slane %v917, 3
    %v925 = vrot.slane %v917, 4
    %v926 = vrot.slane %v917, 5
    %v935 = vadd.f32 %v109, %v920
    %v936 = vadd.f32 %v112, %v921
    %v937 = vadd.f32 %v115, %v917
    %v938 = vadd.f32 %v118, %v922
    %v939 = vadd.f32 %v121, %v923
    %v940 = vadd.f32 %v124, %v924
    %v941 = vadd.f32 %v127, %v925
    %v942 = vadd.f32 %v130, %v926
    %v943 = vxor.u32 %v935, 2147483648
    %v944 = vxor.u32 %v936, 2147483648
    %v945 = vxor.u32 %v937, 2147483648
    %v946 = vxor.u32 %v938, 2147483648
    %v947 = vxor.u32 %v939, 2147483648
    %v948 = vxor.u32 %v940, 2147483648
    %v949 = vxor.u32 %v941, 2147483648
    %v950 = vxor.u32 %v942, 2147483648
    %v951 = vmul.f32 %v943, 1.442695
    %v952 = vpow.pop %v951
    %v953 = vmul.f32 %v944, 1.442695
    %v954 = vpow.pop %v953
    %v955 = vmul.f32 %v945, 1.442695
    %v956 = vpow.pop %v955
    %v957 = vmul.f32 %v946, 1.442695
    %v958 = vpow.pop %v957
    %v959 = vmul.f32 %v947, 1.442695
    %v960 = vpow.pop %v959
    %v961 = vmul.f32 %v948, 1.442695
    %v962 = vpow.pop %v961
    %v963 = vmul.f32 %v949, 1.442695
    %v964 = vpow.pop %v963
    %v965 = vmul.f32 %v950, 1.442695
    %v966 = vpow.pop %v965
    %v967 = vadd.f32 %v952, 1.0
    %v968 = vadd.f32 %v954, 1.0
    %v969 = vadd.f32 %v956, 1.0
    %v970 = vadd.f32 %v958, 1.0
    %v971 = vadd.f32 %v960, 1.0
    %v972 = vadd.f32 %v962, 1.0
    %v973 = vadd.f32 %v964, 1.0
    %v974 = vadd.f32 %v966, 1.0
    %v975 = vrcp.pop %v967
    %v976 = vmul.f32 %v967, %v975
    %v977 = vsub.f32 1.0, %v976
    %v978 = vmul.f32 %v975, %v977
    %v979 = vadd.f32 %v975, %v978
    %vm980 = vweird.f32 %v967
    %vm981 = vweird.f32 %v975
    %vm982 = vmor %vm980, %vm981
    %v983 = vsel %vm982, %v975, %v979
    %v984 = vand.u32 2147483647, %v967
    %vm985 = vcmp.eq.f32.partialorder %v984, 8.507059e+37
    %v986 = vand.u32 %v967, 2147483648
    %v987 = vor.u32 1.1754944e-38, %v986
    %v988 = vsel %vm985, %v987, %v983
    %v989 = vmul.f32 1.0, %v988
    %v990 = vrcp.pop %v968
    %v991 = vmul.f32 %v968, %v990
    %v992 = vsub.f32 1.0, %v991
    %v993 = vmul.f32 %v990, %v992
    %v994 = vadd.f32 %v990, %v993
    %vm995 = vweird.f32 %v968
    %vm996 = vweird.f32 %v990
    %vm997 = vmor %vm995, %vm996
    %v998 = vsel %vm997, %v990, %v994
    %v999 = vand.u32 2147483647, %v968
    %vm1000 = vcmp.eq.f32.partialorder %v999, 8.507059e+37
    %v1001 = vand.u32 %v968, 2147483648
    %v1002 = vor.u32 1.1754944e-38, %v1001
    %v1003 = vsel %vm1000, %v1002, %v998
    %v1004 = vmul.f32 1.0, %v1003
    %v1005 = vrcp.pop %v969
    %v1006 = vmul.f32 %v969, %v1005
    %v1007 = vsub.f32 1.0, %v1006
    %v1008 = vmul.f32 %v1005, %v1007
    %v1009 = vadd.f32 %v1005, %v1008
    %vm1010 = vweird.f32 %v969
    %vm1011 = vweird.f32 %v1005
    %vm1012 = vmor %vm1010, %vm1011
    %v1013 = vsel %vm1012, %v1005, %v1009
    %v1014 = vand.u32 2147483647, %v969
    %vm1015 = vcmp.eq.f32.partialorder %v1014, 8.507059e+37
    %v1016 = vand.u32 %v969, 2147483648
    %v1017 = vor.u32 1.1754944e-38, %v1016
    %v1018 = vsel %vm1015, %v1017, %v1013
    %v1019 = vmul.f32 1.0, %v1018
    %v1020 = vrcp.pop %v970
    %v1021 = vmul.f32 %v970, %v1020
    %v1022 = vsub.f32 1.0, %v1021
    %v1023 = vmul.f32 %v1020, %v1022
    %v1024 = vadd.f32 %v1020, %v1023
    %vm1025 = vweird.f32 %v970
    %vm1026 = vweird.f32 %v1020
    %vm1027 = vmor %vm1025, %vm1026
    %v1028 = vsel %vm1027, %v1020, %v1024
    %v1029 = vand.u32 2147483647, %v970
    %vm1030 = vcmp.eq.f32.partialorder %v1029, 8.507059e+37
    %v1031 = vand.u32 %v970, 2147483648
    %v1032 = vor.u32 1.1754944e-38, %v1031
    %v1033 = vsel %vm1030, %v1032, %v1028
    %v1034 = vmul.f32 1.0, %v1033
    %v1035 = vrcp.pop %v971
    %v1036 = vmul.f32 %v971, %v1035
    %v1037 = vsub.f32 1.0, %v1036
    %v1038 = vmul.f32 %v1035, %v1037
    %v1039 = vadd.f32 %v1035, %v1038
    %vm1040 = vweird.f32 %v971
    %vm1041 = vweird.f32 %v1035
    %vm1042 = vmor %vm1040, %vm1041
    %v1043 = vsel %vm1042, %v1035, %v1039
    %v1044 = vand.u32 2147483647, %v971
    %vm1045 = vcmp.eq.f32.partialorder %v1044, 8.507059e+37
    %v1046 = vand.u32 %v971, 2147483648
    %v1047 = vor.u32 1.1754944e-38, %v1046
    %v1048 = vsel %vm1045, %v1047, %v1043
    %v1049 = vmul.f32 1.0, %v1048
    %v1050 = vrcp.pop %v972
    %v1051 = vmul.f32 %v972, %v1050
    %v1052 = vsub.f32 1.0, %v1051
    %v1053 = vmul.f32 %v1050, %v1052
    %v1054 = vadd.f32 %v1050, %v1053
    %vm1055 = vweird.f32 %v972
    %vm1056 = vweird.f32 %v1050
    %vm1057 = vmor %vm1055, %vm1056
    %v1058 = vsel %vm1057, %v1050, %v1054
    %v1059 = vand.u32 2147483647, %v972
    %vm1060 = vcmp.eq.f32.partialorder %v1059, 8.507059e+37
    %v1061 = vand.u32 %v972, 2147483648
    %v1062 = vor.u32 1.1754944e-38, %v1061
    %v1063 = vsel %vm1060, %v1062, %v1058
    %v1064 = vmul.f32 1.0, %v1063
    %v1065 = vrcp.pop %v973
    %v1066 = vmul.f32 %v973, %v1065
    %v1067 = vsub.f32 1.0, %v1066
    %v1068 = vmul.f32 %v1065, %v1067
    %v1069 = vadd.f32 %v1065, %v1068
    %vm1070 = vweird.f32 %v973
    %vm1071 = vweird.f32 %v1065
    %vm1072 = vmor %vm1070, %vm1071
    %v1073 = vsel %vm1072, %v1065, %v1069
    %v1074 = vand.u32 2147483647, %v973
    %vm1075 = vcmp.eq.f32.partialorder %v1074, 8.507059e+37
    %v1076 = vand.u32 %v973, 2147483648
    %v1077 = vor.u32 1.1754944e-38, %v1076
    %v1078 = vsel %vm1075, %v1077, %v1073
    %v1079 = vmul.f32 1.0, %v1078
    %v1080 = vrcp.pop %v974
    %v1081 = vmul.f32 %v974, %v1080
    %v1082 = vsub.f32 1.0, %v1081
    %v1083 = vmul.f32 %v1080, %v1082
    %v1084 = vadd.f32 %v1080, %v1083
    %vm1085 = vweird.f32 %v974
    %vm1086 = vweird.f32 %v1080
    %vm1087 = vmor %vm1085, %vm1086
    %v1088 = vsel %vm1087, %v1080, %v1084
    %v1089 = vand.u32 2147483647, %v974
    %vm1090 = vcmp.eq.f32.partialorder %v1089, 8.507059e+37
    %v1091 = vand.u32 %v974, 2147483648
    %v1092 = vor.u32 1.1754944e-38, %v1091
    %v1093 = vsel %vm1090, %v1092, %v1088
    %v1094 = vmul.f32 1.0, %v1093
    %v1095 = vtanh.pop %v935
    %v1096 = vtanh.pop %v936
    %v1097 = vtanh.pop %v937
    %v1098 = vtanh.pop %v938
    %v1099 = vtanh.pop %v939
    %v1100 = vtanh.pop %v940
    %v1101 = vtanh.pop %v941
    %v1102 = vtanh.pop %v942
    %v1111 = vrot.slane %v817, 7
    %v1112 = vrot.slane %v818, 7
    %v1113 = vrot.slane %v819, 7
    %v1114 = vrot.slane %v820, 7
    %v1115 = vrot.slane %v821, 7
    %v1116 = vrot.slane %v822, 7
    %v1117 = vrot.slane %v823, 7
    %v1118 = vrot.slane %v824, 7
    %v1127 = vmul.f32 %v989, %v1111
    %v1128 = vmul.f32 %v1004, %v1112
    %v1129 = vmul.f32 %v1019, %v1113
    %v1130 = vmul.f32 %v1034, %v1114
    %v1131 = vmul.f32 %v1049, %v1115
    %v1132 = vmul.f32 %v1064, %v1116
    %v1133 = vmul.f32 %v1079, %v1117
    %v1134 = vmul.f32 %v1094, %v1118
    %1143 = vrot.lane.b32.xlu0 %v1095, 64
    %v1144 = vpop.permute.xlu0 %1143
    %1145 = vrot.lane.b32.xlu0 %v1096, 64
    %v1146 = vpop.permute.xlu0 %1145
    %1147 = vrot.lane.b32.xlu0 %v1097, 64
    %v1148 = vpop.permute.xlu0 %1147
    %1149 = vrot.lane.b32.xlu0 %v1098, 64
    %v1150 = vpop.permute.xlu0 %1149
    %1151 = vrot.lane.b32.xlu0 %v1099, 64
    %v1152 = vpop.permute.xlu0 %1151
    %1153 = vrot.lane.b32.xlu0 %v1100, 64
    %v1154 = vpop.permute.xlu0 %1153
    %1155 = vrot.lane.b32.xlu0 %v1101, 64
    %v1156 = vpop.permute.xlu0 %1155
    %1157 = vrot.lane.b32.xlu0 %v1102, 64
    %v1158 = vpop.permute.xlu0 %1157
    %v1167 = vmul.f32 %v989, %v1144
    %v1168 = vmul.f32 %v1004, %v1146
    %v1169 = vmul.f32 %v1019, %v1148
    %v1170 = vmul.f32 %v1034, %v1150
    %v1171 = vmul.f32 %v1049, %v1152
    %v1172 = vmul.f32 %v1064, %v1154
    %v1173 = vmul.f32 %v1079, %v1156
    %v1174 = vmul.f32 %v1094, %v1158
    %1183 = vrot.lane.b32.xlu0 %v1167, 32
    %v1184 = vpop.permute.xlu0 %1183
    %1185 = vrot.lane.b32.xlu0 %v1168, 32
    %v1186 = vpop.permute.xlu0 %1185
    %1187 = vrot.lane.b32.xlu0 %v1169, 32
    %v1188 = vpop.permute.xlu0 %1187
    %1189 = vrot.lane.b32.xlu0 %v1170, 32
    %v1190 = vpop.permute.xlu0 %1189
    %1191 = vrot.lane.b32.xlu0 %v1171, 32
    %v1192 = vpop.permute.xlu0 %1191
    %1193 = vrot.lane.b32.xlu0 %v1172, 32
    %v1194 = vpop.permute.xlu0 %1193
    %1195 = vrot.lane.b32.xlu0 %v1173, 32
    %v1196 = vpop.permute.xlu0 %1195
    %1197 = vrot.lane.b32.xlu0 %v1174, 32
    %v1198 = vpop.permute.xlu0 %1197
    %v1207 = vadd.f32 %v1127, %v1184
    %v1208 = vadd.f32 %v1128, %v1186
    %v1209 = vadd.f32 %v1129, %v1188
    %v1210 = vadd.f32 %v1130, %v1190
    %v1211 = vadd.f32 %v1131, %v1192
    %v1212 = vadd.f32 %v1132, %v1194
    %v1213 = vadd.f32 %v1133, %v1196
    %v1214 = vadd.f32 %v1134, %v1198
    %v1215 = vtanh.pop %v1207
    %v1216 = vtanh.pop %v1208
    %v1217 = vtanh.pop %v1209
    %v1218 = vtanh.pop %v1210
    %v1219 = vtanh.pop %v1211
    %v1220 = vtanh.pop %v1212
    %v1221 = vtanh.pop %v1213
    %v1222 = vtanh.pop %v1214
    %1231 = vrot.lane.b32.xlu0 %v1215, 64
    %v1232 = vpop.permute.xlu0 %1231
    %1233 = vrot.lane.b32.xlu0 %v1216, 64
    %v1234 = vpop.permute.xlu0 %1233
    %1235 = vrot.lane.b32.xlu0 %v1217, 64
    %v1236 = vpop.permute.xlu0 %1235
    %1237 = vrot.lane.b32.xlu0 %v1218, 64
    %v1238 = vpop.permute.xlu0 %1237
    %1239 = vrot.lane.b32.xlu0 %v1219, 64
    %v1240 = vpop.permute.xlu0 %1239
    %1241 = vrot.lane.b32.xlu0 %v1220, 64
    %v1242 = vpop.permute.xlu0 %1241
    %1243 = vrot.lane.b32.xlu0 %v1221, 64
    %v1244 = vpop.permute.xlu0 %1243
    %1245 = vrot.lane.b32.xlu0 %v1222, 64
    %v1246 = vpop.permute.xlu0 %1245
    %v1255 = vmul.f32 %v989, %v1232
    %v1256 = vmul.f32 %v1004, %v1234
    %v1257 = vmul.f32 %v1019, %v1236
    %v1258 = vmul.f32 %v1034, %v1238
    %v1259 = vmul.f32 %v1049, %v1240
    %v1260 = vmul.f32 %v1064, %v1242
    %v1261 = vmul.f32 %v1079, %v1244
    %v1262 = vmul.f32 %v1094, %v1246
    %v1271 = vrot.slane %v1255, 2
    %v1272 = vrot.slane %v1256, 1
    %v1273 = vsel %vm485, %v1272, %v1271
    %v1274 = vsel %vm488, %v1257, %v1273
    %v1275 = vrot.slane %v1258, 7
    %v1276 = vsel %vm491, %v1275, %v1274
    %v1277 = vrot.slane %v1259, 6
    %v1278 = vsel %vm494, %v1277, %v1276
    %v1279 = vrot.slane %v1260, 5
    %v1280 = vsel %vm497, %v1279, %v1278
    %v1281 = vrot.slane %v1261, 4
    %v1282 = vsel %vm500, %v1281, %v1280
    %v1283 = vrot.slane %v1262, 3
    %v1284 = vsel %vm503, %v1283, %v1282
    %1285 = vrot.lane.b32.xlu0 %v1284, 32
    %v1286 = vpop.permute.xlu0 %1285
    %v1287 = vsel %vm132, %v1286, 0
    %1289 = vmatpush.msra.mxu0 0.0
    %1290 = vmatpush.msra.mxu0 0.0
    %1291 = vmatpush.msra.mxu0 0.0
    %1292 = vmatpush.msra.mxu0 0.0
    %1293 = vmatpush.msra.mxu0 0.0
    %1294 = vmatpush.msra.mxu0 0.0
    %1295 = vmatpush.msra.mxu0 0.0
    %1296 = vmatpush.msra.mxu0 0.0
    %1297 = vmatpush.msra.mxu0 0.0
    %1298 = vmatpush.msra.mxu0 0.0
    %1299 = vmatpush.msra.mxu0 0.0
    %1300 = vmatpush.msra.mxu0 0.0
    %1301 = vmatpush.msra.mxu0 %v53
    %1302 = vmatpush.msra.mxu0 %v52
    %1303 = vmatpush.msra.mxu0 %v51
    %1304 = vmatpush.msra.mxu0 %v50
    %1305 = vmatmul.f32.gmra.mxu0 %v1287
    %v1306 = vpop.f32.mrf.mxu0
    %v1307 = vadd.f32 0.0, %v1306
    %1308 = vdwg.mxu0
    %v1310 = vrot.slane %v1307, 5
    %v1311 = vrot.slane %v1307, 6
    %v1312 = vrot.slane %v1307, 7
    %v1313 = vrot.slane %v1307, 1
    %v1314 = vrot.slane %v1307, 2
    %v1315 = vrot.slane %v1307, 3
    %v1316 = vrot.slane %v1307, 4
    %v1325 = vadd.f32 %v109, %v1310
    %v1326 = vadd.f32 %v112, %v1311
    %v1327 = vadd.f32 %v115, %v1312
    %v1328 = vadd.f32 %v118, %v1307
    %v1329 = vadd.f32 %v121, %v1313
    %v1330 = vadd.f32 %v124, %v1314
    %v1331 = vadd.f32 %v127, %v1315
    %v1332 = vadd.f32 %v130, %v1316
    %v1333 = vxor.u32 %v1325, 2147483648
    %v1334 = vxor.u32 %v1326, 2147483648
    %v1335 = vxor.u32 %v1327, 2147483648
    %v1336 = vxor.u32 %v1328, 2147483648
    %v1337 = vxor.u32 %v1329, 2147483648
    %v1338 = vxor.u32 %v1330, 2147483648
    %v1339 = vxor.u32 %v1331, 2147483648
    %v1340 = vxor.u32 %v1332, 2147483648
    %v1341 = vmul.f32 %v1333, 1.442695
    %v1342 = vpow.pop %v1341
    %v1343 = vmul.f32 %v1334, 1.442695
    %v1344 = vpow.pop %v1343
    %v1345 = vmul.f32 %v1335, 1.442695
    %v1346 = vpow.pop %v1345
    %v1347 = vmul.f32 %v1336, 1.442695
    %v1348 = vpow.pop %v1347
    %v1349 = vmul.f32 %v1337, 1.442695
    %v1350 = vpow.pop %v1349
    %v1351 = vmul.f32 %v1338, 1.442695
    %v1352 = vpow.pop %v1351
    %v1353 = vmul.f32 %v1339, 1.442695
    %v1354 = vpow.pop %v1353
    %v1355 = vmul.f32 %v1340, 1.442695
    %v1356 = vpow.pop %v1355
    %v1357 = vadd.f32 %v1342, 1.0
    %v1358 = vadd.f32 %v1344, 1.0
    %v1359 = vadd.f32 %v1346, 1.0
    %v1360 = vadd.f32 %v1348, 1.0
    %v1361 = vadd.f32 %v1350, 1.0
    %v1362 = vadd.f32 %v1352, 1.0
    %v1363 = vadd.f32 %v1354, 1.0
    %v1364 = vadd.f32 %v1356, 1.0
    %v1365 = vrcp.pop %v1357
    %v1366 = vmul.f32 %v1357, %v1365
    %v1367 = vsub.f32 1.0, %v1366
    %v1368 = vmul.f32 %v1365, %v1367
    %v1369 = vadd.f32 %v1365, %v1368
    %vm1370 = vweird.f32 %v1357
    %vm1371 = vweird.f32 %v1365
    %vm1372 = vmor %vm1370, %vm1371
    %v1373 = vsel %vm1372, %v1365, %v1369
    %v1374 = vand.u32 2147483647, %v1357
    %vm1375 = vcmp.eq.f32.partialorder %v1374, 8.507059e+37
    %v1376 = vand.u32 %v1357, 2147483648
    %v1377 = vor.u32 1.1754944e-38, %v1376
    %v1378 = vsel %vm1375, %v1377, %v1373
    %v1379 = vmul.f32 1.0, %v1378
    %v1380 = vrcp.pop %v1358
    %v1381 = vmul.f32 %v1358, %v1380
    %v1382 = vsub.f32 1.0, %v1381
    %v1383 = vmul.f32 %v1380, %v1382
    %v1384 = vadd.f32 %v1380, %v1383
    %vm1385 = vweird.f32 %v1358
    %vm1386 = vweird.f32 %v1380
    %vm1387 = vmor %vm1385, %vm1386
    %v1388 = vsel %vm1387, %v1380, %v1384
    %v1389 = vand.u32 2147483647, %v1358
    %vm1390 = vcmp.eq.f32.partialorder %v1389, 8.507059e+37
    %v1391 = vand.u32 %v1358, 2147483648
    %v1392 = vor.u32 1.1754944e-38, %v1391
    %v1393 = vsel %vm1390, %v1392, %v1388
    %v1394 = vmul.f32 1.0, %v1393
    %v1395 = vrcp.pop %v1359
    %v1396 = vmul.f32 %v1359, %v1395
    %v1397 = vsub.f32 1.0, %v1396
    %v1398 = vmul.f32 %v1395, %v1397
    %v1399 = vadd.f32 %v1395, %v1398
    %vm1400 = vweird.f32 %v1359
    %vm1401 = vweird.f32 %v1395
    %vm1402 = vmor %vm1400, %vm1401
    %v1403 = vsel %vm1402, %v1395, %v1399
    %v1404 = vand.u32 2147483647, %v1359
    %vm1405 = vcmp.eq.f32.partialorder %v1404, 8.507059e+37
    %v1406 = vand.u32 %v1359, 2147483648
    %v1407 = vor.u32 1.1754944e-38, %v1406
    %v1408 = vsel %vm1405, %v1407, %v1403
    %v1409 = vmul.f32 1.0, %v1408
    %v1410 = vrcp.pop %v1360
    %v1411 = vmul.f32 %v1360, %v1410
    %v1412 = vsub.f32 1.0, %v1411
    %v1413 = vmul.f32 %v1410, %v1412
    %v1414 = vadd.f32 %v1410, %v1413
    %vm1415 = vweird.f32 %v1360
    %vm1416 = vweird.f32 %v1410
    %vm1417 = vmor %vm1415, %vm1416
    %v1418 = vsel %vm1417, %v1410, %v1414
    %v1419 = vand.u32 2147483647, %v1360
    %vm1420 = vcmp.eq.f32.partialorder %v1419, 8.507059e+37
    %v1421 = vand.u32 %v1360, 2147483648
    %v1422 = vor.u32 1.1754944e-38, %v1421
    %v1423 = vsel %vm1420, %v1422, %v1418
    %v1424 = vmul.f32 1.0, %v1423
    %v1425 = vrcp.pop %v1361
    %v1426 = vmul.f32 %v1361, %v1425
    %v1427 = vsub.f32 1.0, %v1426
    %v1428 = vmul.f32 %v1425, %v1427
    %v1429 = vadd.f32 %v1425, %v1428
    %vm1430 = vweird.f32 %v1361
    %vm1431 = vweird.f32 %v1425
    %vm1432 = vmor %vm1430, %vm1431
    %v1433 = vsel %vm1432, %v1425, %v1429
    %v1434 = vand.u32 2147483647, %v1361
    %vm1435 = vcmp.eq.f32.partialorder %v1434, 8.507059e+37
    %v1436 = vand.u32 %v1361, 2147483648
    %v1437 = vor.u32 1.1754944e-38, %v1436
    %v1438 = vsel %vm1435, %v1437, %v1433
    %v1439 = vmul.f32 1.0, %v1438
    %v1440 = vrcp.pop %v1362
    %v1441 = vmul.f32 %v1362, %v1440
    %v1442 = vsub.f32 1.0, %v1441
    %v1443 = vmul.f32 %v1440, %v1442
    %v1444 = vadd.f32 %v1440, %v1443
    %vm1445 = vweird.f32 %v1362
    %vm1446 = vweird.f32 %v1440
    %vm1447 = vmor %vm1445, %vm1446
    %v1448 = vsel %vm1447, %v1440, %v1444
    %v1449 = vand.u32 2147483647, %v1362
    %vm1450 = vcmp.eq.f32.partialorder %v1449, 8.507059e+37
    %v1451 = vand.u32 %v1362, 2147483648
    %v1452 = vor.u32 1.1754944e-38, %v1451
    %v1453 = vsel %vm1450, %v1452, %v1448
    %v1454 = vmul.f32 1.0, %v1453
    %v1455 = vrcp.pop %v1363
    %v1456 = vmul.f32 %v1363, %v1455
    %v1457 = vsub.f32 1.0, %v1456
    %v1458 = vmul.f32 %v1455, %v1457
    %v1459 = vadd.f32 %v1455, %v1458
    %vm1460 = vweird.f32 %v1363
    %vm1461 = vweird.f32 %v1455
    %vm1462 = vmor %vm1460, %vm1461
    %v1463 = vsel %vm1462, %v1455, %v1459
    %v1464 = vand.u32 2147483647, %v1363
    %vm1465 = vcmp.eq.f32.partialorder %v1464, 8.507059e+37
    %v1466 = vand.u32 %v1363, 2147483648
    %v1467 = vor.u32 1.1754944e-38, %v1466
    %v1468 = vsel %vm1465, %v1467, %v1463
    %v1469 = vmul.f32 1.0, %v1468
    %v1470 = vrcp.pop %v1364
    %v1471 = vmul.f32 %v1364, %v1470
    %v1472 = vsub.f32 1.0, %v1471
    %v1473 = vmul.f32 %v1470, %v1472
    %v1474 = vadd.f32 %v1470, %v1473
    %vm1475 = vweird.f32 %v1364
    %vm1476 = vweird.f32 %v1470
    %vm1477 = vmor %vm1475, %vm1476
    %v1478 = vsel %vm1477, %v1470, %v1474
    %v1479 = vand.u32 2147483647, %v1364
    %vm1480 = vcmp.eq.f32.partialorder %v1479, 8.507059e+37
    %v1481 = vand.u32 %v1364, 2147483648
    %v1482 = vor.u32 1.1754944e-38, %v1481
    %v1483 = vsel %vm1480, %v1482, %v1478
    %v1484 = vmul.f32 1.0, %v1483
    %v1485 = vtanh.pop %v1325
    %v1486 = vtanh.pop %v1326
    %v1487 = vtanh.pop %v1327
    %v1488 = vtanh.pop %v1328
    %v1489 = vtanh.pop %v1329
    %v1490 = vtanh.pop %v1330
    %v1491 = vtanh.pop %v1331
    %v1492 = vtanh.pop %v1332
    %v1501 = vrot.slane %v1207, 7
    %v1502 = vrot.slane %v1208, 7
    %v1503 = vrot.slane %v1209, 7
    %v1504 = vrot.slane %v1210, 7
    %v1505 = vrot.slane %v1211, 7
    %v1506 = vrot.slane %v1212, 7
    %v1507 = vrot.slane %v1213, 7
    %v1508 = vrot.slane %v1214, 7
    %v1517 = vmul.f32 %v1379, %v1501
    %v1518 = vmul.f32 %v1394, %v1502
    %v1519 = vmul.f32 %v1409, %v1503
    %v1520 = vmul.f32 %v1424, %v1504
    %v1521 = vmul.f32 %v1439, %v1505
    %v1522 = vmul.f32 %v1454, %v1506
    %v1523 = vmul.f32 %v1469, %v1507
    %v1524 = vmul.f32 %v1484, %v1508
    %1533 = vrot.lane.b32.xlu0 %v1485, 64
    %v1534 = vpop.permute.xlu0 %1533
    %1535 = vrot.lane.b32.xlu0 %v1486, 64
    %v1536 = vpop.permute.xlu0 %1535
    %1537 = vrot.lane.b32.xlu0 %v1487, 64
    %v1538 = vpop.permute.xlu0 %1537
    %1539 = vrot.lane.b32.xlu0 %v1488, 64
    %v1540 = vpop.permute.xlu0 %1539
    %1541 = vrot.lane.b32.xlu0 %v1489, 64
    %v1542 = vpop.permute.xlu0 %1541
    %1543 = vrot.lane.b32.xlu0 %v1490, 64
    %v1544 = vpop.permute.xlu0 %1543
    %1545 = vrot.lane.b32.xlu0 %v1491, 64
    %v1546 = vpop.permute.xlu0 %1545
    %1547 = vrot.lane.b32.xlu0 %v1492, 64
    %v1548 = vpop.permute.xlu0 %1547
    %v1557 = vmul.f32 %v1379, %v1534
    %v1558 = vmul.f32 %v1394, %v1536
    %v1559 = vmul.f32 %v1409, %v1538
    %v1560 = vmul.f32 %v1424, %v1540
    %v1561 = vmul.f32 %v1439, %v1542
    %v1562 = vmul.f32 %v1454, %v1544
    %v1563 = vmul.f32 %v1469, %v1546
    %v1564 = vmul.f32 %v1484, %v1548
    %1573 = vrot.lane.b32.xlu0 %v1557, 32
    %v1574 = vpop.permute.xlu0 %1573
    %1575 = vrot.lane.b32.xlu0 %v1558, 32
    %v1576 = vpop.permute.xlu0 %1575
    %1577 = vrot.lane.b32.xlu0 %v1559, 32
    %v1578 = vpop.permute.xlu0 %1577
    %1579 = vrot.lane.b32.xlu0 %v1560, 32
    %v1580 = vpop.permute.xlu0 %1579
    %1581 = vrot.lane.b32.xlu0 %v1561, 32
    %v1582 = vpop.permute.xlu0 %1581
    %1583 = vrot.lane.b32.xlu0 %v1562, 32
    %v1584 = vpop.permute.xlu0 %1583
    %1585 = vrot.lane.b32.xlu0 %v1563, 32
    %v1586 = vpop.permute.xlu0 %1585
    %1587 = vrot.lane.b32.xlu0 %v1564, 32
    %v1588 = vpop.permute.xlu0 %1587
    %v1597 = vadd.f32 %v1517, %v1574
    %v1598 = vadd.f32 %v1518, %v1576
    %v1599 = vadd.f32 %v1519, %v1578
    %v1600 = vadd.f32 %v1520, %v1580
    %v1601 = vadd.f32 %v1521, %v1582
    %v1602 = vadd.f32 %v1522, %v1584
    %v1603 = vadd.f32 %v1523, %v1586
    %v1604 = vadd.f32 %v1524, %v1588
    %v1605 = vtanh.pop %v1597
    %v1606 = vtanh.pop %v1598
    %v1607 = vtanh.pop %v1599
    %v1608 = vtanh.pop %v1600
    %v1609 = vtanh.pop %v1601
    %v1610 = vtanh.pop %v1602
    %v1611 = vtanh.pop %v1603
    %v1612 = vtanh.pop %v1604
    %1621 = vrot.lane.b32.xlu0 %v1605, 64
    %v1622 = vpop.permute.xlu0 %1621
    %1623 = vrot.lane.b32.xlu0 %v1606, 64
    %v1624 = vpop.permute.xlu0 %1623
    %1625 = vrot.lane.b32.xlu0 %v1607, 64
    %v1626 = vpop.permute.xlu0 %1625
    %1627 = vrot.lane.b32.xlu0 %v1608, 64
    %v1628 = vpop.permute.xlu0 %1627
    %1629 = vrot.lane.b32.xlu0 %v1609, 64
    %v1630 = vpop.permute.xlu0 %1629
    %1631 = vrot.lane.b32.xlu0 %v1610, 64
    %v1632 = vpop.permute.xlu0 %1631
    %1633 = vrot.lane.b32.xlu0 %v1611, 64
    %v1634 = vpop.permute.xlu0 %1633
    %1635 = vrot.lane.b32.xlu0 %v1612, 64
    %v1636 = vpop.permute.xlu0 %1635
    %v1645 = vmul.f32 %v1379, %v1622
    %v1646 = vmul.f32 %v1394, %v1624
    %v1647 = vmul.f32 %v1409, %v1626
    %v1648 = vmul.f32 %v1424, %v1628
    %v1649 = vmul.f32 %v1439, %v1630
    %v1650 = vmul.f32 %v1454, %v1632
    %v1651 = vmul.f32 %v1469, %v1634
    %v1652 = vmul.f32 %v1484, %v1636
    %v1661 = vrot.slane %v1645, 3
    %v1662 = vrot.slane %v1646, 2
    %v1663 = vsel %vm485, %v1662, %v1661
    %v1664 = vrot.slane %v1647, 1
    %v1665 = vsel %vm488, %v1664, %v1663
    %v1666 = vsel %vm491, %v1648, %v1665
    %v1667 = vrot.slane %v1649, 7
    %v1668 = vsel %vm494, %v1667, %v1666
    %v1669 = vrot.slane %v1650, 6
    %v1670 = vsel %vm497, %v1669, %v1668
    %v1671 = vrot.slane %v1651, 5
    %v1672 = vsel %vm500, %v1671, %v1670
    %v1673 = vrot.slane %v1652, 4
    %v1674 = vsel %vm503, %v1673, %v1672
    %1675 = vrot.lane.b32.xlu0 %v1674, 32
    %v1676 = vpop.permute.xlu0 %1675
    %v1677 = vsel %vm132, %v1676, 0
    %1679 = vmatpush.msra.mxu0 0.0
    %1680 = vmatpush.msra.mxu0 0.0
    %1681 = vmatpush.msra.mxu0 0.0
    %1682 = vmatpush.msra.mxu0 0.0
    %1683 = vmatpush.msra.mxu0 0.0
    %1684 = vmatpush.msra.mxu0 0.0
    %1685 = vmatpush.msra.mxu0 0.0
    %1686 = vmatpush.msra.mxu0 0.0
    %1687 = vmatpush.msra.mxu0 0.0
    %1688 = vmatpush.msra.mxu0 0.0
    %1689 = vmatpush.msra.mxu0 0.0
    %1690 = vmatpush.msra.mxu0 0.0
    %1691 = vmatpush.msra.mxu0 %v53
    %1692 = vmatpush.msra.mxu0 %v52
    %1693 = vmatpush.msra.mxu0 %v51
    %1694 = vmatpush.msra.mxu0 %v50
    %1695 = vmatmul.f32.gmra.mxu0 %v1677
    %v1696 = vpop.f32.mrf.mxu0
    %v1697 = vadd.f32 0.0, %v1696
    %1698 = vdwg.mxu0
    %v1700 = vrot.slane %v1697, 4
    %v1701 = vrot.slane %v1697, 5
    %v1702 = vrot.slane %v1697, 6
    %v1703 = vrot.slane %v1697, 7
    %v1704 = vrot.slane %v1697, 1
    %v1705 = vrot.slane %v1697, 2
    %v1706 = vrot.slane %v1697, 3
    %v1715 = vadd.f32 %v109, %v1700
    %v1716 = vadd.f32 %v112, %v1701
    %v1717 = vadd.f32 %v115, %v1702
    %v1718 = vadd.f32 %v118, %v1703
    %v1719 = vadd.f32 %v121, %v1697
    %v1720 = vadd.f32 %v124, %v1704
    %v1721 = vadd.f32 %v127, %v1705
    %v1722 = vadd.f32 %v130, %v1706
    %v1723 = vxor.u32 %v1715, 2147483648
    %v1724 = vxor.u32 %v1716, 2147483648
    %v1725 = vxor.u32 %v1717, 2147483648
    %v1726 = vxor.u32 %v1718, 2147483648
    %v1727 = vxor.u32 %v1719, 2147483648
    %v1728 = vxor.u32 %v1720, 2147483648
    %v1729 = vxor.u32 %v1721, 2147483648
    %v1730 = vxor.u32 %v1722, 2147483648
    %v1731 = vmul.f32 %v1723, 1.442695
    %v1732 = vpow.pop %v1731
    %v1733 = vmul.f32 %v1724, 1.442695
    %v1734 = vpow.pop %v1733
    %v1735 = vmul.f32 %v1725, 1.442695
    %v1736 = vpow.pop %v1735
    %v1737 = vmul.f32 %v1726, 1.442695
    %v1738 = vpow.pop %v1737
    %v1739 = vmul.f32 %v1727, 1.442695
    %v1740 = vpow.pop %v1739
    %v1741 = vmul.f32 %v1728, 1.442695
    %v1742 = vpow.pop %v1741
    %v1743 = vmul.f32 %v1729, 1.442695
    %v1744 = vpow.pop %v1743
    %v1745 = vmul.f32 %v1730, 1.442695
    %v1746 = vpow.pop %v1745
    %v1747 = vadd.f32 %v1732, 1.0
    %v1748 = vadd.f32 %v1734, 1.0
    %v1749 = vadd.f32 %v1736, 1.0
    %v1750 = vadd.f32 %v1738, 1.0
    %v1751 = vadd.f32 %v1740, 1.0
    %v1752 = vadd.f32 %v1742, 1.0
    %v1753 = vadd.f32 %v1744, 1.0
    %v1754 = vadd.f32 %v1746, 1.0
    %v1755 = vrcp.pop %v1747
    %v1756 = vmul.f32 %v1747, %v1755
    %v1757 = vsub.f32 1.0, %v1756
    %v1758 = vmul.f32 %v1755, %v1757
    %v1759 = vadd.f32 %v1755, %v1758
    %vm1760 = vweird.f32 %v1747
    %vm1761 = vweird.f32 %v1755
    %vm1762 = vmor %vm1760, %vm1761
    %v1763 = vsel %vm1762, %v1755, %v1759
    %v1764 = vand.u32 2147483647, %v1747
    %vm1765 = vcmp.eq.f32.partialorder %v1764, 8.507059e+37
    %v1766 = vand.u32 %v1747, 2147483648
    %v1767 = vor.u32 1.1754944e-38, %v1766
    %v1768 = vsel %vm1765, %v1767, %v1763
    %v1769 = vmul.f32 1.0, %v1768
    %v1770 = vrcp.pop %v1748
    %v1771 = vmul.f32 %v1748, %v1770
    %v1772 = vsub.f32 1.0, %v1771
    %v1773 = vmul.f32 %v1770, %v1772
    %v1774 = vadd.f32 %v1770, %v1773
    %vm1775 = vweird.f32 %v1748
    %vm1776 = vweird.f32 %v1770
    %vm1777 = vmor %vm1775, %vm1776
    %v1778 = vsel %vm1777, %v1770, %v1774
    %v1779 = vand.u32 2147483647, %v1748
    %vm1780 = vcmp.eq.f32.partialorder %v1779, 8.507059e+37
    %v1781 = vand.u32 %v1748, 2147483648
    %v1782 = vor.u32 1.1754944e-38, %v1781
    %v1783 = vsel %vm1780, %v1782, %v1778
    %v1784 = vmul.f32 1.0, %v1783
    %v1785 = vrcp.pop %v1749
    %v1786 = vmul.f32 %v1749, %v1785
    %v1787 = vsub.f32 1.0, %v1786
    %v1788 = vmul.f32 %v1785, %v1787
    %v1789 = vadd.f32 %v1785, %v1788
    %vm1790 = vweird.f32 %v1749
    %vm1791 = vweird.f32 %v1785
    %vm1792 = vmor %vm1790, %vm1791
    %v1793 = vsel %vm1792, %v1785, %v1789
    %v1794 = vand.u32 2147483647, %v1749
    %vm1795 = vcmp.eq.f32.partialorder %v1794, 8.507059e+37
    %v1796 = vand.u32 %v1749, 2147483648
    %v1797 = vor.u32 1.1754944e-38, %v1796
    %v1798 = vsel %vm1795, %v1797, %v1793
    %v1799 = vmul.f32 1.0, %v1798
    %v1800 = vrcp.pop %v1750
    %v1801 = vmul.f32 %v1750, %v1800
    %v1802 = vsub.f32 1.0, %v1801
    %v1803 = vmul.f32 %v1800, %v1802
    %v1804 = vadd.f32 %v1800, %v1803
    %vm1805 = vweird.f32 %v1750
    %vm1806 = vweird.f32 %v1800
    %vm1807 = vmor %vm1805, %vm1806
    %v1808 = vsel %vm1807, %v1800, %v1804
    %v1809 = vand.u32 2147483647, %v1750
    %vm1810 = vcmp.eq.f32.partialorder %v1809, 8.507059e+37
    %v1811 = vand.u32 %v1750, 2147483648
    %v1812 = vor.u32 1.1754944e-38, %v1811
    %v1813 = vsel %vm1810, %v1812, %v1808
    %v1814 = vmul.f32 1.0, %v1813
    %v1815 = vrcp.pop %v1751
    %v1816 = vmul.f32 %v1751, %v1815
    %v1817 = vsub.f32 1.0, %v1816
    %v1818 = vmul.f32 %v1815, %v1817
    %v1819 = vadd.f32 %v1815, %v1818
    %vm1820 = vweird.f32 %v1751
    %vm1821 = vweird.f32 %v1815
    %vm1822 = vmor %vm1820, %vm1821
    %v1823 = vsel %vm1822, %v1815, %v1819
    %v1824 = vand.u32 2147483647, %v1751
    %vm1825 = vcmp.eq.f32.partialorder %v1824, 8.507059e+37
    %v1826 = vand.u32 %v1751, 2147483648
    %v1827 = vor.u32 1.1754944e-38, %v1826
    %v1828 = vsel %vm1825, %v1827, %v1823
    %v1829 = vmul.f32 1.0, %v1828
    %v1830 = vrcp.pop %v1752
    %v1831 = vmul.f32 %v1752, %v1830
    %v1832 = vsub.f32 1.0, %v1831
    %v1833 = vmul.f32 %v1830, %v1832
    %v1834 = vadd.f32 %v1830, %v1833
    %vm1835 = vweird.f32 %v1752
    %vm1836 = vweird.f32 %v1830
    %vm1837 = vmor %vm1835, %vm1836
    %v1838 = vsel %vm1837, %v1830, %v1834
    %v1839 = vand.u32 2147483647, %v1752
    %vm1840 = vcmp.eq.f32.partialorder %v1839, 8.507059e+37
    %v1841 = vand.u32 %v1752, 2147483648
    %v1842 = vor.u32 1.1754944e-38, %v1841
    %v1843 = vsel %vm1840, %v1842, %v1838
    %v1844 = vmul.f32 1.0, %v1843
    %v1845 = vrcp.pop %v1753
    %v1846 = vmul.f32 %v1753, %v1845
    %v1847 = vsub.f32 1.0, %v1846
    %v1848 = vmul.f32 %v1845, %v1847
    %v1849 = vadd.f32 %v1845, %v1848
    %vm1850 = vweird.f32 %v1753
    %vm1851 = vweird.f32 %v1845
    %vm1852 = vmor %vm1850, %vm1851
    %v1853 = vsel %vm1852, %v1845, %v1849
    %v1854 = vand.u32 2147483647, %v1753
    %vm1855 = vcmp.eq.f32.partialorder %v1854, 8.507059e+37
    %v1856 = vand.u32 %v1753, 2147483648
    %v1857 = vor.u32 1.1754944e-38, %v1856
    %v1858 = vsel %vm1855, %v1857, %v1853
    %v1859 = vmul.f32 1.0, %v1858
    %v1860 = vrcp.pop %v1754
    %v1861 = vmul.f32 %v1754, %v1860
    %v1862 = vsub.f32 1.0, %v1861
    %v1863 = vmul.f32 %v1860, %v1862
    %v1864 = vadd.f32 %v1860, %v1863
    %vm1865 = vweird.f32 %v1754
    %vm1866 = vweird.f32 %v1860
    %vm1867 = vmor %vm1865, %vm1866
    %v1868 = vsel %vm1867, %v1860, %v1864
    %v1869 = vand.u32 2147483647, %v1754
    %vm1870 = vcmp.eq.f32.partialorder %v1869, 8.507059e+37
    %v1871 = vand.u32 %v1754, 2147483648
    %v1872 = vor.u32 1.1754944e-38, %v1871
    %v1873 = vsel %vm1870, %v1872, %v1868
    %v1874 = vmul.f32 1.0, %v1873
    %v1875 = vtanh.pop %v1715
    %v1876 = vtanh.pop %v1716
    %v1877 = vtanh.pop %v1717
    %v1878 = vtanh.pop %v1718
    %v1879 = vtanh.pop %v1719
    %v1880 = vtanh.pop %v1720
    %v1881 = vtanh.pop %v1721
    %v1882 = vtanh.pop %v1722
    %v1891 = vrot.slane %v1597, 7
    %v1892 = vrot.slane %v1598, 7
    %v1893 = vrot.slane %v1599, 7
    %v1894 = vrot.slane %v1600, 7
    %v1895 = vrot.slane %v1601, 7
    %v1896 = vrot.slane %v1602, 7
    %v1897 = vrot.slane %v1603, 7
    %v1898 = vrot.slane %v1604, 7
    %v1907 = vmul.f32 %v1769, %v1891
    %v1908 = vmul.f32 %v1784, %v1892
    %v1909 = vmul.f32 %v1799, %v1893
    %v1910 = vmul.f32 %v1814, %v1894
    %v1911 = vmul.f32 %v1829, %v1895
    %v1912 = vmul.f32 %v1844, %v1896
    %v1913 = vmul.f32 %v1859, %v1897
    %v1914 = vmul.f32 %v1874, %v1898
    %1923 = vrot.lane.b32.xlu0 %v1875, 64
    %v1924 = vpop.permute.xlu0 %1923
    %1925 = vrot.lane.b32.xlu0 %v1876, 64
    %v1926 = vpop.permute.xlu0 %1925
    %1927 = vrot.lane.b32.xlu0 %v1877, 64
    %v1928 = vpop.permute.xlu0 %1927
    %1929 = vrot.lane.b32.xlu0 %v1878, 64
    %v1930 = vpop.permute.xlu0 %1929
    %1931 = vrot.lane.b32.xlu0 %v1879, 64
    %v1932 = vpop.permute.xlu0 %1931
    %1933 = vrot.lane.b32.xlu0 %v1880, 64
    %v1934 = vpop.permute.xlu0 %1933
    %1935 = vrot.lane.b32.xlu0 %v1881, 64
    %v1936 = vpop.permute.xlu0 %1935
    %1937 = vrot.lane.b32.xlu0 %v1882, 64
    %v1938 = vpop.permute.xlu0 %1937
    %v1947 = vmul.f32 %v1769, %v1924
    %v1948 = vmul.f32 %v1784, %v1926
    %v1949 = vmul.f32 %v1799, %v1928
    %v1950 = vmul.f32 %v1814, %v1930
    %v1951 = vmul.f32 %v1829, %v1932
    %v1952 = vmul.f32 %v1844, %v1934
    %v1953 = vmul.f32 %v1859, %v1936
    %v1954 = vmul.f32 %v1874, %v1938
    %1963 = vrot.lane.b32.xlu0 %v1947, 32
    %v1964 = vpop.permute.xlu0 %1963
    %1965 = vrot.lane.b32.xlu0 %v1948, 32
    %v1966 = vpop.permute.xlu0 %1965
    %1967 = vrot.lane.b32.xlu0 %v1949, 32
    %v1968 = vpop.permute.xlu0 %1967
    %1969 = vrot.lane.b32.xlu0 %v1950, 32
    %v1970 = vpop.permute.xlu0 %1969
    %1971 = vrot.lane.b32.xlu0 %v1951, 32
    %v1972 = vpop.permute.xlu0 %1971
    %1973 = vrot.lane.b32.xlu0 %v1952, 32
    %v1974 = vpop.permute.xlu0 %1973
    %1975 = vrot.lane.b32.xlu0 %v1953, 32
    %v1976 = vpop.permute.xlu0 %1975
    %1977 = vrot.lane.b32.xlu0 %v1954, 32
    %v1978 = vpop.permute.xlu0 %1977
    %v1987 = vadd.f32 %v1907, %v1964
    %v1988 = vadd.f32 %v1908, %v1966
    %v1989 = vadd.f32 %v1909, %v1968
    %v1990 = vadd.f32 %v1910, %v1970
    %v1991 = vadd.f32 %v1911, %v1972
    %v1992 = vadd.f32 %v1912, %v1974
    %v1993 = vadd.f32 %v1913, %v1976
    %v1994 = vadd.f32 %v1914, %v1978
    %v1995 = vtanh.pop %v1987
    %v1996 = vtanh.pop %v1988
    %v1997 = vtanh.pop %v1989
    %v1998 = vtanh.pop %v1990
    %v1999 = vtanh.pop %v1991
    %v2000 = vtanh.pop %v1992
    %v2001 = vtanh.pop %v1993
    %v2002 = vtanh.pop %v1994
    %2011 = vrot.lane.b32.xlu0 %v1995, 64
    %v2012 = vpop.permute.xlu0 %2011
    %2013 = vrot.lane.b32.xlu0 %v1996, 64
    %v2014 = vpop.permute.xlu0 %2013
    %2015 = vrot.lane.b32.xlu0 %v1997, 64
    %v2016 = vpop.permute.xlu0 %2015
    %2017 = vrot.lane.b32.xlu0 %v1998, 64
    %v2018 = vpop.permute.xlu0 %2017
    %2019 = vrot.lane.b32.xlu0 %v1999, 64
    %v2020 = vpop.permute.xlu0 %2019
    %2021 = vrot.lane.b32.xlu0 %v2000, 64
    %v2022 = vpop.permute.xlu0 %2021
    %2023 = vrot.lane.b32.xlu0 %v2001, 64
    %v2024 = vpop.permute.xlu0 %2023
    %2025 = vrot.lane.b32.xlu0 %v2002, 64
    %v2026 = vpop.permute.xlu0 %2025
    %v2035 = vmul.f32 %v1769, %v2012
    %v2036 = vmul.f32 %v1784, %v2014
    %v2037 = vmul.f32 %v1799, %v2016
    %v2038 = vmul.f32 %v1814, %v2018
    %v2039 = vmul.f32 %v1829, %v2020
    %v2040 = vmul.f32 %v1844, %v2022
    %v2041 = vmul.f32 %v1859, %v2024
    %v2042 = vmul.f32 %v1874, %v2026
    %v2051 = vrot.slane %v2035, 4
    %v2052 = vrot.slane %v2036, 3
    %v2053 = vsel %vm485, %v2052, %v2051
    %v2054 = vrot.slane %v2037, 2
    %v2055 = vsel %vm488, %v2054, %v2053
    %v2056 = vrot.slane %v2038, 1
    %v2057 = vsel %vm491, %v2056, %v2055
    %v2058 = vsel %vm494, %v2039, %v2057
    %v2059 = vrot.slane %v2040, 7
    %v2060 = vsel %vm497, %v2059, %v2058
    %v2061 = vrot.slane %v2041, 6
    %v2062 = vsel %vm500, %v2061, %v2060
    %v2063 = vrot.slane %v2042, 5
    %v2064 = vsel %vm503, %v2063, %v2062
    %2065 = vrot.lane.b32.xlu0 %v2064, 32
    %v2066 = vpop.permute.xlu0 %2065
    %v2067 = vsel %vm132, %v2066, 0
    %2069 = vmatpush.msra.mxu0 0.0
    %2070 = vmatpush.msra.mxu0 0.0
    %2071 = vmatpush.msra.mxu0 0.0
    %2072 = vmatpush.msra.mxu0 0.0
    %2073 = vmatpush.msra.mxu0 0.0
    %2074 = vmatpush.msra.mxu0 0.0
    %2075 = vmatpush.msra.mxu0 0.0
    %2076 = vmatpush.msra.mxu0 0.0
    %2077 = vmatpush.msra.mxu0 0.0
    %2078 = vmatpush.msra.mxu0 0.0
    %2079 = vmatpush.msra.mxu0 0.0
    %2080 = vmatpush.msra.mxu0 0.0
    %2081 = vmatpush.msra.mxu0 %v53
    %2082 = vmatpush.msra.mxu0 %v52
    %2083 = vmatpush.msra.mxu0 %v51
    %2084 = vmatpush.msra.mxu0 %v50
    %2085 = vmatmul.f32.gmra.mxu0 %v2067
    %v2086 = vpop.f32.mrf.mxu0
    %v2087 = vadd.f32 0.0, %v2086
    %2088 = vdwg.mxu0
    %v2090 = vrot.slane %v2087, 3
    %v2091 = vrot.slane %v2087, 4
    %v2092 = vrot.slane %v2087, 5
    %v2093 = vrot.slane %v2087, 6
    %v2094 = vrot.slane %v2087, 7
    %v2095 = vrot.slane %v2087, 1
    %v2096 = vrot.slane %v2087, 2
    %v2105 = vadd.f32 %v109, %v2090
    %v2106 = vadd.f32 %v112, %v2091
    %v2107 = vadd.f32 %v115, %v2092
    %v2108 = vadd.f32 %v118, %v2093
    %v2109 = vadd.f32 %v121, %v2094
    %v2110 = vadd.f32 %v124, %v2087
    %v2111 = vadd.f32 %v127, %v2095
    %v2112 = vadd.f32 %v130, %v2096
    %v2113 = vxor.u32 %v2105, 2147483648
    %v2114 = vxor.u32 %v2106, 2147483648
    %v2115 = vxor.u32 %v2107, 2147483648
    %v2116 = vxor.u32 %v2108, 2147483648
    %v2117 = vxor.u32 %v2109, 2147483648
    %v2118 = vxor.u32 %v2110, 2147483648
    %v2119 = vxor.u32 %v2111, 2147483648
    %v2120 = vxor.u32 %v2112, 2147483648
    %v2121 = vmul.f32 %v2113, 1.442695
    %v2122 = vpow.pop %v2121
    %v2123 = vmul.f32 %v2114, 1.442695
    %v2124 = vpow.pop %v2123
    %v2125 = vmul.f32 %v2115, 1.442695
    %v2126 = vpow.pop %v2125
    %v2127 = vmul.f32 %v2116, 1.442695
    %v2128 = vpow.pop %v2127
    %v2129 = vmul.f32 %v2117, 1.442695
    %v2130 = vpow.pop %v2129
    %v2131 = vmul.f32 %v2118, 1.442695
    %v2132 = vpow.pop %v2131
    %v2133 = vmul.f32 %v2119, 1.442695
    %v2134 = vpow.pop %v2133
    %v2135 = vmul.f32 %v2120, 1.442695
    %v2136 = vpow.pop %v2135
    %v2137 = vadd.f32 %v2122, 1.0
    %v2138 = vadd.f32 %v2124, 1.0
    %v2139 = vadd.f32 %v2126, 1.0
    %v2140 = vadd.f32 %v2128, 1.0
    %v2141 = vadd.f32 %v2130, 1.0
    %v2142 = vadd.f32 %v2132, 1.0
    %v2143 = vadd.f32 %v2134, 1.0
    %v2144 = vadd.f32 %v2136, 1.0
    %v2145 = vrcp.pop %v2137
    %v2146 = vmul.f32 %v2137, %v2145
    %v2147 = vsub.f32 1.0, %v2146
    %v2148 = vmul.f32 %v2145, %v2147
    %v2149 = vadd.f32 %v2145, %v2148
    %vm2150 = vweird.f32 %v2137
    %vm2151 = vweird.f32 %v2145
    %vm2152 = vmor %vm2150, %vm2151
    %v2153 = vsel %vm2152, %v2145, %v2149
    %v2154 = vand.u32 2147483647, %v2137
    %vm2155 = vcmp.eq.f32.partialorder %v2154, 8.507059e+37
    %v2156 = vand.u32 %v2137, 2147483648
    %v2157 = vor.u32 1.1754944e-38, %v2156
    %v2158 = vsel %vm2155, %v2157, %v2153
    %v2159 = vmul.f32 1.0, %v2158
    %v2160 = vrcp.pop %v2138
    %v2161 = vmul.f32 %v2138, %v2160
    %v2162 = vsub.f32 1.0, %v2161
    %v2163 = vmul.f32 %v2160, %v2162
    %v2164 = vadd.f32 %v2160, %v2163
    %vm2165 = vweird.f32 %v2138
    %vm2166 = vweird.f32 %v2160
    %vm2167 = vmor %vm2165, %vm2166
    %v2168 = vsel %vm2167, %v2160, %v2164
    %v2169 = vand.u32 2147483647, %v2138
    %vm2170 = vcmp.eq.f32.partialorder %v2169, 8.507059e+37
    %v2171 = vand.u32 %v2138, 2147483648
    %v2172 = vor.u32 1.1754944e-38, %v2171
    %v2173 = vsel %vm2170, %v2172, %v2168
    %v2174 = vmul.f32 1.0, %v2173
    %v2175 = vrcp.pop %v2139
    %v2176 = vmul.f32 %v2139, %v2175
    %v2177 = vsub.f32 1.0, %v2176
    %v2178 = vmul.f32 %v2175, %v2177
    %v2179 = vadd.f32 %v2175, %v2178
    %vm2180 = vweird.f32 %v2139
    %vm2181 = vweird.f32 %v2175
    %vm2182 = vmor %vm2180, %vm2181
    %v2183 = vsel %vm2182, %v2175, %v2179
    %v2184 = vand.u32 2147483647, %v2139
    %vm2185 = vcmp.eq.f32.partialorder %v2184, 8.507059e+37
    %v2186 = vand.u32 %v2139, 2147483648
    %v2187 = vor.u32 1.1754944e-38, %v2186
    %v2188 = vsel %vm2185, %v2187, %v2183
    %v2189 = vmul.f32 1.0, %v2188
    %v2190 = vrcp.pop %v2140
    %v2191 = vmul.f32 %v2140, %v2190
    %v2192 = vsub.f32 1.0, %v2191
    %v2193 = vmul.f32 %v2190, %v2192
    %v2194 = vadd.f32 %v2190, %v2193
    %vm2195 = vweird.f32 %v2140
    %vm2196 = vweird.f32 %v2190
    %vm2197 = vmor %vm2195, %vm2196
    %v2198 = vsel %vm2197, %v2190, %v2194
    %v2199 = vand.u32 2147483647, %v2140
    %vm2200 = vcmp.eq.f32.partialorder %v2199, 8.507059e+37
    %v2201 = vand.u32 %v2140, 2147483648
    %v2202 = vor.u32 1.1754944e-38, %v2201
    %v2203 = vsel %vm2200, %v2202, %v2198
    %v2204 = vmul.f32 1.0, %v2203
    %v2205 = vrcp.pop %v2141
    %v2206 = vmul.f32 %v2141, %v2205
    %v2207 = vsub.f32 1.0, %v2206
    %v2208 = vmul.f32 %v2205, %v2207
    %v2209 = vadd.f32 %v2205, %v2208
    %vm2210 = vweird.f32 %v2141
    %vm2211 = vweird.f32 %v2205
    %vm2212 = vmor %vm2210, %vm2211
    %v2213 = vsel %vm2212, %v2205, %v2209
    %v2214 = vand.u32 2147483647, %v2141
    %vm2215 = vcmp.eq.f32.partialorder %v2214, 8.507059e+37
    %v2216 = vand.u32 %v2141, 2147483648
    %v2217 = vor.u32 1.1754944e-38, %v2216
    %v2218 = vsel %vm2215, %v2217, %v2213
    %v2219 = vmul.f32 1.0, %v2218
    %v2220 = vrcp.pop %v2142
    %v2221 = vmul.f32 %v2142, %v2220
    %v2222 = vsub.f32 1.0, %v2221
    %v2223 = vmul.f32 %v2220, %v2222
    %v2224 = vadd.f32 %v2220, %v2223
    %vm2225 = vweird.f32 %v2142
    %vm2226 = vweird.f32 %v2220
    %vm2227 = vmor %vm2225, %vm2226
    %v2228 = vsel %vm2227, %v2220, %v2224
    %v2229 = vand.u32 2147483647, %v2142
    %vm2230 = vcmp.eq.f32.partialorder %v2229, 8.507059e+37
    %v2231 = vand.u32 %v2142, 2147483648
    %v2232 = vor.u32 1.1754944e-38, %v2231
    %v2233 = vsel %vm2230, %v2232, %v2228
    %v2234 = vmul.f32 1.0, %v2233
    %v2235 = vrcp.pop %v2143
    %v2236 = vmul.f32 %v2143, %v2235
    %v2237 = vsub.f32 1.0, %v2236
    %v2238 = vmul.f32 %v2235, %v2237
    %v2239 = vadd.f32 %v2235, %v2238
    %vm2240 = vweird.f32 %v2143
    %vm2241 = vweird.f32 %v2235
    %vm2242 = vmor %vm2240, %vm2241
    %v2243 = vsel %vm2242, %v2235, %v2239
    %v2244 = vand.u32 2147483647, %v2143
    %vm2245 = vcmp.eq.f32.partialorder %v2244, 8.507059e+37
    %v2246 = vand.u32 %v2143, 2147483648
    %v2247 = vor.u32 1.1754944e-38, %v2246
    %v2248 = vsel %vm2245, %v2247, %v2243
    %v2249 = vmul.f32 1.0, %v2248
    %v2250 = vrcp.pop %v2144
    %v2251 = vmul.f32 %v2144, %v2250
    %v2252 = vsub.f32 1.0, %v2251
    %v2253 = vmul.f32 %v2250, %v2252
    %v2254 = vadd.f32 %v2250, %v2253
    %vm2255 = vweird.f32 %v2144
    %vm2256 = vweird.f32 %v2250
    %vm2257 = vmor %vm2255, %vm2256
    %v2258 = vsel %vm2257, %v2250, %v2254
    %v2259 = vand.u32 2147483647, %v2144
    %vm2260 = vcmp.eq.f32.partialorder %v2259, 8.507059e+37
    %v2261 = vand.u32 %v2144, 2147483648
    %v2262 = vor.u32 1.1754944e-38, %v2261
    %v2263 = vsel %vm2260, %v2262, %v2258
    %v2264 = vmul.f32 1.0, %v2263
    %v2265 = vtanh.pop %v2105
    %v2266 = vtanh.pop %v2106
    %v2267 = vtanh.pop %v2107
    %v2268 = vtanh.pop %v2108
    %v2269 = vtanh.pop %v2109
    %v2270 = vtanh.pop %v2110
    %v2271 = vtanh.pop %v2111
    %v2272 = vtanh.pop %v2112
    %v2281 = vrot.slane %v1987, 7
    %v2282 = vrot.slane %v1988, 7
    %v2283 = vrot.slane %v1989, 7
    %v2284 = vrot.slane %v1990, 7
    %v2285 = vrot.slane %v1991, 7
    %v2286 = vrot.slane %v1992, 7
    %v2287 = vrot.slane %v1993, 7
    %v2288 = vrot.slane %v1994, 7
    %v2297 = vmul.f32 %v2159, %v2281
    %v2298 = vmul.f32 %v2174, %v2282
    %v2299 = vmul.f32 %v2189, %v2283
    %v2300 = vmul.f32 %v2204, %v2284
    %v2301 = vmul.f32 %v2219, %v2285
    %v2302 = vmul.f32 %v2234, %v2286
    %v2303 = vmul.f32 %v2249, %v2287
    %v2304 = vmul.f32 %v2264, %v2288
    %2313 = vrot.lane.b32.xlu0 %v2265, 64
    %v2314 = vpop.permute.xlu0 %2313
    %2315 = vrot.lane.b32.xlu0 %v2266, 64
    %v2316 = vpop.permute.xlu0 %2315
    %2317 = vrot.lane.b32.xlu0 %v2267, 64
    %v2318 = vpop.permute.xlu0 %2317
    %2319 = vrot.lane.b32.xlu0 %v2268, 64
    %v2320 = vpop.permute.xlu0 %2319
    %2321 = vrot.lane.b32.xlu0 %v2269, 64
    %v2322 = vpop.permute.xlu0 %2321
    %2323 = vrot.lane.b32.xlu0 %v2270, 64
    %v2324 = vpop.permute.xlu0 %2323
    %2325 = vrot.lane.b32.xlu0 %v2271, 64
    %v2326 = vpop.permute.xlu0 %2325
    %2327 = vrot.lane.b32.xlu0 %v2272, 64
    %v2328 = vpop.permute.xlu0 %2327
    %v2337 = vmul.f32 %v2159, %v2314
    %v2338 = vmul.f32 %v2174, %v2316
    %v2339 = vmul.f32 %v2189, %v2318
    %v2340 = vmul.f32 %v2204, %v2320
    %v2341 = vmul.f32 %v2219, %v2322
    %v2342 = vmul.f32 %v2234, %v2324
    %v2343 = vmul.f32 %v2249, %v2326
    %v2344 = vmul.f32 %v2264, %v2328
    %2353 = vrot.lane.b32.xlu0 %v2337, 32
    %v2354 = vpop.permute.xlu0 %2353
    %2355 = vrot.lane.b32.xlu0 %v2338, 32
    %v2356 = vpop.permute.xlu0 %2355
    %2357 = vrot.lane.b32.xlu0 %v2339, 32
    %v2358 = vpop.permute.xlu0 %2357
    %2359 = vrot.lane.b32.xlu0 %v2340, 32
    %v2360 = vpop.permute.xlu0 %2359
    %2361 = vrot.lane.b32.xlu0 %v2341, 32
    %v2362 = vpop.permute.xlu0 %2361
    %2363 = vrot.lane.b32.xlu0 %v2342, 32
    %v2364 = vpop.permute.xlu0 %2363
    %2365 = vrot.lane.b32.xlu0 %v2343, 32
    %v2366 = vpop.permute.xlu0 %2365
    %2367 = vrot.lane.b32.xlu0 %v2344, 32
    %v2368 = vpop.permute.xlu0 %2367
    %v2377 = vadd.f32 %v2297, %v2354
    %v2378 = vadd.f32 %v2298, %v2356
    %v2379 = vadd.f32 %v2299, %v2358
    %v2380 = vadd.f32 %v2300, %v2360
    %v2381 = vadd.f32 %v2301, %v2362
    %v2382 = vadd.f32 %v2302, %v2364
    %v2383 = vadd.f32 %v2303, %v2366
    %v2384 = vadd.f32 %v2304, %v2368
    %v2385 = vtanh.pop %v2377
    %v2386 = vtanh.pop %v2378
    %v2387 = vtanh.pop %v2379
    %v2388 = vtanh.pop %v2380
    %v2389 = vtanh.pop %v2381
    %v2390 = vtanh.pop %v2382
    %v2391 = vtanh.pop %v2383
    %v2392 = vtanh.pop %v2384
    %2401 = vrot.lane.b32.xlu0 %v2385, 64
    %v2402 = vpop.permute.xlu0 %2401
    %2403 = vrot.lane.b32.xlu0 %v2386, 64
    %v2404 = vpop.permute.xlu0 %2403
    %2405 = vrot.lane.b32.xlu0 %v2387, 64
    %v2406 = vpop.permute.xlu0 %2405
    %2407 = vrot.lane.b32.xlu0 %v2388, 64
    %v2408 = vpop.permute.xlu0 %2407
    %2409 = vrot.lane.b32.xlu0 %v2389, 64
    %v2410 = vpop.permute.xlu0 %2409
    %2411 = vrot.lane.b32.xlu0 %v2390, 64
    %v2412 = vpop.permute.xlu0 %2411
    %2413 = vrot.lane.b32.xlu0 %v2391, 64
    %v2414 = vpop.permute.xlu0 %2413
    %2415 = vrot.lane.b32.xlu0 %v2392, 64
    %v2416 = vpop.permute.xlu0 %2415
    %v2425 = vmul.f32 %v2159, %v2402
    %v2426 = vmul.f32 %v2174, %v2404
    %v2427 = vmul.f32 %v2189, %v2406
    %v2428 = vmul.f32 %v2204, %v2408
    %v2429 = vmul.f32 %v2219, %v2410
    %v2430 = vmul.f32 %v2234, %v2412
    %v2431 = vmul.f32 %v2249, %v2414
    %v2432 = vmul.f32 %v2264, %v2416
    %v2441 = vrot.slane %v2425, 5
    %v2442 = vrot.slane %v2426, 4
    %v2443 = vsel %vm485, %v2442, %v2441
    %v2444 = vrot.slane %v2427, 3
    %v2445 = vsel %vm488, %v2444, %v2443
    %v2446 = vrot.slane %v2428, 2
    %v2447 = vsel %vm491, %v2446, %v2445
    %v2448 = vrot.slane %v2429, 1
    %v2449 = vsel %vm494, %v2448, %v2447
    %v2450 = vsel %vm497, %v2430, %v2449
    %v2451 = vrot.slane %v2431, 7
    %v2452 = vsel %vm500, %v2451, %v2450
    %v2453 = vrot.slane %v2432, 6
    %v2454 = vsel %vm503, %v2453, %v2452
    %2455 = vrot.lane.b32.xlu0 %v2454, 32
    %v2456 = vpop.permute.xlu0 %2455
    %v2457 = vsel %vm132, %v2456, 0
    %2459 = vmatpush.msra.mxu0 0.0
    %2460 = vmatpush.msra.mxu0 0.0
    %2461 = vmatpush.msra.mxu0 0.0
    %2462 = vmatpush.msra.mxu0 0.0
    %2463 = vmatpush.msra.mxu0 0.0
    %2464 = vmatpush.msra.mxu0 0.0
    %2465 = vmatpush.msra.mxu0 0.0
    %2466 = vmatpush.msra.mxu0 0.0
    %2467 = vmatpush.msra.mxu0 0.0
    %2468 = vmatpush.msra.mxu0 0.0
    %2469 = vmatpush.msra.mxu0 0.0
    %2470 = vmatpush.msra.mxu0 0.0
    %2471 = vmatpush.msra.mxu0 %v53
    %2472 = vmatpush.msra.mxu0 %v52
    %2473 = vmatpush.msra.mxu0 %v51
    %2474 = vmatpush.msra.mxu0 %v50
    %2475 = vmatmul.f32.gmra.mxu0 %v2457
    %v2476 = vpop.f32.mrf.mxu0
    %v2477 = vadd.f32 0.0, %v2476
    %2478 = vdwg.mxu0
    %v2480 = vrot.slane %v2477, 2
    %v2481 = vrot.slane %v2477, 3
    %v2482 = vrot.slane %v2477, 4
    %v2483 = vrot.slane %v2477, 5
    %v2484 = vrot.slane %v2477, 6
    %v2485 = vrot.slane %v2477, 7
    %v2486 = vrot.slane %v2477, 1
    %v2495 = vadd.f32 %v109, %v2480
    %v2496 = vadd.f32 %v112, %v2481
    %v2497 = vadd.f32 %v115, %v2482
    %v2498 = vadd.f32 %v118, %v2483
    %v2499 = vadd.f32 %v121, %v2484
    %v2500 = vadd.f32 %v124, %v2485
    %v2501 = vadd.f32 %v127, %v2477
    %v2502 = vadd.f32 %v130, %v2486
    %v2503 = vxor.u32 %v2495, 2147483648
    %v2504 = vxor.u32 %v2496, 2147483648
    %v2505 = vxor.u32 %v2497, 2147483648
    %v2506 = vxor.u32 %v2498, 2147483648
    %v2507 = vxor.u32 %v2499, 2147483648
    %v2508 = vxor.u32 %v2500, 2147483648
    %v2509 = vxor.u32 %v2501, 2147483648
    %v2510 = vxor.u32 %v2502, 2147483648
    %v2511 = vmul.f32 %v2503, 1.442695
    %v2512 = vpow.pop %v2511
    %v2513 = vmul.f32 %v2504, 1.442695
    %v2514 = vpow.pop %v2513
    %v2515 = vmul.f32 %v2505, 1.442695
    %v2516 = vpow.pop %v2515
    %v2517 = vmul.f32 %v2506, 1.442695
    %v2518 = vpow.pop %v2517
    %v2519 = vmul.f32 %v2507, 1.442695
    %v2520 = vpow.pop %v2519
    %v2521 = vmul.f32 %v2508, 1.442695
    %v2522 = vpow.pop %v2521
    %v2523 = vmul.f32 %v2509, 1.442695
    %v2524 = vpow.pop %v2523
    %v2525 = vmul.f32 %v2510, 1.442695
    %v2526 = vpow.pop %v2525
    %v2527 = vadd.f32 %v2512, 1.0
    %v2528 = vadd.f32 %v2514, 1.0
    %v2529 = vadd.f32 %v2516, 1.0
    %v2530 = vadd.f32 %v2518, 1.0
    %v2531 = vadd.f32 %v2520, 1.0
    %v2532 = vadd.f32 %v2522, 1.0
    %v2533 = vadd.f32 %v2524, 1.0
    %v2534 = vadd.f32 %v2526, 1.0
    %v2535 = vrcp.pop %v2527
    %v2536 = vmul.f32 %v2527, %v2535
    %v2537 = vsub.f32 1.0, %v2536
    %v2538 = vmul.f32 %v2535, %v2537
    %v2539 = vadd.f32 %v2535, %v2538
    %vm2540 = vweird.f32 %v2527
    %vm2541 = vweird.f32 %v2535
    %vm2542 = vmor %vm2540, %vm2541
    %v2543 = vsel %vm2542, %v2535, %v2539
    %v2544 = vand.u32 2147483647, %v2527
    %vm2545 = vcmp.eq.f32.partialorder %v2544, 8.507059e+37
    %v2546 = vand.u32 %v2527, 2147483648
    %v2547 = vor.u32 1.1754944e-38, %v2546
    %v2548 = vsel %vm2545, %v2547, %v2543
    %v2549 = vmul.f32 1.0, %v2548
    %v2550 = vrcp.pop %v2528
    %v2551 = vmul.f32 %v2528, %v2550
    %v2552 = vsub.f32 1.0, %v2551
    %v2553 = vmul.f32 %v2550, %v2552
    %v2554 = vadd.f32 %v2550, %v2553
    %vm2555 = vweird.f32 %v2528
    %vm2556 = vweird.f32 %v2550
    %vm2557 = vmor %vm2555, %vm2556
    %v2558 = vsel %vm2557, %v2550, %v2554
    %v2559 = vand.u32 2147483647, %v2528
    %vm2560 = vcmp.eq.f32.partialorder %v2559, 8.507059e+37
    %v2561 = vand.u32 %v2528, 2147483648
    %v2562 = vor.u32 1.1754944e-38, %v2561
    %v2563 = vsel %vm2560, %v2562, %v2558
    %v2564 = vmul.f32 1.0, %v2563
    %v2565 = vrcp.pop %v2529
    %v2566 = vmul.f32 %v2529, %v2565
    %v2567 = vsub.f32 1.0, %v2566
    %v2568 = vmul.f32 %v2565, %v2567
    %v2569 = vadd.f32 %v2565, %v2568
    %vm2570 = vweird.f32 %v2529
    %vm2571 = vweird.f32 %v2565
    %vm2572 = vmor %vm2570, %vm2571
    %v2573 = vsel %vm2572, %v2565, %v2569
    %v2574 = vand.u32 2147483647, %v2529
    %vm2575 = vcmp.eq.f32.partialorder %v2574, 8.507059e+37
    %v2576 = vand.u32 %v2529, 2147483648
    %v2577 = vor.u32 1.1754944e-38, %v2576
    %v2578 = vsel %vm2575, %v2577, %v2573
    %v2579 = vmul.f32 1.0, %v2578
    %v2580 = vrcp.pop %v2530
    %v2581 = vmul.f32 %v2530, %v2580
    %v2582 = vsub.f32 1.0, %v2581
    %v2583 = vmul.f32 %v2580, %v2582
    %v2584 = vadd.f32 %v2580, %v2583
    %vm2585 = vweird.f32 %v2530
    %vm2586 = vweird.f32 %v2580
    %vm2587 = vmor %vm2585, %vm2586
    %v2588 = vsel %vm2587, %v2580, %v2584
    %v2589 = vand.u32 2147483647, %v2530
    %vm2590 = vcmp.eq.f32.partialorder %v2589, 8.507059e+37
    %v2591 = vand.u32 %v2530, 2147483648
    %v2592 = vor.u32 1.1754944e-38, %v2591
    %v2593 = vsel %vm2590, %v2592, %v2588
    %v2594 = vmul.f32 1.0, %v2593
    %v2595 = vrcp.pop %v2531
    %v2596 = vmul.f32 %v2531, %v2595
    %v2597 = vsub.f32 1.0, %v2596
    %v2598 = vmul.f32 %v2595, %v2597
    %v2599 = vadd.f32 %v2595, %v2598
    %vm2600 = vweird.f32 %v2531
    %vm2601 = vweird.f32 %v2595
    %vm2602 = vmor %vm2600, %vm2601
    %v2603 = vsel %vm2602, %v2595, %v2599
    %v2604 = vand.u32 2147483647, %v2531
    %vm2605 = vcmp.eq.f32.partialorder %v2604, 8.507059e+37
    %v2606 = vand.u32 %v2531, 2147483648
    %v2607 = vor.u32 1.1754944e-38, %v2606
    %v2608 = vsel %vm2605, %v2607, %v2603
    %v2609 = vmul.f32 1.0, %v2608
    %v2610 = vrcp.pop %v2532
    %v2611 = vmul.f32 %v2532, %v2610
    %v2612 = vsub.f32 1.0, %v2611
    %v2613 = vmul.f32 %v2610, %v2612
    %v2614 = vadd.f32 %v2610, %v2613
    %vm2615 = vweird.f32 %v2532
    %vm2616 = vweird.f32 %v2610
    %vm2617 = vmor %vm2615, %vm2616
    %v2618 = vsel %vm2617, %v2610, %v2614
    %v2619 = vand.u32 2147483647, %v2532
    %vm2620 = vcmp.eq.f32.partialorder %v2619, 8.507059e+37
    %v2621 = vand.u32 %v2532, 2147483648
    %v2622 = vor.u32 1.1754944e-38, %v2621
    %v2623 = vsel %vm2620, %v2622, %v2618
    %v2624 = vmul.f32 1.0, %v2623
    %v2625 = vrcp.pop %v2533
    %v2626 = vmul.f32 %v2533, %v2625
    %v2627 = vsub.f32 1.0, %v2626
    %v2628 = vmul.f32 %v2625, %v2627
    %v2629 = vadd.f32 %v2625, %v2628
    %vm2630 = vweird.f32 %v2533
    %vm2631 = vweird.f32 %v2625
    %vm2632 = vmor %vm2630, %vm2631
    %v2633 = vsel %vm2632, %v2625, %v2629
    %v2634 = vand.u32 2147483647, %v2533
    %vm2635 = vcmp.eq.f32.partialorder %v2634, 8.507059e+37
    %v2636 = vand.u32 %v2533, 2147483648
    %v2637 = vor.u32 1.1754944e-38, %v2636
    %v2638 = vsel %vm2635, %v2637, %v2633
    %v2639 = vmul.f32 1.0, %v2638
    %v2640 = vrcp.pop %v2534
    %v2641 = vmul.f32 %v2534, %v2640
    %v2642 = vsub.f32 1.0, %v2641
    %v2643 = vmul.f32 %v2640, %v2642
    %v2644 = vadd.f32 %v2640, %v2643
    %vm2645 = vweird.f32 %v2534
    %vm2646 = vweird.f32 %v2640
    %vm2647 = vmor %vm2645, %vm2646
    %v2648 = vsel %vm2647, %v2640, %v2644
    %v2649 = vand.u32 2147483647, %v2534
    %vm2650 = vcmp.eq.f32.partialorder %v2649, 8.507059e+37
    %v2651 = vand.u32 %v2534, 2147483648
    %v2652 = vor.u32 1.1754944e-38, %v2651
    %v2653 = vsel %vm2650, %v2652, %v2648
    %v2654 = vmul.f32 1.0, %v2653
    %v2655 = vtanh.pop %v2495
    %v2656 = vtanh.pop %v2496
    %v2657 = vtanh.pop %v2497
    %v2658 = vtanh.pop %v2498
    %v2659 = vtanh.pop %v2499
    %v2660 = vtanh.pop %v2500
    %v2661 = vtanh.pop %v2501
    %v2662 = vtanh.pop %v2502
    %v2671 = vrot.slane %v2377, 7
    %v2672 = vrot.slane %v2378, 7
    %v2673 = vrot.slane %v2379, 7
    %v2674 = vrot.slane %v2380, 7
    %v2675 = vrot.slane %v2381, 7
    %v2676 = vrot.slane %v2382, 7
    %v2677 = vrot.slane %v2383, 7
    %v2678 = vrot.slane %v2384, 7
    %v2687 = vmul.f32 %v2549, %v2671
    %v2688 = vmul.f32 %v2564, %v2672
    %v2689 = vmul.f32 %v2579, %v2673
    %v2690 = vmul.f32 %v2594, %v2674
    %v2691 = vmul.f32 %v2609, %v2675
    %v2692 = vmul.f32 %v2624, %v2676
    %v2693 = vmul.f32 %v2639, %v2677
    %v2694 = vmul.f32 %v2654, %v2678
    %2703 = vrot.lane.b32.xlu0 %v2655, 64
    %v2704 = vpop.permute.xlu0 %2703
    %2705 = vrot.lane.b32.xlu0 %v2656, 64
    %v2706 = vpop.permute.xlu0 %2705
    %2707 = vrot.lane.b32.xlu0 %v2657, 64
    %v2708 = vpop.permute.xlu0 %2707
    %2709 = vrot.lane.b32.xlu0 %v2658, 64
    %v2710 = vpop.permute.xlu0 %2709
    %2711 = vrot.lane.b32.xlu0 %v2659, 64
    %v2712 = vpop.permute.xlu0 %2711
    %2713 = vrot.lane.b32.xlu0 %v2660, 64
    %v2714 = vpop.permute.xlu0 %2713
    %2715 = vrot.lane.b32.xlu0 %v2661, 64
    %v2716 = vpop.permute.xlu0 %2715
    %2717 = vrot.lane.b32.xlu0 %v2662, 64
    %v2718 = vpop.permute.xlu0 %2717
    %v2727 = vmul.f32 %v2549, %v2704
    %v2728 = vmul.f32 %v2564, %v2706
    %v2729 = vmul.f32 %v2579, %v2708
    %v2730 = vmul.f32 %v2594, %v2710
    %v2731 = vmul.f32 %v2609, %v2712
    %v2732 = vmul.f32 %v2624, %v2714
    %v2733 = vmul.f32 %v2639, %v2716
    %v2734 = vmul.f32 %v2654, %v2718
    %2743 = vrot.lane.b32.xlu0 %v2727, 32
    %v2744 = vpop.permute.xlu0 %2743
    %2745 = vrot.lane.b32.xlu0 %v2728, 32
    %v2746 = vpop.permute.xlu0 %2745
    %2747 = vrot.lane.b32.xlu0 %v2729, 32
    %v2748 = vpop.permute.xlu0 %2747
    %2749 = vrot.lane.b32.xlu0 %v2730, 32
    %v2750 = vpop.permute.xlu0 %2749
    %2751 = vrot.lane.b32.xlu0 %v2731, 32
    %v2752 = vpop.permute.xlu0 %2751
    %2753 = vrot.lane.b32.xlu0 %v2732, 32
    %v2754 = vpop.permute.xlu0 %2753
    %2755 = vrot.lane.b32.xlu0 %v2733, 32
    %v2756 = vpop.permute.xlu0 %2755
    %2757 = vrot.lane.b32.xlu0 %v2734, 32
    %v2758 = vpop.permute.xlu0 %2757
    %v2767 = vadd.f32 %v2687, %v2744
    %v2768 = vadd.f32 %v2688, %v2746
    %v2769 = vadd.f32 %v2689, %v2748
    %v2770 = vadd.f32 %v2690, %v2750
    %v2771 = vadd.f32 %v2691, %v2752
    %v2772 = vadd.f32 %v2692, %v2754
    %v2773 = vadd.f32 %v2693, %v2756
    %v2774 = vadd.f32 %v2694, %v2758
    %v2775 = vtanh.pop %v2767
    %v2776 = vtanh.pop %v2768
    %v2777 = vtanh.pop %v2769
    %v2778 = vtanh.pop %v2770
    %v2779 = vtanh.pop %v2771
    %v2780 = vtanh.pop %v2772
    %v2781 = vtanh.pop %v2773
    %v2782 = vtanh.pop %v2774
    %2791 = vrot.lane.b32.xlu0 %v2775, 64
    %v2792 = vpop.permute.xlu0 %2791
    %2793 = vrot.lane.b32.xlu0 %v2776, 64
    %v2794 = vpop.permute.xlu0 %2793
    %2795 = vrot.lane.b32.xlu0 %v2777, 64
    %v2796 = vpop.permute.xlu0 %2795
    %2797 = vrot.lane.b32.xlu0 %v2778, 64
    %v2798 = vpop.permute.xlu0 %2797
    %2799 = vrot.lane.b32.xlu0 %v2779, 64
    %v2800 = vpop.permute.xlu0 %2799
    %2801 = vrot.lane.b32.xlu0 %v2780, 64
    %v2802 = vpop.permute.xlu0 %2801
    %2803 = vrot.lane.b32.xlu0 %v2781, 64
    %v2804 = vpop.permute.xlu0 %2803
    %2805 = vrot.lane.b32.xlu0 %v2782, 64
    %v2806 = vpop.permute.xlu0 %2805
    %v2815 = vmul.f32 %v2549, %v2792
    %v2816 = vmul.f32 %v2564, %v2794
    %v2817 = vmul.f32 %v2579, %v2796
    %v2818 = vmul.f32 %v2594, %v2798
    %v2819 = vmul.f32 %v2609, %v2800
    %v2820 = vmul.f32 %v2624, %v2802
    %v2821 = vmul.f32 %v2639, %v2804
    %v2822 = vmul.f32 %v2654, %v2806
    %v2831 = vrot.slane %v2815, 6
    %v2832 = vrot.slane %v2816, 5
    %v2833 = vsel %vm485, %v2832, %v2831
    %v2834 = vrot.slane %v2817, 4
    %v2835 = vsel %vm488, %v2834, %v2833
    %v2836 = vrot.slane %v2818, 3
    %v2837 = vsel %vm491, %v2836, %v2835
    %v2838 = vrot.slane %v2819, 2
    %v2839 = vsel %vm494, %v2838, %v2837
    %v2840 = vrot.slane %v2820, 1
    %v2841 = vsel %vm497, %v2840, %v2839
    %v2842 = vsel %vm500, %v2821, %v2841
    %v2843 = vrot.slane %v2822, 7
    %v2844 = vsel %vm503, %v2843, %v2842
    %2845 = vrot.lane.b32.xlu0 %v2844, 32
    %v2846 = vpop.permute.xlu0 %2845
    %v2847 = vsel %vm132, %v2846, 0
    %2849 = vmatpush.msra.mxu0 0.0
    %2850 = vmatpush.msra.mxu0 0.0
    %2851 = vmatpush.msra.mxu0 0.0
    %2852 = vmatpush.msra.mxu0 0.0
    %2853 = vmatpush.msra.mxu0 0.0
    %2854 = vmatpush.msra.mxu0 0.0
    %2855 = vmatpush.msra.mxu0 0.0
    %2856 = vmatpush.msra.mxu0 0.0
    %2857 = vmatpush.msra.mxu0 0.0
    %2858 = vmatpush.msra.mxu0 0.0
    %2859 = vmatpush.msra.mxu0 0.0
    %2860 = vmatpush.msra.mxu0 0.0
    %2861 = vmatpush.msra.mxu0 %v53
    %2862 = vmatpush.msra.mxu0 %v52
    %2863 = vmatpush.msra.mxu0 %v51
    %2864 = vmatpush.msra.mxu0 %v50
    %2865 = vmatmul.f32.gmra.mxu0 %v2847
    %v2866 = vpop.f32.mrf.mxu0
    %v2867 = vadd.f32 0.0, %v2866
    %2868 = vdwg.mxu0
    %v2870 = vrot.slane %v2867, 1
    %v2871 = vrot.slane %v2867, 2
    %v2872 = vrot.slane %v2867, 3
    %v2873 = vrot.slane %v2867, 4
    %v2874 = vrot.slane %v2867, 5
    %v2875 = vrot.slane %v2867, 6
    %v2876 = vrot.slane %v2867, 7
    %v2885 = vadd.f32 %v109, %v2870
    %v2886 = vadd.f32 %v112, %v2871
    %v2887 = vadd.f32 %v115, %v2872
    %v2888 = vadd.f32 %v118, %v2873
    %v2889 = vadd.f32 %v121, %v2874
    %v2890 = vadd.f32 %v124, %v2875
    %v2891 = vadd.f32 %v127, %v2876
    %v2892 = vadd.f32 %v130, %v2867
    %v2893 = vxor.u32 %v2885, 2147483648
    %v2894 = vxor.u32 %v2886, 2147483648
    %v2895 = vxor.u32 %v2887, 2147483648
    %v2896 = vxor.u32 %v2888, 2147483648
    %v2897 = vxor.u32 %v2889, 2147483648
    %v2898 = vxor.u32 %v2890, 2147483648
    %v2899 = vxor.u32 %v2891, 2147483648
    %v2900 = vxor.u32 %v2892, 2147483648
    %v2901 = vmul.f32 %v2893, 1.442695
    %v2902 = vpow.pop %v2901
    %v2903 = vmul.f32 %v2894, 1.442695
    %v2904 = vpow.pop %v2903
    %v2905 = vmul.f32 %v2895, 1.442695
    %v2906 = vpow.pop %v2905
    %v2907 = vmul.f32 %v2896, 1.442695
    %v2908 = vpow.pop %v2907
    %v2909 = vmul.f32 %v2897, 1.442695
    %v2910 = vpow.pop %v2909
    %v2911 = vmul.f32 %v2898, 1.442695
    %v2912 = vpow.pop %v2911
    %v2913 = vmul.f32 %v2899, 1.442695
    %v2914 = vpow.pop %v2913
    %v2915 = vmul.f32 %v2900, 1.442695
    %v2916 = vpow.pop %v2915
    %v2917 = vadd.f32 %v2902, 1.0
    %v2918 = vadd.f32 %v2904, 1.0
    %v2919 = vadd.f32 %v2906, 1.0
    %v2920 = vadd.f32 %v2908, 1.0
    %v2921 = vadd.f32 %v2910, 1.0
    %v2922 = vadd.f32 %v2912, 1.0
    %v2923 = vadd.f32 %v2914, 1.0
    %v2924 = vadd.f32 %v2916, 1.0
    %v2925 = vrcp.pop %v2917
    %v2926 = vmul.f32 %v2917, %v2925
    %v2927 = vsub.f32 1.0, %v2926
    %v2928 = vmul.f32 %v2925, %v2927
    %v2929 = vadd.f32 %v2925, %v2928
    %vm2930 = vweird.f32 %v2917
    %vm2931 = vweird.f32 %v2925
    %vm2932 = vmor %vm2930, %vm2931
    %v2933 = vsel %vm2932, %v2925, %v2929
    %v2934 = vand.u32 2147483647, %v2917
    %vm2935 = vcmp.eq.f32.partialorder %v2934, 8.507059e+37
    %v2936 = vand.u32 %v2917, 2147483648
    %v2937 = vor.u32 1.1754944e-38, %v2936
    %v2938 = vsel %vm2935, %v2937, %v2933
    %v2939 = vmul.f32 1.0, %v2938
    %v2940 = vrcp.pop %v2918
    %v2941 = vmul.f32 %v2918, %v2940
    %v2942 = vsub.f32 1.0, %v2941
    %v2943 = vmul.f32 %v2940, %v2942
    %v2944 = vadd.f32 %v2940, %v2943
    %vm2945 = vweird.f32 %v2918
    %vm2946 = vweird.f32 %v2940
    %vm2947 = vmor %vm2945, %vm2946
    %v2948 = vsel %vm2947, %v2940, %v2944
    %v2949 = vand.u32 2147483647, %v2918
    %vm2950 = vcmp.eq.f32.partialorder %v2949, 8.507059e+37
    %v2951 = vand.u32 %v2918, 2147483648
    %v2952 = vor.u32 1.1754944e-38, %v2951
    %v2953 = vsel %vm2950, %v2952, %v2948
    %v2954 = vmul.f32 1.0, %v2953
    %v2955 = vrcp.pop %v2919
    %v2956 = vmul.f32 %v2919, %v2955
    %v2957 = vsub.f32 1.0, %v2956
    %v2958 = vmul.f32 %v2955, %v2957
    %v2959 = vadd.f32 %v2955, %v2958
    %vm2960 = vweird.f32 %v2919
    %vm2961 = vweird.f32 %v2955
    %vm2962 = vmor %vm2960, %vm2961
    %v2963 = vsel %vm2962, %v2955, %v2959
    %v2964 = vand.u32 2147483647, %v2919
    %vm2965 = vcmp.eq.f32.partialorder %v2964, 8.507059e+37
    %v2966 = vand.u32 %v2919, 2147483648
    %v2967 = vor.u32 1.1754944e-38, %v2966
    %v2968 = vsel %vm2965, %v2967, %v2963
    %v2969 = vmul.f32 1.0, %v2968
    %v2970 = vrcp.pop %v2920
    %v2971 = vmul.f32 %v2920, %v2970
    %v2972 = vsub.f32 1.0, %v2971
    %v2973 = vmul.f32 %v2970, %v2972
    %v2974 = vadd.f32 %v2970, %v2973
    %vm2975 = vweird.f32 %v2920
    %vm2976 = vweird.f32 %v2970
    %vm2977 = vmor %vm2975, %vm2976
    %v2978 = vsel %vm2977, %v2970, %v2974
    %v2979 = vand.u32 2147483647, %v2920
    %vm2980 = vcmp.eq.f32.partialorder %v2979, 8.507059e+37
    %v2981 = vand.u32 %v2920, 2147483648
    %v2982 = vor.u32 1.1754944e-38, %v2981
    %v2983 = vsel %vm2980, %v2982, %v2978
    %v2984 = vmul.f32 1.0, %v2983
    %v2985 = vrcp.pop %v2921
    %v2986 = vmul.f32 %v2921, %v2985
    %v2987 = vsub.f32 1.0, %v2986
    %v2988 = vmul.f32 %v2985, %v2987
    %v2989 = vadd.f32 %v2985, %v2988
    %vm2990 = vweird.f32 %v2921
    %vm2991 = vweird.f32 %v2985
    %vm2992 = vmor %vm2990, %vm2991
    %v2993 = vsel %vm2992, %v2985, %v2989
    %v2994 = vand.u32 2147483647, %v2921
    %vm2995 = vcmp.eq.f32.partialorder %v2994, 8.507059e+37
    %v2996 = vand.u32 %v2921, 2147483648
    %v2997 = vor.u32 1.1754944e-38, %v2996
    %v2998 = vsel %vm2995, %v2997, %v2993
    %v2999 = vmul.f32 1.0, %v2998
    %v3000 = vrcp.pop %v2922
    %v3001 = vmul.f32 %v2922, %v3000
    %v3002 = vsub.f32 1.0, %v3001
    %v3003 = vmul.f32 %v3000, %v3002
    %v3004 = vadd.f32 %v3000, %v3003
    %vm3005 = vweird.f32 %v2922
    %vm3006 = vweird.f32 %v3000
    %vm3007 = vmor %vm3005, %vm3006
    %v3008 = vsel %vm3007, %v3000, %v3004
    %v3009 = vand.u32 2147483647, %v2922
    %vm3010 = vcmp.eq.f32.partialorder %v3009, 8.507059e+37
    %v3011 = vand.u32 %v2922, 2147483648
    %v3012 = vor.u32 1.1754944e-38, %v3011
    %v3013 = vsel %vm3010, %v3012, %v3008
    %v3014 = vmul.f32 1.0, %v3013
    %v3015 = vrcp.pop %v2923
    %v3016 = vmul.f32 %v2923, %v3015
    %v3017 = vsub.f32 1.0, %v3016
    %v3018 = vmul.f32 %v3015, %v3017
    %v3019 = vadd.f32 %v3015, %v3018
    %vm3020 = vweird.f32 %v2923
    %vm3021 = vweird.f32 %v3015
    %vm3022 = vmor %vm3020, %vm3021
    %v3023 = vsel %vm3022, %v3015, %v3019
    %v3024 = vand.u32 2147483647, %v2923
    %vm3025 = vcmp.eq.f32.partialorder %v3024, 8.507059e+37
    %v3026 = vand.u32 %v2923, 2147483648
    %v3027 = vor.u32 1.1754944e-38, %v3026
    %v3028 = vsel %vm3025, %v3027, %v3023
    %v3029 = vmul.f32 1.0, %v3028
    %v3030 = vrcp.pop %v2924
    %v3031 = vmul.f32 %v2924, %v3030
    %v3032 = vsub.f32 1.0, %v3031
    %v3033 = vmul.f32 %v3030, %v3032
    %v3034 = vadd.f32 %v3030, %v3033
    %vm3035 = vweird.f32 %v2924
    %vm3036 = vweird.f32 %v3030
    %vm3037 = vmor %vm3035, %vm3036
    %v3038 = vsel %vm3037, %v3030, %v3034
    %v3039 = vand.u32 2147483647, %v2924
    %vm3040 = vcmp.eq.f32.partialorder %v3039, 8.507059e+37
    %v3041 = vand.u32 %v2924, 2147483648
    %v3042 = vor.u32 1.1754944e-38, %v3041
    %v3043 = vsel %vm3040, %v3042, %v3038
    %v3044 = vmul.f32 1.0, %v3043
    %v3045 = vtanh.pop %v2885
    %v3046 = vtanh.pop %v2886
    %v3047 = vtanh.pop %v2887
    %v3048 = vtanh.pop %v2888
    %v3049 = vtanh.pop %v2889
    %v3050 = vtanh.pop %v2890
    %v3051 = vtanh.pop %v2891
    %v3052 = vtanh.pop %v2892
    %v3061 = vrot.slane %v2767, 7
    %v3062 = vrot.slane %v2768, 7
    %v3063 = vrot.slane %v2769, 7
    %v3064 = vrot.slane %v2770, 7
    %v3065 = vrot.slane %v2771, 7
    %v3066 = vrot.slane %v2772, 7
    %v3067 = vrot.slane %v2773, 7
    %v3068 = vrot.slane %v2774, 7
    %v3077 = vmul.f32 %v2939, %v3061
    %v3078 = vmul.f32 %v2954, %v3062
    %v3079 = vmul.f32 %v2969, %v3063
    %v3080 = vmul.f32 %v2984, %v3064
    %v3081 = vmul.f32 %v2999, %v3065
    %v3082 = vmul.f32 %v3014, %v3066
    %v3083 = vmul.f32 %v3029, %v3067
    %v3084 = vmul.f32 %v3044, %v3068
    %3093 = vrot.lane.b32.xlu0 %v3045, 64
    %v3094 = vpop.permute.xlu0 %3093
    %3095 = vrot.lane.b32.xlu0 %v3046, 64
    %v3096 = vpop.permute.xlu0 %3095
    %3097 = vrot.lane.b32.xlu0 %v3047, 64
    %v3098 = vpop.permute.xlu0 %3097
    %3099 = vrot.lane.b32.xlu0 %v3048, 64
    %v3100 = vpop.permute.xlu0 %3099
    %3101 = vrot.lane.b32.xlu0 %v3049, 64
    %v3102 = vpop.permute.xlu0 %3101
    %3103 = vrot.lane.b32.xlu0 %v3050, 64
    %v3104 = vpop.permute.xlu0 %3103
    %3105 = vrot.lane.b32.xlu0 %v3051, 64
    %v3106 = vpop.permute.xlu0 %3105
    %3107 = vrot.lane.b32.xlu0 %v3052, 64
    %v3108 = vpop.permute.xlu0 %3107
    %v3117 = vmul.f32 %v2939, %v3094
    %v3118 = vmul.f32 %v2954, %v3096
    %v3119 = vmul.f32 %v2969, %v3098
    %v3120 = vmul.f32 %v2984, %v3100
    %v3121 = vmul.f32 %v2999, %v3102
    %v3122 = vmul.f32 %v3014, %v3104
    %v3123 = vmul.f32 %v3029, %v3106
    %v3124 = vmul.f32 %v3044, %v3108
    %3133 = vrot.lane.b32.xlu0 %v3117, 32
    %v3134 = vpop.permute.xlu0 %3133
    %3135 = vrot.lane.b32.xlu0 %v3118, 32
    %v3136 = vpop.permute.xlu0 %3135
    %3137 = vrot.lane.b32.xlu0 %v3119, 32
    %v3138 = vpop.permute.xlu0 %3137
    %3139 = vrot.lane.b32.xlu0 %v3120, 32
    %v3140 = vpop.permute.xlu0 %3139
    %3141 = vrot.lane.b32.xlu0 %v3121, 32
    %v3142 = vpop.permute.xlu0 %3141
    %3143 = vrot.lane.b32.xlu0 %v3122, 32
    %v3144 = vpop.permute.xlu0 %3143
    %3145 = vrot.lane.b32.xlu0 %v3123, 32
    %v3146 = vpop.permute.xlu0 %3145
    %3147 = vrot.lane.b32.xlu0 %v3124, 32
    %v3148 = vpop.permute.xlu0 %3147
    %v3157 = vadd.f32 %v3077, %v3134
    %v3158 = vadd.f32 %v3078, %v3136
    %v3159 = vadd.f32 %v3079, %v3138
    %v3160 = vadd.f32 %v3080, %v3140
    %v3161 = vadd.f32 %v3081, %v3142
    %v3162 = vadd.f32 %v3082, %v3144
    %v3163 = vadd.f32 %v3083, %v3146
    %v3164 = vadd.f32 %v3084, %v3148
    %v3165 = vtanh.pop %v3157
    %v3166 = vtanh.pop %v3158
    %v3167 = vtanh.pop %v3159
    %v3168 = vtanh.pop %v3160
    %v3169 = vtanh.pop %v3161
    %v3170 = vtanh.pop %v3162
    %v3171 = vtanh.pop %v3163
    %v3172 = vtanh.pop %v3164
    %3181 = vrot.lane.b32.xlu0 %v3165, 64
    %v3182 = vpop.permute.xlu0 %3181
    %3183 = vrot.lane.b32.xlu0 %v3166, 64
    %v3184 = vpop.permute.xlu0 %3183
    %3185 = vrot.lane.b32.xlu0 %v3167, 64
    %v3186 = vpop.permute.xlu0 %3185
    %3187 = vrot.lane.b32.xlu0 %v3168, 64
    %v3188 = vpop.permute.xlu0 %3187
    %3189 = vrot.lane.b32.xlu0 %v3169, 64
    %v3190 = vpop.permute.xlu0 %3189
    %3191 = vrot.lane.b32.xlu0 %v3170, 64
    %v3192 = vpop.permute.xlu0 %3191
    %3193 = vrot.lane.b32.xlu0 %v3171, 64
    %v3194 = vpop.permute.xlu0 %3193
    %3195 = vrot.lane.b32.xlu0 %v3172, 64
    %v3196 = vpop.permute.xlu0 %3195
    %v3205 = vmul.f32 %v2939, %v3182
    %v3206 = vmul.f32 %v2954, %v3184
    %v3207 = vmul.f32 %v2969, %v3186
    %v3208 = vmul.f32 %v2984, %v3188
    %v3209 = vmul.f32 %v2999, %v3190
    %v3210 = vmul.f32 %v3014, %v3192
    %v3211 = vmul.f32 %v3029, %v3194
    %v3212 = vmul.f32 %v3044, %v3196
    %v3213 = vrot.slane %v866, 1
    %v3214 = vrot.slane %v867, 1
    %v3215 = vrot.slane %v868, 1
    %v3216 = vrot.slane %v869, 1
    %v3217 = vrot.slane %v870, 1
    %v3218 = vrot.slane %v871, 1
    %v3219 = vrot.slane %v872, 1
    %v3220 = vrot.slane %v1256, 2
    %v3221 = vrot.slane %v1257, 2
    %v3222 = vrot.slane %v1258, 2
    %v3223 = vrot.slane %v1259, 2
    %v3224 = vrot.slane %v1260, 2
    %v3225 = vrot.slane %v1261, 2
    %v3226 = vrot.slane %v1262, 2
    %v3227 = vrot.slane %v1646, 3
    %v3228 = vrot.slane %v1647, 3
    %v3229 = vrot.slane %v1648, 3
    %v3230 = vrot.slane %v1649, 3
    %v3231 = vrot.slane %v1650, 3
    %v3232 = vrot.slane %v1651, 3
    %v3233 = vrot.slane %v1652, 3
    %v3234 = vrot.slane %v2036, 4
    %v3235 = vrot.slane %v2037, 4
    %v3236 = vrot.slane %v2038, 4
    %v3237 = vrot.slane %v2039, 4
    %v3238 = vrot.slane %v2040, 4
    %v3239 = vrot.slane %v2041, 4
    %v3240 = vrot.slane %v2042, 4
    %v3241 = vrot.slane %v2426, 5
    %v3242 = vrot.slane %v2427, 5
    %v3243 = vrot.slane %v2428, 5
    %v3244 = vrot.slane %v2429, 5
    %v3245 = vrot.slane %v2430, 5
    %v3246 = vrot.slane %v2431, 5
    %v3247 = vrot.slane %v2432, 5
    %v3248 = vrot.slane %v2816, 6
    %v3249 = vrot.slane %v2817, 6
    %v3250 = vrot.slane %v2818, 6
    %v3251 = vrot.slane %v2819, 6
    %v3252 = vrot.slane %v2820, 6
    %v3253 = vrot.slane %v2821, 6
    %v3254 = vrot.slane %v2822, 6
    %v3263 = vrot.slane %v3205, 7
    %v3264 = vrot.slane %v3206, 7
    %v3265 = vrot.slane %v3207, 7
    %v3266 = vrot.slane %v3208, 7
    %v3267 = vrot.slane %v3209, 7
    %v3268 = vrot.slane %v3210, 7
    %v3269 = vrot.slane %v3211, 7
    %v3270 = vrot.slane %v3212, 7
    %v3271 = vld [vmem:[%s4] sm:$0xff]
    %v3272 = vld [vmem:[%s4 + $0x8] sm:$0xff]
    %v3273 = vld [vmem:[%s4 + $0x10] sm:$0xff]
    %v3274 = vld [vmem:[%s4 + $0x18] sm:$0xff]
    %v3275 = vld [vmem:[%s5] sm:$0xff]
    %v3276 = vld [vmem:[%s5 + $0x8] sm:$0xff]
    %v3277 = vld [vmem:[%s5 + $0x10] sm:$0xff]
    %v3278 = vld [vmem:[%s5 + $0x18] sm:$0xff]
    %v3279 = vld [vmem:[%s6] sm:$0x1]
    %v3281 = vperm.slane %v3279, 0
    %v3283 = vrot.slane %v3213, 7
    %v3284 = vsel %vm485, %v3283, %v881
    %v3285 = vrot.slane %v3214, 6
    %v3286 = vsel %vm488, %v3285, %v3284
    %v3287 = vrot.slane %v3215, 5
    %v3288 = vsel %vm491, %v3287, %v3286
    %v3289 = vrot.slane %v3216, 4
    %v3290 = vsel %vm494, %v3289, %v3288
    %v3291 = vrot.slane %v3217, 3
    %v3292 = vsel %vm497, %v3291, %v3290
    %v3293 = vrot.slane %v3218, 2
    %v3294 = vsel %vm500, %v3293, %v3292
    %v3295 = vrot.slane %v3219, 1
    %v3296 = vsel %vm503, %v3295, %v3294
    %v3297 = vrot.slane %v3220, 7
    %v3298 = vsel %vm485, %v3297, %v1271
    %v3299 = vrot.slane %v3221, 6
    %v3300 = vsel %vm488, %v3299, %v3298
    %v3301 = vrot.slane %v3222, 5
    %v3302 = vsel %vm491, %v3301, %v3300
    %v3303 = vrot.slane %v3223, 4
    %v3304 = vsel %vm494, %v3303, %v3302
    %v3305 = vrot.slane %v3224, 3
    %v3306 = vsel %vm497, %v3305, %v3304
    %v3307 = vrot.slane %v3225, 2
    %v3308 = vsel %vm500, %v3307, %v3306
    %v3309 = vrot.slane %v3226, 1
    %v3310 = vsel %vm503, %v3309, %v3308
    %v3311 = vrot.slane %v3227, 7
    %v3312 = vsel %vm485, %v3311, %v1661
    %v3313 = vrot.slane %v3228, 6
    %v3314 = vsel %vm488, %v3313, %v3312
    %v3315 = vrot.slane %v3229, 5
    %v3316 = vsel %vm491, %v3315, %v3314
    %v3317 = vrot.slane %v3230, 4
    %v3318 = vsel %vm494, %v3317, %v3316
    %v3319 = vrot.slane %v3231, 3
    %v3320 = vsel %vm497, %v3319, %v3318
    %v3321 = vrot.slane %v3232, 2
    %v3322 = vsel %vm500, %v3321, %v3320
    %v3323 = vrot.slane %v3233, 1
    %v3324 = vsel %vm503, %v3323, %v3322
    %v3325 = vrot.slane %v3234, 7
    %v3326 = vsel %vm485, %v3325, %v2051
    %v3327 = vrot.slane %v3235, 6
    %v3328 = vsel %vm488, %v3327, %v3326
    %v3329 = vrot.slane %v3236, 5
    %v3330 = vsel %vm491, %v3329, %v3328
    %v3331 = vrot.slane %v3237, 4
    %v3332 = vsel %vm494, %v3331, %v3330
    %v3333 = vrot.slane %v3238, 3
    %v3334 = vsel %vm497, %v3333, %v3332
    %v3335 = vrot.slane %v3239, 2
    %v3336 = vsel %vm500, %v3335, %v3334
    %v3337 = vrot.slane %v3240, 1
    %v3338 = vsel %vm503, %v3337, %v3336
    %v3339 = vrot.slane %v3241, 7
    %v3340 = vsel %vm485, %v3339, %v2441
    %v3341 = vrot.slane %v3242, 6
    %v3342 = vsel %vm488, %v3341, %v3340
    %v3343 = vrot.slane %v3243, 5
    %v3344 = vsel %vm491, %v3343, %v3342
    %v3345 = vrot.slane %v3244, 4
    %v3346 = vsel %vm494, %v3345, %v3344
    %v3347 = vrot.slane %v3245, 3
    %v3348 = vsel %vm497, %v3347, %v3346
    %v3349 = vrot.slane %v3246, 2
    %v3350 = vsel %vm500, %v3349, %v3348
    %v3351 = vrot.slane %v3247, 1
    %v3352 = vsel %vm503, %v3351, %v3350
    %v3353 = vrot.slane %v3248, 7
    %v3354 = vsel %vm485, %v3353, %v2831
    %v3355 = vrot.slane %v3249, 6
    %v3356 = vsel %vm488, %v3355, %v3354
    %v3357 = vrot.slane %v3250, 5
    %v3358 = vsel %vm491, %v3357, %v3356
    %v3359 = vrot.slane %v3251, 4
    %v3360 = vsel %vm494, %v3359, %v3358
    %v3361 = vrot.slane %v3252, 3
    %v3362 = vsel %vm497, %v3361, %v3360
    %v3363 = vrot.slane %v3253, 2
    %v3364 = vsel %vm500, %v3363, %v3362
    %v3365 = vrot.slane %v3254, 1
    %v3366 = vsel %vm503, %v3365, %v3364
    %v3367 = vrot.slane %v3264, 7
    %v3368 = vsel %vm485, %v3367, %v3263
    %v3369 = vrot.slane %v3265, 6
    %v3370 = vsel %vm488, %v3369, %v3368
    %v3371 = vrot.slane %v3266, 5
    %v3372 = vsel %vm491, %v3371, %v3370
    %v3373 = vrot.slane %v3267, 4
    %v3374 = vsel %vm494, %v3373, %v3372
    %v3375 = vrot.slane %v3268, 3
    %v3376 = vsel %vm497, %v3375, %v3374
    %v3377 = vrot.slane %v3269, 2
    %v3378 = vsel %vm500, %v3377, %v3376
    %v3379 = vrot.slane %v3270, 1
    %v3380 = vsel %vm503, %v3379, %v3378
    %3381 = vrot.lane.b32.xlu0 %v3296, 32
    %v3382 = vpop.permute.xlu0 %3381
    %3383 = vrot.lane.b32.xlu0 %v3310, 32
    %v3384 = vpop.permute.xlu0 %3383
    %3385 = vrot.lane.b32.xlu0 %v3324, 32
    %v3386 = vpop.permute.xlu0 %3385
    %3387 = vrot.lane.b32.xlu0 %v3338, 32
    %v3388 = vpop.permute.xlu0 %3387
    %3389 = vrot.lane.b32.xlu0 %v3352, 32
    %v3390 = vpop.permute.xlu0 %3389
    %3391 = vrot.lane.b32.xlu0 %v3366, 32
    %v3392 = vpop.permute.xlu0 %3391
    %3393 = vrot.lane.b32.xlu0 %v3380, 32
    %v3394 = vpop.permute.xlu0 %3393
    %v3395 = vsel %vm132, %v3382, 0
    %v3397 = vsel %vm132, %v3384, 0
    %v3399 = vsel %vm132, %v3386, 0
    %v3401 = vsel %vm132, %v3388, 0
    %v3403 = vsel %vm132, %v3390, 0
    %v3405 = vsel %vm132, %v3392, 0
    %v3407 = vsel %vm132, %v3394, 0
    %3409 = vmatpush.msra.mxu0 0.0
    %3410 = vmatpush.msra.mxu0 0.0
    %3411 = vmatpush.msra.mxu0 0.0
    %3412 = vmatpush.msra.mxu0 0.0
    %3413 = vmatpush.msra.mxu0 0.0
    %3414 = vmatpush.msra.mxu0 0.0
    %3415 = vmatpush.msra.mxu0 0.0
    %3416 = vmatpush.msra.mxu0 0.0
    %3417 = vmatpush.msra.mxu0 0.0
    %3418 = vmatpush.msra.mxu0 0.0
    %3419 = vmatpush.msra.mxu0 0.0
    %3420 = vmatpush.msra.mxu0 0.0
    %3421 = vmatpush.msra.mxu0 %v3274
    %3422 = vmatpush.msra.mxu0 %v3273
    %3423 = vmatpush.msra.mxu0 %v3272
    %3424 = vmatpush.msra.mxu0 %v3271
    %3425 = vmatmul.f32.gmra.mxu0 %v507
    %v3426 = vpop.f32.mrf.mxu0
    %v3427 = vadd.f32 %v3281, %v3426
    %3428 = vmatmul.f32.gmra.mxu0 %v3395
    %v3429 = vpop.f32.mrf.mxu0
    %v3430 = vadd.f32 %v3281, %v3429
    %3431 = vmatmul.f32.gmra.mxu0 %v3397
    %v3432 = vpop.f32.mrf.mxu0
    %v3433 = vadd.f32 %v3281, %v3432
    %3434 = vmatmul.f32.gmra.mxu0 %v3399
    %v3435 = vpop.f32.mrf.mxu0
    %v3436 = vadd.f32 %v3281, %v3435
    %3437 = vmatmul.f32.gmra.mxu0 %v3401
    %v3438 = vpop.f32.mrf.mxu0
    %v3439 = vadd.f32 %v3281, %v3438
    %3440 = vmatmul.f32.gmra.mxu0 %v3403
    %v3441 = vpop.f32.mrf.mxu0
    %v3442 = vadd.f32 %v3281, %v3441
    %3443 = vmatmul.f32.gmra.mxu0 %v3405
    %v3444 = vpop.f32.mrf.mxu0
    %v3445 = vadd.f32 %v3281, %v3444
    %3446 = vmatmul.f32.gmra.mxu0 %v3407
    %v3447 = vpop.f32.mrf.mxu0
    %v3448 = vadd.f32 %v3281, %v3447
    %3449 = vdwg.mxu0
    %3450 = vmatpush.msra.mxu0 0.0
    %3451 = vmatpush.msra.mxu0 0.0
    %3452 = vmatpush.msra.mxu0 0.0
    %3453 = vmatpush.msra.mxu0 0.0
    %3454 = vmatpush.msra.mxu0 0.0
    %3455 = vmatpush.msra.mxu0 0.0
    %3456 = vmatpush.msra.mxu0 0.0
    %3457 = vmatpush.msra.mxu0 0.0
    %3458 = vmatpush.msra.mxu0 0.0
    %3459 = vmatpush.msra.mxu0 0.0
    %3460 = vmatpush.msra.mxu0 0.0
    %3461 = vmatpush.msra.mxu0 0.0
    %3462 = vmatpush.msra.mxu0 %v3278
    %3463 = vmatpush.msra.mxu0 %v3277
    %3464 = vmatpush.msra.mxu0 %v3276
    %3465 = vmatpush.msra.mxu0 %v3275
    %3466 = vmatmul.f32.gmra.mxu0 %v134
    %v3467 = vpop.f32.mrf.mxu0
    %v3468 = vadd.f32 0.0, %v3467
    %3469 = vdwg.mxu0
    %v3470 = vadd.f32 %v3427, %v3468
    %v3471 = vxor.u32 %v3470, 2147483648
    %v3472 = vmul.f32 %v3471, 1.442695
    %v3473 = vpow.pop %v3472
    %v3474 = vadd.f32 %v3473, 1.0
    %v3475 = vrcp.pop %v3474
    %v3476 = vmul.f32 %v3474, %v3475
    %v3477 = vsub.f32 1.0, %v3476
    %v3478 = vmul.f32 %v3475, %v3477
    %v3479 = vadd.f32 %v3475, %v3478
    %vm3480 = vweird.f32 %v3474
    %vm3481 = vweird.f32 %v3475
    %vm3482 = vmor %vm3480, %vm3481
    %v3483 = vsel %vm3482, %v3475, %v3479
    %v3484 = vand.u32 2147483647, %v3474
    %vm3485 = vcmp.eq.f32.partialorder %v3484, 8.507059e+37
    %v3486 = vand.u32 %v3474, 2147483648
    %v3487 = vor.u32 1.1754944e-38, %v3486
    %v3488 = vsel %vm3485, %v3487, %v3483
    %v3489 = vmul.f32 1.0, %v3488
    %v3490 = vtanh.pop %v3470
    %v3491 = vmul.f32 %v3489, 0.0
    %3493 = vrot.lane.b32.xlu0 %v3490, 64
    %v3494 = vpop.permute.xlu0 %3493
    %v3496 = vmul.f32 %v3489, %v3494
    %3498 = vrot.lane.b32.xlu0 %v3496, 32
    %v3499 = vpop.permute.xlu0 %3498
    %v3501 = vadd.f32 %v3491, %v3499
    %v3502 = vtanh.pop %v3501
    %3504 = vrot.lane.b32.xlu0 %v3502, 64
    %v3505 = vpop.permute.xlu0 %3504
    %v3507 = vmul.f32 %v3489, %v3505
    %3509 = vrot.lane.b32.xlu0 %v3507, 32
    %v3510 = vpop.permute.xlu0 %3509
    %v3511 = vsel %vm132, %v3510, 0
    %3513 = vmatpush.msra.mxu0 0.0
    %3514 = vmatpush.msra.mxu0 0.0
    %3515 = vmatpush.msra.mxu0 0.0
    %3516 = vmatpush.msra.mxu0 0.0
    %3517 = vmatpush.msra.mxu0 0.0
    %3518 = vmatpush.msra.mxu0 0.0
    %3519 = vmatpush.msra.mxu0 0.0
    %3520 = vmatpush.msra.mxu0 0.0
    %3521 = vmatpush.msra.mxu0 0.0
    %3522 = vmatpush.msra.mxu0 0.0
    %3523 = vmatpush.msra.mxu0 0.0
    %3524 = vmatpush.msra.mxu0 0.0
    %3525 = vmatpush.msra.mxu0 %v3278
    %3526 = vmatpush.msra.mxu0 %v3277
    %3527 = vmatpush.msra.mxu0 %v3276
    %3528 = vmatpush.msra.mxu0 %v3275
    %3529 = vmatmul.f32.gmra.mxu0 %v3511
    %v3530 = vpop.f32.mrf.mxu0
    %v3531 = vadd.f32 0.0, %v3530
    %3532 = vdwg.mxu0
    %v3533 = vadd.f32 %v3430, %v3531
    %v3534 = vxor.u32 %v3533, 2147483648
    %v3535 = vmul.f32 %v3534, 1.442695
    %v3536 = vpow.pop %v3535
    %v3537 = vadd.f32 %v3536, 1.0
    %v3538 = vrcp.pop %v3537
    %v3539 = vmul.f32 %v3537, %v3538
    %v3540 = vsub.f32 1.0, %v3539
    %v3541 = vmul.f32 %v3538, %v3540
    %v3542 = vadd.f32 %v3538, %v3541
    %vm3543 = vweird.f32 %v3537
    %vm3544 = vweird.f32 %v3538
    %vm3545 = vmor %vm3543, %vm3544
    %v3546 = vsel %vm3545, %v3538, %v3542
    %v3547 = vand.u32 2147483647, %v3537
    %vm3548 = vcmp.eq.f32.partialorder %v3547, 8.507059e+37
    %v3549 = vand.u32 %v3537, 2147483648
    %v3550 = vor.u32 1.1754944e-38, %v3549
    %v3551 = vsel %vm3548, %v3550, %v3546
    %v3552 = vmul.f32 1.0, %v3551
    %v3553 = vtanh.pop %v3533
    %v3554 = vmul.f32 %v3552, %v3501
    %3556 = vrot.lane.b32.xlu0 %v3553, 64
    %v3557 = vpop.permute.xlu0 %3556
    %v3559 = vmul.f32 %v3552, %v3557
    %3561 = vrot.lane.b32.xlu0 %v3559, 32
    %v3562 = vpop.permute.xlu0 %3561
    %v3564 = vadd.f32 %v3554, %v3562
    %v3565 = vtanh.pop %v3564
    %3567 = vrot.lane.b32.xlu0 %v3565, 64
    %v3568 = vpop.permute.xlu0 %3567
    %v3570 = vmul.f32 %v3552, %v3568
    %3572 = vrot.lane.b32.xlu0 %v3570, 32
    %v3573 = vpop.permute.xlu0 %3572
    %v3574 = vsel %vm132, %v3573, 0
    %3576 = vmatpush.msra.mxu0 0.0
    %3577 = vmatpush.msra.mxu0 0.0
    %3578 = vmatpush.msra.mxu0 0.0
    %3579 = vmatpush.msra.mxu0 0.0
    %3580 = vmatpush.msra.mxu0 0.0
    %3581 = vmatpush.msra.mxu0 0.0
    %3582 = vmatpush.msra.mxu0 0.0
    %3583 = vmatpush.msra.mxu0 0.0
    %3584 = vmatpush.msra.mxu0 0.0
    %3585 = vmatpush.msra.mxu0 0.0
    %3586 = vmatpush.msra.mxu0 0.0
    %3587 = vmatpush.msra.mxu0 0.0
    %3588 = vmatpush.msra.mxu0 %v3278
    %3589 = vmatpush.msra.mxu0 %v3277
    %3590 = vmatpush.msra.mxu0 %v3276
    %3591 = vmatpush.msra.mxu0 %v3275
    %3592 = vmatmul.f32.gmra.mxu0 %v3574
    %v3593 = vpop.f32.mrf.mxu0
    %v3594 = vadd.f32 0.0, %v3593
    %3595 = vdwg.mxu0
    %v3596 = vadd.f32 %v3433, %v3594
    %v3597 = vxor.u32 %v3596, 2147483648
    %v3598 = vmul.f32 %v3597, 1.442695
    %v3599 = vpow.pop %v3598
    %v3600 = vadd.f32 %v3599, 1.0
    %v3601 = vrcp.pop %v3600
    %v3602 = vmul.f32 %v3600, %v3601
    %v3603 = vsub.f32 1.0, %v3602
    %v3604 = vmul.f32 %v3601, %v3603
    %v3605 = vadd.f32 %v3601, %v3604
    %vm3606 = vweird.f32 %v3600
    %vm3607 = vweird.f32 %v3601
    %vm3608 = vmor %vm3606, %vm3607
    %v3609 = vsel %vm3608, %v3601, %v3605
    %v3610 = vand.u32 2147483647, %v3600
    %vm3611 = vcmp.eq.f32.partialorder %v3610, 8.507059e+37
    %v3612 = vand.u32 %v3600, 2147483648
    %v3613 = vor.u32 1.1754944e-38, %v3612
    %v3614 = vsel %vm3611, %v3613, %v3609
    %v3615 = vmul.f32 1.0, %v3614
    %v3616 = vtanh.pop %v3596
    %v3617 = vmul.f32 %v3615, %v3564
    %3619 = vrot.lane.b32.xlu0 %v3616, 64
    %v3620 = vpop.permute.xlu0 %3619
    %v3622 = vmul.f32 %v3615, %v3620
    %3624 = vrot.lane.b32.xlu0 %v3622, 32
    %v3625 = vpop.permute.xlu0 %3624
    %v3627 = vadd.f32 %v3617, %v3625
    %v3628 = vtanh.pop %v3627
    %3630 = vrot.lane.b32.xlu0 %v3628, 64
    %v3631 = vpop.permute.xlu0 %3630
    %v3633 = vmul.f32 %v3615, %v3631
    %3635 = vrot.lane.b32.xlu0 %v3633, 32
    %v3636 = vpop.permute.xlu0 %3635
    %v3637 = vsel %vm132, %v3636, 0
    %3639 = vmatpush.msra.mxu0 0.0
    %3640 = vmatpush.msra.mxu0 0.0
    %3641 = vmatpush.msra.mxu0 0.0
    %3642 = vmatpush.msra.mxu0 0.0
    %3643 = vmatpush.msra.mxu0 0.0
    %3644 = vmatpush.msra.mxu0 0.0
    %3645 = vmatpush.msra.mxu0 0.0
    %3646 = vmatpush.msra.mxu0 0.0
    %3647 = vmatpush.msra.mxu0 0.0
    %3648 = vmatpush.msra.mxu0 0.0
    %3649 = vmatpush.msra.mxu0 0.0
    %3650 = vmatpush.msra.mxu0 0.0
    %3651 = vmatpush.msra.mxu0 %v3278
    %3652 = vmatpush.msra.mxu0 %v3277
    %3653 = vmatpush.msra.mxu0 %v3276
    %3654 = vmatpush.msra.mxu0 %v3275
    %3655 = vmatmul.f32.gmra.mxu0 %v3637
    %v3656 = vpop.f32.mrf.mxu0
    %v3657 = vadd.f32 0.0, %v3656
    %3658 = vdwg.mxu0
    %v3659 = vadd.f32 %v3436, %v3657
    %v3660 = vxor.u32 %v3659, 2147483648
    %v3661 = vmul.f32 %v3660, 1.442695
    %v3662 = vpow.pop %v3661
    %v3663 = vadd.f32 %v3662, 1.0
    %v3664 = vrcp.pop %v3663
    %v3665 = vmul.f32 %v3663, %v3664
    %v3666 = vsub.f32 1.0, %v3665
    %v3667 = vmul.f32 %v3664, %v3666
    %v3668 = vadd.f32 %v3664, %v3667
    %vm3669 = vweird.f32 %v3663
    %vm3670 = vweird.f32 %v3664
    %vm3671 = vmor %vm3669, %vm3670
    %v3672 = vsel %vm3671, %v3664, %v3668
    %v3673 = vand.u32 2147483647, %v3663
    %vm3674 = vcmp.eq.f32.partialorder %v3673, 8.507059e+37
    %v3675 = vand.u32 %v3663, 2147483648
    %v3676 = vor.u32 1.1754944e-38, %v3675
    %v3677 = vsel %vm3674, %v3676, %v3672
    %v3678 = vmul.f32 1.0, %v3677
    %v3679 = vtanh.pop %v3659
    %v3680 = vmul.f32 %v3678, %v3627
    %3682 = vrot.lane.b32.xlu0 %v3679, 64
    %v3683 = vpop.permute.xlu0 %3682
    %v3685 = vmul.f32 %v3678, %v3683
    %3687 = vrot.lane.b32.xlu0 %v3685, 32
    %v3688 = vpop.permute.xlu0 %3687
    %v3690 = vadd.f32 %v3680, %v3688
    %v3691 = vtanh.pop %v3690
    %3693 = vrot.lane.b32.xlu0 %v3691, 64
    %v3694 = vpop.permute.xlu0 %3693
    %v3696 = vmul.f32 %v3678, %v3694
    %3698 = vrot.lane.b32.xlu0 %v3696, 32
    %v3699 = vpop.permute.xlu0 %3698
    %v3700 = vsel %vm132, %v3699, 0
    %3702 = vmatpush.msra.mxu0 0.0
    %3703 = vmatpush.msra.mxu0 0.0
    %3704 = vmatpush.msra.mxu0 0.0
    %3705 = vmatpush.msra.mxu0 0.0
    %3706 = vmatpush.msra.mxu0 0.0
    %3707 = vmatpush.msra.mxu0 0.0
    %3708 = vmatpush.msra.mxu0 0.0
    %3709 = vmatpush.msra.mxu0 0.0
    %3710 = vmatpush.msra.mxu0 0.0
    %3711 = vmatpush.msra.mxu0 0.0
    %3712 = vmatpush.msra.mxu0 0.0
    %3713 = vmatpush.msra.mxu0 0.0
    %3714 = vmatpush.msra.mxu0 %v3278
    %3715 = vmatpush.msra.mxu0 %v3277
    %3716 = vmatpush.msra.mxu0 %v3276
    %3717 = vmatpush.msra.mxu0 %v3275
    %3718 = vmatmul.f32.gmra.mxu0 %v3700
    %v3719 = vpop.f32.mrf.mxu0
    %v3720 = vadd.f32 0.0, %v3719
    %3721 = vdwg.mxu0
    %v3722 = vadd.f32 %v3439, %v3720
    %v3723 = vxor.u32 %v3722, 2147483648
    %v3724 = vmul.f32 %v3723, 1.442695
    %v3725 = vpow.pop %v3724
    %v3726 = vadd.f32 %v3725, 1.0
    %v3727 = vrcp.pop %v3726
    %v3728 = vmul.f32 %v3726, %v3727
    %v3729 = vsub.f32 1.0, %v3728
    %v3730 = vmul.f32 %v3727, %v3729
    %v3731 = vadd.f32 %v3727, %v3730
    %vm3732 = vweird.f32 %v3726
    %vm3733 = vweird.f32 %v3727
    %vm3734 = vmor %vm3732, %vm3733
    %v3735 = vsel %vm3734, %v3727, %v3731
    %v3736 = vand.u32 2147483647, %v3726
    %vm3737 = vcmp.eq.f32.partialorder %v3736, 8.507059e+37
    %v3738 = vand.u32 %v3726, 2147483648
    %v3739 = vor.u32 1.1754944e-38, %v3738
    %v3740 = vsel %vm3737, %v3739, %v3735
    %v3741 = vmul.f32 1.0, %v3740
    %v3742 = vtanh.pop %v3722
    %v3743 = vmul.f32 %v3741, %v3690
    %3745 = vrot.lane.b32.xlu0 %v3742, 64
    %v3746 = vpop.permute.xlu0 %3745
    %v3748 = vmul.f32 %v3741, %v3746
    %3750 = vrot.lane.b32.xlu0 %v3748, 32
    %v3751 = vpop.permute.xlu0 %3750
    %v3753 = vadd.f32 %v3743, %v3751
    %v3754 = vtanh.pop %v3753
    %3756 = vrot.lane.b32.xlu0 %v3754, 64
    %v3757 = vpop.permute.xlu0 %3756
    %v3759 = vmul.f32 %v3741, %v3757
    %3761 = vrot.lane.b32.xlu0 %v3759, 32
    %v3762 = vpop.permute.xlu0 %3761
    %v3763 = vsel %vm132, %v3762, 0
    %3765 = vmatpush.msra.mxu0 0.0
    %3766 = vmatpush.msra.mxu0 0.0
    %3767 = vmatpush.msra.mxu0 0.0
    %3768 = vmatpush.msra.mxu0 0.0
    %3769 = vmatpush.msra.mxu0 0.0
    %3770 = vmatpush.msra.mxu0 0.0
    %3771 = vmatpush.msra.mxu0 0.0
    %3772 = vmatpush.msra.mxu0 0.0
    %3773 = vmatpush.msra.mxu0 0.0
    %3774 = vmatpush.msra.mxu0 0.0
    %3775 = vmatpush.msra.mxu0 0.0
    %3776 = vmatpush.msra.mxu0 0.0
    %3777 = vmatpush.msra.mxu0 %v3278
    %3778 = vmatpush.msra.mxu0 %v3277
    %3779 = vmatpush.msra.mxu0 %v3276
    %3780 = vmatpush.msra.mxu0 %v3275
    %3781 = vmatmul.f32.gmra.mxu0 %v3763
    %v3782 = vpop.f32.mrf.mxu0
    %v3783 = vadd.f32 0.0, %v3782
    %3784 = vdwg.mxu0
    %v3785 = vadd.f32 %v3442, %v3783
    %v3786 = vxor.u32 %v3785, 2147483648
    %v3787 = vmul.f32 %v3786, 1.442695
    %v3788 = vpow.pop %v3787
    %v3789 = vadd.f32 %v3788, 1.0
    %v3790 = vrcp.pop %v3789
    %v3791 = vmul.f32 %v3789, %v3790
    %v3792 = vsub.f32 1.0, %v3791
    %v3793 = vmul.f32 %v3790, %v3792
    %v3794 = vadd.f32 %v3790, %v3793
    %vm3795 = vweird.f32 %v3789
    %vm3796 = vweird.f32 %v3790
    %vm3797 = vmor %vm3795, %vm3796
    %v3798 = vsel %vm3797, %v3790, %v3794
    %v3799 = vand.u32 2147483647, %v3789
    %vm3800 = vcmp.eq.f32.partialorder %v3799, 8.507059e+37
    %v3801 = vand.u32 %v3789, 2147483648
    %v3802 = vor.u32 1.1754944e-38, %v3801
    %v3803 = vsel %vm3800, %v3802, %v3798
    %v3804 = vmul.f32 1.0, %v3803
    %v3805 = vtanh.pop %v3785
    %v3806 = vmul.f32 %v3804, %v3753
    %3808 = vrot.lane.b32.xlu0 %v3805, 64
    %v3809 = vpop.permute.xlu0 %3808
    %v3811 = vmul.f32 %v3804, %v3809
    %3813 = vrot.lane.b32.xlu0 %v3811, 32
    %v3814 = vpop.permute.xlu0 %3813
    %v3816 = vadd.f32 %v3806, %v3814
    %v3817 = vtanh.pop %v3816
    %3819 = vrot.lane.b32.xlu0 %v3817, 64
    %v3820 = vpop.permute.xlu0 %3819
    %v3822 = vmul.f32 %v3804, %v3820
    %3824 = vrot.lane.b32.xlu0 %v3822, 32
    %v3825 = vpop.permute.xlu0 %3824
    %v3826 = vsel %vm132, %v3825, 0
    %3828 = vmatpush.msra.mxu0 0.0
    %3829 = vmatpush.msra.mxu0 0.0
    %3830 = vmatpush.msra.mxu0 0.0
    %3831 = vmatpush.msra.mxu0 0.0
    %3832 = vmatpush.msra.mxu0 0.0
    %3833 = vmatpush.msra.mxu0 0.0
    %3834 = vmatpush.msra.mxu0 0.0
    %3835 = vmatpush.msra.mxu0 0.0
    %3836 = vmatpush.msra.mxu0 0.0
    %3837 = vmatpush.msra.mxu0 0.0
    %3838 = vmatpush.msra.mxu0 0.0
    %3839 = vmatpush.msra.mxu0 0.0
    %3840 = vmatpush.msra.mxu0 %v3278
    %3841 = vmatpush.msra.mxu0 %v3277
    %3842 = vmatpush.msra.mxu0 %v3276
    %3843 = vmatpush.msra.mxu0 %v3275
    %3844 = vmatmul.f32.gmra.mxu0 %v3826
    %v3845 = vpop.f32.mrf.mxu0
    %v3846 = vadd.f32 0.0, %v3845
    %3847 = vdwg.mxu0
    %v3848 = vadd.f32 %v3445, %v3846
    %v3849 = vxor.u32 %v3848, 2147483648
    %v3850 = vmul.f32 %v3849, 1.442695
    %v3851 = vpow.pop %v3850
    %v3852 = vadd.f32 %v3851, 1.0
    %v3853 = vrcp.pop %v3852
    %v3854 = vmul.f32 %v3852, %v3853
    %v3855 = vsub.f32 1.0, %v3854
    %v3856 = vmul.f32 %v3853, %v3855
    %v3857 = vadd.f32 %v3853, %v3856
    %vm3858 = vweird.f32 %v3852
    %vm3859 = vweird.f32 %v3853
    %vm3860 = vmor %vm3858, %vm3859
    %v3861 = vsel %vm3860, %v3853, %v3857
    %v3862 = vand.u32 2147483647, %v3852
    %vm3863 = vcmp.eq.f32.partialorder %v3862, 8.507059e+37
    %v3864 = vand.u32 %v3852, 2147483648
    %v3865 = vor.u32 1.1754944e-38, %v3864
    %v3866 = vsel %vm3863, %v3865, %v3861
    %v3867 = vmul.f32 1.0, %v3866
    %v3868 = vtanh.pop %v3848
    %v3869 = vmul.f32 %v3867, %v3816
    %3871 = vrot.lane.b32.xlu0 %v3868, 64
    %v3872 = vpop.permute.xlu0 %3871
    %v3874 = vmul.f32 %v3867, %v3872
    %3876 = vrot.lane.b32.xlu0 %v3874, 32
    %v3877 = vpop.permute.xlu0 %3876
    %v3879 = vadd.f32 %v3869, %v3877
    %v3880 = vtanh.pop %v3879
    %3882 = vrot.lane.b32.xlu0 %v3880, 64
    %v3883 = vpop.permute.xlu0 %3882
    %v3885 = vmul.f32 %v3867, %v3883
    %3887 = vrot.lane.b32.xlu0 %v3885, 32
    %v3888 = vpop.permute.xlu0 %3887
    %v3889 = vsel %vm132, %v3888, 0
    %3891 = vmatpush.msra.mxu0 0.0
    %3892 = vmatpush.msra.mxu0 0.0
    %3893 = vmatpush.msra.mxu0 0.0
    %3894 = vmatpush.msra.mxu0 0.0
    %3895 = vmatpush.msra.mxu0 0.0
    %3896 = vmatpush.msra.mxu0 0.0
    %3897 = vmatpush.msra.mxu0 0.0
    %3898 = vmatpush.msra.mxu0 0.0
    %3899 = vmatpush.msra.mxu0 0.0
    %3900 = vmatpush.msra.mxu0 0.0
    %3901 = vmatpush.msra.mxu0 0.0
    %3902 = vmatpush.msra.mxu0 0.0
    %3903 = vmatpush.msra.mxu0 %v3278
    %3904 = vmatpush.msra.mxu0 %v3277
    %3905 = vmatpush.msra.mxu0 %v3276
    %3906 = vmatpush.msra.mxu0 %v3275
    %3907 = vmatmul.f32.gmra.mxu0 %v3889
    %v3908 = vpop.f32.mrf.mxu0
    %v3909 = vadd.f32 0.0, %v3908
    %3910 = vdwg.mxu0
    %v3911 = vadd.f32 %v3448, %v3909
    %v3912 = vxor.u32 %v3911, 2147483648
    %v3913 = vmul.f32 %v3912, 1.442695
    %v3914 = vpow.pop %v3913
    %v3915 = vadd.f32 %v3914, 1.0
    %v3916 = vrcp.pop %v3915
    %v3917 = vmul.f32 %v3915, %v3916
    %v3918 = vsub.f32 1.0, %v3917
    %v3919 = vmul.f32 %v3916, %v3918
    %v3920 = vadd.f32 %v3916, %v3919
    %vm3921 = vweird.f32 %v3915
    %vm3922 = vweird.f32 %v3916
    %vm3923 = vmor %vm3921, %vm3922
    %v3924 = vsel %vm3923, %v3916, %v3920
    %v3925 = vand.u32 2147483647, %v3915
    %vm3926 = vcmp.eq.f32.partialorder %v3925, 8.507059e+37
    %v3927 = vand.u32 %v3915, 2147483648
    %v3928 = vor.u32 1.1754944e-38, %v3927
    %v3929 = vsel %vm3926, %v3928, %v3924
    %v3930 = vmul.f32 1.0, %v3929
    %v3931 = vtanh.pop %v3911
    %v3932 = vmul.f32 %v3930, %v3879
    %3934 = vrot.lane.b32.xlu0 %v3931, 64
    %v3935 = vpop.permute.xlu0 %3934
    %v3937 = vmul.f32 %v3930, %v3935
    %3939 = vrot.lane.b32.xlu0 %v3937, 32
    %v3940 = vpop.permute.xlu0 %3939
    %v3942 = vadd.f32 %v3932, %v3940
    %v3943 = vtanh.pop %v3942
    %3945 = vrot.lane.b32.xlu0 %v3943, 64
    %v3946 = vpop.permute.xlu0 %3945
    %v3948 = vmul.f32 %v3930, %v3946
    %v3949 = vmax.f32 %v3507, 0.0
    %v3950 = vmax.f32 %v3570, 0.0
    %v3951 = vmax.f32 %v3633, 0.0
    %v3952 = vmax.f32 %v3696, 0.0
    %v3953 = vmax.f32 %v3759, 0.0
    %v3954 = vmax.f32 %v3822, 0.0
    %v3955 = vmax.f32 %v3885, 0.0
    %v3956 = vmax.f32 %v3948, 0.0
    %v3957 = vld [vmem:[%s7] sm:$0xff]
    %v3958 = vld [vmem:[%s7 + $0x8] sm:$0xff]
    %v3959 = vld [vmem:[%s7 + $0x10] sm:$0xff]
    %v3960 = vld [vmem:[%s7 + $0x18] sm:$0xff]
    %v3961 = vld [vmem:[%s8] sm:$0x1]
    %v3963 = vperm.slane %v3961, 0
    %3973 = vrot.lane.b32.xlu0 %v3949, 32
    %v3974 = vpop.permute.xlu0 %3973
    %3975 = vrot.lane.b32.xlu0 %v3950, 32
    %v3976 = vpop.permute.xlu0 %3975
    %3977 = vrot.lane.b32.xlu0 %v3951, 32
    %v3978 = vpop.permute.xlu0 %3977
    %3979 = vrot.lane.b32.xlu0 %v3952, 32
    %v3980 = vpop.permute.xlu0 %3979
    %3981 = vrot.lane.b32.xlu0 %v3953, 32
    %v3982 = vpop.permute.xlu0 %3981
    %3983 = vrot.lane.b32.xlu0 %v3954, 32
    %v3984 = vpop.permute.xlu0 %3983
    %3985 = vrot.lane.b32.xlu0 %v3955, 32
    %v3986 = vpop.permute.xlu0 %3985
    %3987 = vrot.lane.b32.xlu0 %v3956, 32
    %v3988 = vpop.permute.xlu0 %3987
    %v3989 = vsel %vm132, %v3974, 0
    %v3991 = vsel %vm132, %v3976, 0
    %v3993 = vsel %vm132, %v3978, 0
    %v3995 = vsel %vm132, %v3980, 0
    %v3997 = vsel %vm132, %v3982, 0
    %v3999 = vsel %vm132, %v3984, 0
    %v4001 = vsel %vm132, %v3986, 0
    %v4003 = vsel %vm132, %v3988, 0
    %4005 = vmatpush.msra.mxu0 0.0
    %4006 = vmatpush.msra.mxu0 0.0
    %4007 = vmatpush.msra.mxu0 0.0
    %4008 = vmatpush.msra.mxu0 0.0
    %4009 = vmatpush.msra.mxu0 0.0
    %4010 = vmatpush.msra.mxu0 0.0
    %4011 = vmatpush.msra.mxu0 0.0
    %4012 = vmatpush.msra.mxu0 0.0
    %4013 = vmatpush.msra.mxu0 0.0
    %4014 = vmatpush.msra.mxu0 0.0
    %4015 = vmatpush.msra.mxu0 0.0
    %4016 = vmatpush.msra.mxu0 0.0
    %4017 = vmatpush.msra.mxu0 %v3960
    %4018 = vmatpush.msra.mxu0 %v3959
    %4019 = vmatpush.msra.mxu0 %v3958
    %4020 = vmatpush.msra.mxu0 %v3957
    %4021 = vmatmul.f32.gmra.mxu0 %v3989
    %v4022 = vpop.f32.mrf.mxu0
    %v4023 = vadd.f32 %v3963, %v4022
    %4024 = vmatmul.f32.gmra.mxu0 %v3991
    %v4025 = vpop.f32.mrf.mxu0
    %v4026 = vadd.f32 %v3963, %v4025
    %4027 = vmatmul.f32.gmra.mxu0 %v3993
    %v4028 = vpop.f32.mrf.mxu0
    %v4029 = vadd.f32 %v3963, %v4028
    %4030 = vmatmul.f32.gmra.mxu0 %v3995
    %v4031 = vpop.f32.mrf.mxu0
    %v4032 = vadd.f32 %v3963, %v4031
    %4033 = vmatmul.f32.gmra.mxu0 %v3997
    %v4034 = vpop.f32.mrf.mxu0
    %v4035 = vadd.f32 %v3963, %v4034
    %4036 = vmatmul.f32.gmra.mxu0 %v3999
    %v4037 = vpop.f32.mrf.mxu0
    %v4038 = vadd.f32 %v3963, %v4037
    %4039 = vmatmul.f32.gmra.mxu0 %v4001
    %v4040 = vpop.f32.mrf.mxu0
    %v4041 = vadd.f32 %v3963, %v4040
    %4042 = vmatmul.f32.gmra.mxu0 %v4003
    %v4043 = vpop.f32.mrf.mxu0
    %v4044 = vadd.f32 %v3963, %v4043
    %4045 = vdwg.mxu0
    %vm4046 = vcmask 64512
    %v4047 = vsel %vm4046, %v4023, -inf
    %v4048 = vsel %vm4046, %v4026, -inf
    %v4049 = vsel %vm4046, %v4029, -inf
    %v4050 = vsel %vm4046, %v4032, -inf
    %v4051 = vsel %vm4046, %v4035, -inf
    %v4052 = vmax.f32 %v4047, %v4051
    %v4053 = vsel %vm4046, %v4038, -inf
    %v4054 = vmax.f32 %v4048, %v4053
    %v4055 = vsel %vm4046, %v4041, -inf
    %v4056 = vmax.f32 %v4049, %v4055
    %v4057 = vsel %vm4046, %v4044, -inf
    %v4058 = vmax.f32 %v4050, %v4057
    %v4059 = vmax.f32 %v4052, %v4054
    %v4060 = vmax.f32 %v4056, %v4058
    %v4061 = vmax.f32 %v4059, %v4060
    %v4062 = vsub.f32 %v4023, %v4061
    %v4063 = vsub.f32 %v4026, %v4061
    %v4064 = vsub.f32 %v4029, %v4061
    %v4065 = vsub.f32 %v4032, %v4061
    %v4066 = vsub.f32 %v4035, %v4061
    %v4067 = vsub.f32 %v4038, %v4061
    %v4068 = vsub.f32 %v4041, %v4061
    %v4069 = vsub.f32 %v4044, %v4061
    %v4070 = vmul.f32 %v4062, 1.442695
    %v4071 = vpow.pop %v4070
    %v4072 = vmul.f32 %v4063, 1.442695
    %v4073 = vpow.pop %v4072
    %v4074 = vmul.f32 %v4064, 1.442695
    %v4075 = vpow.pop %v4074
    %v4076 = vmul.f32 %v4065, 1.442695
    %v4077 = vpow.pop %v4076
    %v4078 = vmul.f32 %v4066, 1.442695
    %v4079 = vpow.pop %v4078
    %v4080 = vmul.f32 %v4067, 1.442695
    %v4081 = vpow.pop %v4080
    %v4082 = vmul.f32 %v4068, 1.442695
    %v4083 = vpow.pop %v4082
    %v4084 = vmul.f32 %v4069, 1.442695
    %v4085 = vpow.pop %v4084
    %v4086 = vsel %vm4046, %v4071, 0.0
    %v4087 = vsel %vm4046, %v4073, 0.0
    %v4088 = vadd.f32 %v4086, %v4087
    %v4089 = vsel %vm4046, %v4075, 0.0
    %v4090 = vadd.f32 %v4088, %v4089
    %v4091 = vsel %vm4046, %v4077, 0.0
    %v4092 = vadd.f32 %v4090, %v4091
    %v4093 = vsel %vm4046, %v4079, 0.0
    %v4094 = vadd.f32 %v4092, %v4093
    %v4095 = vsel %vm4046, %v4081, 0.0
    %v4096 = vadd.f32 %v4094, %v4095
    %v4097 = vsel %vm4046, %v4083, 0.0
    %v4098 = vadd.f32 %v4096, %v4097
    %v4099 = vsel %vm4046, %v4085, 0.0
    %v4100 = vadd.f32 %v4098, %v4099
    %v4101 = vlog2.pop %v4100
    %v4102 = vmul.f32 %v4101, 0.6931472
    %v4103 = vsub.f32 %v4062, %v4102
    %v4104 = vsub.f32 %v4063, %v4102
    %v4105 = vsub.f32 %v4064, %v4102
    %v4106 = vsub.f32 %v4065, %v4102
    %v4107 = vsub.f32 %v4066, %v4102
    %v4108 = vsub.f32 %v4067, %v4102
    %v4109 = vsub.f32 %v4068, %v4102
    %v4110 = vsub.f32 %v4069, %v4102
    %4111 = vst.msk [vmem:[%s9] sm:$0xff] %vm4046, %v4103
    %4112 = vst.msk [vmem:[%s9 + $0x8] sm:$0xff] %vm4046, %v4104
    %4113 = vst.msk [vmem:[%s9 + $0x10] sm:$0xff] %vm4046, %v4105
    %4114 = vst.msk [vmem:[%s9 + $0x18] sm:$0xff] %vm4046, %v4106
    %4115 = vst.msk [vmem:[%s9 + $0x20] sm:$0xff] %vm4046, %v4107
    %4116 = vst.msk [vmem:[%s9 + $0x28] sm:$0xff] %vm4046, %v4108
    %4117 = vst.msk [vmem:[%s9 + $0x30] sm:$0xff] %vm4046, %v4109
    %4118 = vst.msk [vmem:[%s9 + $0x38] sm:$0xff] %vm4046, %v4110
    // Predicated region
    $region42: #{lstm_tagger_forward.1} parent=1 // pred_check
      _
    $region43: #{lstm_tagger_forward.1} parent=1 // pred_check_branch
      %4120 = sbr.rel (0) target = $region45
    $region44: #{lstm_tagger_forward.1} parent=1 // pred_region
      _
    $region45: #{lstm_tagger_forward.1} parent=1 // pred_fallthru
      _
    // Predicated region
    $region46: #{lstm_tagger_forward.1} parent=1 // pred_check
      _
    $region47: #{lstm_tagger_forward.1} parent=1 // pred_check_branch
      %4122 = sbr.rel (0) target = $region49
    $region48: #{lstm_tagger_forward.1} parent=1 // pred_region
      _
    $region49: #{lstm_tagger_forward.1} parent=1 // pred_fallthru
      _
    %4123 = vsyncpa [#allocation3], 1

</llo_original>
